<compile_context>
chip_gen: v7x
topology: tpu7x:2x2x1
jax: 0.10.0
libtpu: 0.0.40
codegen_flags: <defaults>
</compile_context>

<pallas_src>
import jax
import jax.numpy as jnp
from jax import lax
from jax.experimental import pallas as pl
from jax.experimental.pallas import tpu as pltpu

EPS = 1e-5
_TARGET_PATCH_ROWS = 1024  # target M (patch rows) per MXU matmul chunk


def _chunk_schedule(H, W):
    """Row-block schedule: each chunk covers `rows` output rows = rows*W patch
    rows of the im2col matmul."""
    tile_r = max(1, min(H, _TARGET_PATCH_ROWS // max(W, 1)))
    chunks = []
    r0 = 0
    while r0 < H:
        rows = min(tile_r, H - r0)
        chunks.append((r0, rows))
        r0 += rows
    return tile_r, tuple(chunks)


def _vmem_limit_bytes():
    """~100 MiB on v5e/v6e (128 MiB physical VMEM), ~48 MiB on v7x (64 MiB)."""
    cap = None
    try:
        cap = int(pltpu.get_tpu_info().vmem_capacity_bytes)
    except Exception:
        cap = None
    if cap is None:
        try:
            kind = jax.devices()[0].device_kind.lower()
        except Exception:
            kind = ""
        cap = 64 * 1024 * 1024 if "v7" in kind else 128 * 1024 * 1024
    return max(32 * 1024 * 1024,
               min(100 * 1024 * 1024, cap - 16 * 1024 * 1024))


def _make_kernel(H, W, C, chunks, cdt, use_patch_scratch):
    n_px = float(H * W)

    def kernel(x_ref, w1_ref, w2_ref, prm_ref, o_ref, pad_ref, y_ref, *rest):
        # x_ref/o_ref: (H, W, C) (batch dim squeezed by the BlockSpec)
        # w*_ref:      (9*C, C) im2col-ordered weights in the compute dtype
        # prm_ref:     (8, C) f32 rows [gamma1, beta1, gamma2, beta2, 0...]
        # pad_ref:     (H+2, W+2, C) cdt persistent reflect-pad scratch
        # y_ref:       (H*W, C) f32 conv-output scratch
        # rest[0]:     (TILE_M, 9*C) cdt patch scratch (lane-aligned C only)
        patch_ref = rest[0] if rest else None

        def fill_pad_edges():
            # ReflectionPad2d(1): row strips first, then column strips
            # (the column copies fix the corners).
            pad_ref[pl.ds(0, 1), :, :] = pad_ref[pl.ds(2, 1), :, :]
            pad_ref[pl.ds(H + 1, 1), :, :] = pad_ref[pl.ds(H - 1, 1), :, :]
            pad_ref[:, pl.ds(0, 1), :] = pad_ref[:, pl.ds(2, 1), :]
            pad_ref[:, pl.ds(W + 1, 1), :] = pad_ref[:, pl.ds(W - 1, 1), :]

        def patch_tile(r0, rows):
            m = rows * W
            if use_patch_scratch:
                # Slice-store the 9 taps straight into the patch scratch.
                for dh in range(3):
                    for dw in range(3):
                        tap = dh * 3 + dw
                        v = pad_ref[pl.ds(r0 + dh, rows), pl.ds(dw, W), :]
                        patch_ref[pl.ds(0, m), pl.ds(tap * C, C)] = (
                            v.reshape(m, C))
                return patch_ref[pl.ds(0, m), :]
            # Small-C fallback: per-chunk concatenate (chunk-sized, not
            # full-image, so peak VMEM stays small).
            cols = [pad_ref[pl.ds(r0 + dh, rows), pl.ds(dw, W), :].reshape(m, C)
                    for dh in range(3) for dw in range(3)]
            return jnp.concatenate(cols, axis=-1)

        def conv_and_stats(w_ref):
            """Chunked im2col + K=9C MXU matmul into y_ref; IN stats are
            accumulated per chunk (one read of y per chunk)."""
            s = jnp.zeros((1, C), jnp.float32)
            ss = jnp.zeros((1, C), jnp.float32)
            for (r0, rows) in chunks:
                m = rows * W
                pt = patch_tile(r0, rows)
                yc = jnp.dot(pt, w_ref[...],
                             preferred_element_type=jnp.float32)   # (m, C) f32
                y_ref[pl.ds(r0 * W, m), :] = yc
                s = s + jnp.sum(yc, axis=0, keepdims=True)
                ss = ss + jnp.sum(yc * yc, axis=0, keepdims=True)
            return s, ss

        def in_scale_shift(s, ss, gamma, beta):
            # InstanceNorm2d(affine=True, track_running_stats=False) folded
            # into one per-channel scale+shift.  The conv bias is skipped:
            # the mean subtraction cancels it exactly.
            mean = s / n_px
            var = jnp.maximum(ss / n_px - mean * mean, 0.0)
            scale = gamma * lax.rsqrt(var + EPS)
            shift = beta - mean * scale
            return scale, shift

        g1 = prm_ref[pl.ds(0, 1), :]
        be1 = prm_ref[pl.ds(1, 1), :]
        g2 = prm_ref[pl.ds(2, 1), :]
        be2 = prm_ref[pl.ds(3, 1), :]

        # ---- reflect-pad(x) into the persistent scratch ----
        for (r0, rows) in chunks:
            pad_ref[pl.ds(1 + r0, rows), pl.ds(1, W), :] = (
                x_ref[pl.ds(r0, rows), :, :].astype(cdt))
        fill_pad_edges()

        # ---- conv1 (+ fused IN stats accumulation) ----
        s1, ss1 = conv_and_stats(w1_ref)
        scale1, shift1 = in_scale_shift(s1, ss1, g1, be1)

        # ---- IN1 + ReLU folded into the store of conv2's padded input ----
        for (r0, rows) in chunks:
            m = rows * W
            yv = y_ref[pl.ds(r0 * W, m), :]
            hv = jnp.maximum(yv * scale1 + shift1, 0.0).astype(cdt)
            pad_ref[pl.ds(1 + r0, rows), pl.ds(1, W), :] = hv.reshape(rows, W, C)
        fill_pad_edges()

        # ---- conv2 (+ fused IN stats accumulation) ----
        s2, ss2 = conv_and_stats(w2_ref)
        scale2, shift2 = in_scale_shift(s2, ss2, g2, be2)

        # ---- IN2 + residual add, written straight to the output block ----
        for (r0, rows) in chunks:
            m = rows * W
            yv = y_ref[pl.ds(r0 * W, m), :]
            res = (yv * scale2 + shift2).reshape(rows, W, C)
            xr = x_ref[pl.ds(r0, rows), :, :].astype(jnp.float32)
            o_ref[pl.ds(r0, rows), :, :] = (xr + res).astype(o_ref.dtype)

    return kernel


def pack_resnet_block_params(params, compute_dtype=jnp.bfloat16):
    """Pre-pack torch-layout parameters ONCE (hoist out of any per-block loop
    when ResnetBlocks are stacked)."""
    w1, b1, g1, be1, w2, b2, g2, be2 = params
    C = w1.shape[0]
    # torch (Cout, Cin, kh, kw) -> (kh, kw, Cin, Cout) -> (9*Cin, Cout),
    # matching the kernel's im2col column order (dh, dw, cin).
    wmat1 = jnp.transpose(w1, (2, 3, 1, 0)).reshape(9 * C, C).astype(compute_dtype)
    wmat2 = jnp.transpose(w2, (2, 3, 1, 0)).reshape(9 * C, C).astype(compute_dtype)
    # Conv biases b1/b2 intentionally dropped: InstanceNorm's per-(sample,
    # channel) mean subtraction cancels them exactly.
    z = jnp.zeros_like(g1)
    prm = jnp.stack([g1, be1, g2, be2, z, z, z, z], axis=0).astype(jnp.float32)
    return wmat1, wmat2, prm


def resnet_block_pallas_nhwc(x_nhwc, packed_params):
    """NHWC-native entry point.  For stacked blocks, carry bf16 activations
    here (the residual add is done in f32 inside the kernel): it halves the
    HBM<->VMEM traffic and the in/out double-buffer footprint."""
    wmat1, wmat2, prm = packed_params
    N, H, W, C = x_nhwc.shape
    if H < 2 or W < 2:
        raise ValueError("ReflectionPad2d(1) requires H >= 2 and W >= 2")
    cdt = wmat1.dtype
    tile_r, chunks = _chunk_schedule(H, W)
    use_patch_scratch = (C % 128 == 0)

    # Per-grid-step VMEM working-set estimate: double-buffered in/out blocks,
    # double-buffered weights/params, plus persistent scratch.
    esz = jnp.dtype(x_nhwc.dtype).itemsize
    csz = jnp.dtype(cdt).itemsize
    est = (2 * 2 * H * W * C * esz                              # x / out blocks
           + 2 * 2 * 9 * C * C * csz + 2 * 8 * C * 4            # weights, prm
           + (H + 2) * (W + 2) * C * csz                        # pad scratch
           + H * W * C * 4                                      # f32 y scratch
           + (1 if use_patch_scratch else 2) * tile_r * W * 9 * C * csz)
    vmem_limit = _vmem_limit_bytes()
    if est > vmem_limit:
        # TODO(synk): add a spatial (H-tiled) "parallel" grid axis with a
        # 2-row halo and accumulate/finalize InstanceNorm across tiles so the
        # per-step working set fits v7x's 64 MiB VMEM at production
        # resolutions and both v7x TensorCores stay busy when N is small.
        raise ValueError(
            "ResnetBlock working set ~%.1f MiB exceeds the VMEM budget "
            "%.1f MiB; spatial (H) tiling is required for this shape."
            % (est / 2**20, vmem_limit / 2**20))

    scratch = [pltpu.VMEM((H + 2, W + 2, C), cdt),
               pltpu.VMEM((H * W, C), jnp.float32)]
    if use_patch_scratch:
        scratch.append(pltpu.VMEM((tile_r * W, 9 * C), cdt))

    kernel = _make_kernel(H, W, C, chunks, cdt, use_patch_scratch)
    full_w = pl.BlockSpec((9 * C, C), lambda n: (0, 0))
    out = pl.pallas_call(
        kernel,
        out_shape=jax.ShapeDtypeStruct((N, H, W, C), x_nhwc.dtype),
        grid_spec=pltpu.PrefetchScalarGridSpec(
            num_scalar_prefetch=0,
            grid=(N,),
            in_specs=[
                pl.BlockSpec((None, H, W, C), lambda n: (n, 0, 0, 0)),
                full_w,
                full_w,
                pl.BlockSpec((8, C), lambda n: (0, 0)),
            ],
            out_specs=pl.BlockSpec((None, H, W, C), lambda n: (n, 0, 0, 0)),
            scratch_shapes=scratch,
        ),
        compiler_params=pltpu.CompilerParams(
            dimension_semantics=("parallel",),
            vmem_limit_bytes=vmem_limit,
        ),
    )(x_nhwc, wmat1, wmat2, prm)
    return out


def resnet_block_pallas(x_nchw, params, compute_dtype=jnp.bfloat16):
    """x_nchw: (N, C, H, W), PyTorch convention. Returns NCHW (same dtype)."""
    x = jnp.transpose(x_nchw, (0, 2, 3, 1))  # -> NHWC
    packed = pack_resnet_block_params(params, compute_dtype)
    out = resnet_block_pallas_nhwc(x, packed)
    return jnp.transpose(out, (0, 3, 1, 2))  # -> NCHW


def resnet_block_ref(x_nchw, params):
    """Pure-JAX, torch-faithful reference (NCHW, lax.conv, bias included,
    two-pass variance) for validation."""
    w1, b1, g1, be1, w2, b2, g2, be2 = params

    def conv(a, w, b):
        a_p = jnp.pad(a, ((0, 0), (0, 0), (1, 1), (1, 1)), mode="reflect")
        y = lax.conv_general_dilated(
            a_p, w, window_strides=(1, 1), padding="VALID",
            dimension_numbers=("NCHW", "OIHW", "NCHW"))
        return y + b[None, :, None, None]

    def inorm(a, g, be):
        mean = jnp.mean(a, axis=(2, 3), keepdims=True)
        var = jnp.mean((a - mean) ** 2, axis=(2, 3), keepdims=True)
        return ((a - mean) * lax.rsqrt(var + EPS)
                * g[None, :, None, None] + be[None, :, None, None])

    h = jnp.maximum(inorm(conv(x_nchw, w1, b1), g1, be1), 0.0)
    h = inorm(conv(h, w2, b2), g2, be2)
    return x_nchw + h


def _make_case(key, N, C, H, W, default_affine):
    kx, kw1, kb1, kw2, kb2, kg1, kbe1, kg2, kbe2 = jax.random.split(key, 9)
    x = jax.random.normal(kx, (N, C, H, W), jnp.float32)
    w1 = 0.1 * jax.random.normal(kw1, (C, C, 3, 3), jnp.float32)
    b1 = 0.1 * jax.random.normal(kb1, (C,), jnp.float32)
    w2 = 0.1 * jax.random.normal(kw2, (C, C, 3, 3), jnp.float32)
    b2 = 0.1 * jax.random.normal(kb2, (C,), jnp.float32)
    if default_affine:  # PyTorch InstanceNorm2d(affine=True) default init
        g1 = jnp.ones((C,), jnp.float32)
        be1 = jnp.zeros((C,), jnp.float32)
        g2 = jnp.ones((C,), jnp.float32)
        be2 = jnp.zeros((C,), jnp.float32)
    else:
        g1 = 1.0 + 0.1 * jax.random.normal(kg1, (C,), jnp.float32)
        be1 = 0.1 * jax.random.normal(kbe1, (C,), jnp.float32)
        g2 = 1.0 + 0.1 * jax.random.normal(kg2, (C,), jnp.float32)
        be2 = 0.1 * jax.random.normal(kbe2, (C,), jnp.float32)
    return x, (w1, b1, g1, be1, w2, b2, g2, be2)


if __name__ == "__main__":
    key = jax.random.PRNGKey(0)
    k1, k2 = jax.random.split(key)

    # Primary small case (module-consistent shapes: N=2, C=4, H=W=16).
    x, params = _make_case(k1, 2, 4, 16, 16, default_affine=True)
    ref = jax.block_until_ready(resnet_block_ref(x, params))

    # f32 MXU-operand path: tight check against the torch-faithful reference.
    out_f32 = jax.block_until_ready(
        resnet_block_pallas(x, params, compute_dtype=jnp.float32))
    assert out_f32.shape == x.shape
    assert jnp.allclose(out_f32, ref, atol=5e-4, rtol=5e-4), "f32 mismatch"

    # bf16 MXU-operand fast path (default): looser tolerance vs f32 reference.
    out_bf16 = jax.block_until_ready(resnet_block_pallas(x, params))
    assert jnp.allclose(out_bf16, ref, atol=5e-2, rtol=5e-2), "bf16 mismatch"

    # Lane-dense case (C=128, non-trivial affine params): exercises the
    # patch-scratch im2col path and the (8,128)-aligned MXU layout.
    x2, params2 = _make_case(k2, 1, 128, 32, 32, default_affine=False)
    ref2 = jax.block_until_ready(resnet_block_ref(x2, params2))
    out2 = jax.block_until_ready(
        resnet_block_pallas(x2, params2, compute_dtype=jnp.float32))
    assert jnp.allclose(out2, ref2, atol=2e-3, rtol=2e-3), "C=128 f32 mismatch"
    out2_bf16 = jax.block_until_ready(resnet_block_pallas(x2, params2))
    assert jnp.allclose(out2_bf16, ref2, atol=1e-1, rtol=1e-1), "C=128 bf16 mismatch"

    print("KERNEL_OK")
</pallas_src>

<mosaic_0001>
module attributes {stable_mosaic.version = 11 : i64} {
  func.func @kernel(%arg0: i32, %arg1: memref<1x16x16x4xf32, #tpu.memory_space<vmem>>, %arg2: memref<36x4xf32, #tpu.memory_space<vmem>>, %arg3: memref<36x4xf32, #tpu.memory_space<vmem>>, %arg4: memref<8x4xf32, #tpu.memory_space<vmem>>, %arg5: memref<1x16x16x4xf32, #tpu.memory_space<vmem>>, %arg6: memref<18x18x4xf32, #tpu.memory_space<vmem>>, %arg7: memref<256x4xf32, #tpu.memory_space<vmem>>) attributes {dimension_semantics = [#tpu.dimension_semantics<parallel>], iteration_bounds = array<i64: 2>, scalar_prefetch = 0 : i64, scratch_operands = 2 : i64, tpu.core_type = #tpu.core_type<tc>, window_params = [{transform_indices = @transform_0, window_bounds = array<i64: 1, 16, 16, 4>}, {pipeline_mode = #tpu.pipeline_mode<synchronous>, transform_indices = @transform_1, window_bounds = array<i64: 36, 4>}, {pipeline_mode = #tpu.pipeline_mode<synchronous>, transform_indices = @transform_2, window_bounds = array<i64: 36, 4>}, {pipeline_mode = #tpu.pipeline_mode<synchronous>, transform_indices = @transform_3, window_bounds = array<i64: 8, 4>}, {transform_indices = @transform_4, window_bounds = array<i64: 1, 16, 16, 4>}]} {
    %c0 = arith.constant 0 : index
    %c0_0 = arith.constant 0 : index
    %0 = vector.load %arg4[%c0, %c0_0] : memref<8x4xf32, #tpu.memory_space<vmem>>, vector<1x4xf32>
    %c1 = arith.constant 1 : index
    %c0_1 = arith.constant 0 : index
    %1 = vector.load %arg4[%c1, %c0_1] : memref<8x4xf32, #tpu.memory_space<vmem>>, vector<1x4xf32>
    %c2 = arith.constant 2 : index
    %c0_2 = arith.constant 0 : index
    %2 = vector.load %arg4[%c2, %c0_2] : memref<8x4xf32, #tpu.memory_space<vmem>>, vector<1x4xf32>
    %c3 = arith.constant 3 : index
    %c0_3 = arith.constant 0 : index
    %3 = vector.load %arg4[%c3, %c0_3] : memref<8x4xf32, #tpu.memory_space<vmem>>, vector<1x4xf32>
    %c0_4 = arith.constant 0 : index
    %c0_5 = arith.constant 0 : index
    %c0_6 = arith.constant 0 : index
    %c0_7 = arith.constant 0 : index
    %4 = vector.load %arg1[%c0_4, %c0_5, %c0_6, %c0_7] : memref<1x16x16x4xf32, #tpu.memory_space<vmem>>, vector<1x16x16x4xf32>
    %5 = vector.shape_cast %4 : vector<1x16x16x4xf32> to vector<16x16x4xf32>
    %c1_8 = arith.constant 1 : index
    %c1_9 = arith.constant 1 : index
    %c0_10 = arith.constant 0 : index
    %6 = vector.load %arg6[%c1_8, %c1_9, %c0_10] : memref<18x18x4xf32, #tpu.memory_space<vmem>>, vector<16x16x4xf32>
    tpu.vector_store %arg6[%c1_8, %c1_9, %c0_10], %5 {strides = array<i32>} : memref<18x18x4xf32, #tpu.memory_space<vmem>>, vector<16x16x4xf32>,
    %c2_11 = arith.constant 2 : index
    %c0_12 = arith.constant 0 : index
    %c0_13 = arith.constant 0 : index
    %7 = vector.load %arg6[%c2_11, %c0_12, %c0_13] : memref<18x18x4xf32, #tpu.memory_space<vmem>>, vector<1x18x4xf32>
    %c0_14 = arith.constant 0 : index
    %c0_15 = arith.constant 0 : index
    %c0_16 = arith.constant 0 : index
    %8 = vector.load %arg6[%c0_14, %c0_15, %c0_16] : memref<18x18x4xf32, #tpu.memory_space<vmem>>, vector<1x18x4xf32>
    tpu.vector_store %arg6[%c0_14, %c0_15, %c0_16], %7 {strides = array<i32>} : memref<18x18x4xf32, #tpu.memory_space<vmem>>, vector<1x18x4xf32>,
    %c15 = arith.constant 15 : index
    %c0_17 = arith.constant 0 : index
    %c0_18 = arith.constant 0 : index
    %9 = vector.load %arg6[%c15, %c0_17, %c0_18] : memref<18x18x4xf32, #tpu.memory_space<vmem>>, vector<1x18x4xf32>
    %c17 = arith.constant 17 : index
    %c0_19 = arith.constant 0 : index
    %c0_20 = arith.constant 0 : index
    %10 = vector.load %arg6[%c17, %c0_19, %c0_20] : memref<18x18x4xf32, #tpu.memory_space<vmem>>, vector<1x18x4xf32>
    tpu.vector_store %arg6[%c17, %c0_19, %c0_20], %9 {strides = array<i32>} : memref<18x18x4xf32, #tpu.memory_space<vmem>>, vector<1x18x4xf32>,
    %c0_21 = arith.constant 0 : index
    %c2_22 = arith.constant 2 : index
    %c0_23 = arith.constant 0 : index
    %11 = vector.load %arg6[%c0_21, %c2_22, %c0_23] : memref<18x18x4xf32, #tpu.memory_space<vmem>>, vector<18x1x4xf32>
    %c0_24 = arith.constant 0 : index
    %c0_25 = arith.constant 0 : index
    %c0_26 = arith.constant 0 : index
    %12 = vector.load %arg6[%c0_24, %c0_25, %c0_26] : memref<18x18x4xf32, #tpu.memory_space<vmem>>, vector<18x1x4xf32>
    tpu.vector_store %arg6[%c0_24, %c0_25, %c0_26], %11 {strides = array<i32>} : memref<18x18x4xf32, #tpu.memory_space<vmem>>, vector<18x1x4xf32>,
    %c0_27 = arith.constant 0 : index
    %c15_28 = arith.constant 15 : index
    %c0_29 = arith.constant 0 : index
    %13 = vector.load %arg6[%c0_27, %c15_28, %c0_29] : memref<18x18x4xf32, #tpu.memory_space<vmem>>, vector<18x1x4xf32>
    %c0_30 = arith.constant 0 : index
    %c17_31 = arith.constant 17 : index
    %c0_32 = arith.constant 0 : index
    %14 = vector.load %arg6[%c0_30, %c17_31, %c0_32] : memref<18x18x4xf32, #tpu.memory_space<vmem>>, vector<18x1x4xf32>
    tpu.vector_store %arg6[%c0_30, %c17_31, %c0_32], %13 {strides = array<i32>} : memref<18x18x4xf32, #tpu.memory_space<vmem>>, vector<18x1x4xf32>,
    %cst = arith.constant 0.000000e+00 : f32
    %15 = vector.broadcast %cst : f32 to vector<1x4xf32>
    %cst_33 = arith.constant 0.000000e+00 : f32
    %16 = vector.broadcast %cst_33 : f32 to vector<1x4xf32>
    %c0_34 = arith.constant 0 : index
    %c0_35 = arith.constant 0 : index
    %c0_36 = arith.constant 0 : index
    %17 = vector.load %arg6[%c0_34, %c0_35, %c0_36] : memref<18x18x4xf32, #tpu.memory_space<vmem>>, vector<16x16x4xf32>
    %18 = vector.shape_cast %17 : vector<16x16x4xf32> to vector<256x4xf32>
    %c0_37 = arith.constant 0 : index
    %c1_38 = arith.constant 1 : index
    %c0_39 = arith.constant 0 : index
    %19 = vector.load %arg6[%c0_37, %c1_38, %c0_39] : memref<18x18x4xf32, #tpu.memory_space<vmem>>, vector<16x16x4xf32>
    %20 = vector.shape_cast %19 : vector<16x16x4xf32> to vector<256x4xf32>
    %c0_40 = arith.constant 0 : index
    %c2_41 = arith.constant 2 : index
    %c0_42 = arith.constant 0 : index
    %21 = vector.load %arg6[%c0_40, %c2_41, %c0_42] : memref<18x18x4xf32, #tpu.memory_space<vmem>>, vector<16x16x4xf32>
    %22 = vector.shape_cast %21 : vector<16x16x4xf32> to vector<256x4xf32>
    %c1_43 = arith.constant 1 : index
    %c0_44 = arith.constant 0 : index
    %c0_45 = arith.constant 0 : index
    %23 = vector.load %arg6[%c1_43, %c0_44, %c0_45] : memref<18x18x4xf32, #tpu.memory_space<vmem>>, vector<16x16x4xf32>
    %24 = vector.shape_cast %23 : vector<16x16x4xf32> to vector<256x4xf32>
    %c1_46 = arith.constant 1 : index
    %c1_47 = arith.constant 1 : index
    %c0_48 = arith.constant 0 : index
    %25 = vector.load %arg6[%c1_46, %c1_47, %c0_48] : memref<18x18x4xf32, #tpu.memory_space<vmem>>, vector<16x16x4xf32>
    %26 = vector.shape_cast %25 : vector<16x16x4xf32> to vector<256x4xf32>
    %c1_49 = arith.constant 1 : index
    %c2_50 = arith.constant 2 : index
    %c0_51 = arith.constant 0 : index
    %27 = vector.load %arg6[%c1_49, %c2_50, %c0_51] : memref<18x18x4xf32, #tpu.memory_space<vmem>>, vector<16x16x4xf32>
    %28 = vector.shape_cast %27 : vector<16x16x4xf32> to vector<256x4xf32>
    %c2_52 = arith.constant 2 : index
    %c0_53 = arith.constant 0 : index
    %c0_54 = arith.constant 0 : index
    %29 = vector.load %arg6[%c2_52, %c0_53, %c0_54] : memref<18x18x4xf32, #tpu.memory_space<vmem>>, vector<16x16x4xf32>
    %30 = vector.shape_cast %29 : vector<16x16x4xf32> to vector<256x4xf32>
    %c2_55 = arith.constant 2 : index
    %c1_56 = arith.constant 1 : index
    %c0_57 = arith.constant 0 : index
    %31 = vector.load %arg6[%c2_55, %c1_56, %c0_57] : memref<18x18x4xf32, #tpu.memory_space<vmem>>, vector<16x16x4xf32>
    %32 = vector.shape_cast %31 : vector<16x16x4xf32> to vector<256x4xf32>
    %c2_58 = arith.constant 2 : index
    %c2_59 = arith.constant 2 : index
    %c0_60 = arith.constant 0 : index
    %33 = vector.load %arg6[%c2_58, %c2_59, %c0_60] : memref<18x18x4xf32, #tpu.memory_space<vmem>>, vector<16x16x4xf32>
    %34 = vector.shape_cast %33 : vector<16x16x4xf32> to vector<256x4xf32>
    %35 = tpu.concatenate %18, %20, %22, %24, %26, %28, %30, %32, %34 in 1 : vector<256x4xf32>, vector<256x4xf32>, vector<256x4xf32>, vector<256x4xf32>, vector<256x4xf32>, vector<256x4xf32>, vector<256x4xf32>, vector<256x4xf32>, vector<256x4xf32> -> vector<256x36xf32>
    %c0_61 = arith.constant 0 : index
    %c0_62 = arith.constant 0 : index
    %36 = vector.load %arg2[%c0_61, %c0_62] : memref<36x4xf32, #tpu.memory_space<vmem>>, vector<36x4xf32>
    %cst_63 = arith.constant dense<0.000000e+00> : vector<256x4xf32>
    %37 = tpu.matmul %35, %36, %cst_63 {dimension_numbers = #tpu.dot_dimension_numbers<[1], [0], [0], [1], [0, 0, 1, 1], [], []>} : vector<256x36xf32>, vector<36x4xf32>, vector<256x4xf32> -> vector<256x4xf32>
    %c0_64 = arith.constant 0 : index
    %c0_65 = arith.constant 0 : index
    %38 = vector.load %arg7[%c0_64, %c0_65] : memref<256x4xf32, #tpu.memory_space<vmem>>, vector<256x4xf32>
    tpu.vector_store %arg7[%c0_64, %c0_65], %37 {strides = array<i32>} : memref<256x4xf32, #tpu.memory_space<vmem>>, vector<256x4xf32>,
    %cst_66 = arith.constant dense<0.000000e+00> : vector<4xf32>
    %39 = vector.multi_reduction <add>, %37, %cst_66 [0] : vector<256x4xf32> to vector<4xf32>
    %40 = vector.shape_cast %39 : vector<4xf32> to vector<1x4xf32>
    %41 = arith.addf %15, %40 : vector<1x4xf32>
    %42 = arith.mulf %37, %37 : vector<256x4xf32>
    %cst_67 = arith.constant dense<0.000000e+00> : vector<4xf32>
    %43 = vector.multi_reduction <add>, %42, %cst_67 [0] : vector<256x4xf32> to vector<4xf32>
    %44 = vector.shape_cast %43 : vector<4xf32> to vector<1x4xf32>
    %45 = arith.addf %16, %44 : vector<1x4xf32>
    %cst_68 = arith.constant 2.560000e+02 : f32
    %46 = vector.broadcast %cst_68 : f32 to vector<1x4xf32>
    %47 = arith.divf %41, %46 : vector<1x4xf32>
    %cst_69 = arith.constant 2.560000e+02 : f32
    %48 = vector.broadcast %cst_69 : f32 to vector<1x4xf32>
    %49 = arith.divf %45, %48 : vector<1x4xf32>
    %50 = arith.mulf %47, %47 : vector<1x4xf32>
    %51 = arith.subf %49, %50 : vector<1x4xf32>
    %cst_70 = arith.constant 0.000000e+00 : f32
    %52 = vector.broadcast %cst_70 : f32 to vector<1x4xf32>
    %53 = arith.maximumf %51, %52 : vector<1x4xf32>
    %cst_71 = arith.constant 9.99999974E-6 : f32
    %54 = vector.broadcast %cst_71 : f32 to vector<1x4xf32>
    %55 = arith.addf %53, %54 : vector<1x4xf32>
    %56 = math.rsqrt %55 : vector<1x4xf32>
    %57 = arith.mulf %0, %56 : vector<1x4xf32>
    %58 = arith.mulf %47, %57 : vector<1x4xf32>
    %59 = arith.subf %1, %58 : vector<1x4xf32>
    %c0_72 = arith.constant 0 : index
    %c0_73 = arith.constant 0 : index
    %60 = vector.load %arg7[%c0_72, %c0_73] : memref<256x4xf32, #tpu.memory_space<vmem>>, vector<256x4xf32>
    %61 = vector.broadcast %57 : vector<1x4xf32> to vector<256x4xf32>
    %62 = arith.mulf %60, %61 : vector<256x4xf32>
    %63 = vector.broadcast %59 : vector<1x4xf32> to vector<256x4xf32>
    %64 = arith.addf %62, %63 : vector<256x4xf32>
    %cst_74 = arith.constant 0.000000e+00 : f32
    %65 = vector.broadcast %cst_74 : f32 to vector<256x4xf32>
    %66 = arith.maximumf %64, %65 : vector<256x4xf32>
    %67 = vector.shape_cast %66 : vector<256x4xf32> to vector<16x16x4xf32>
    %c1_75 = arith.constant 1 : index
    %c1_76 = arith.constant 1 : index
    %c0_77 = arith.constant 0 : index
    %68 = vector.load %arg6[%c1_75, %c1_76, %c0_77] : memref<18x18x4xf32, #tpu.memory_space<vmem>>, vector<16x16x4xf32>
    tpu.vector_store %arg6[%c1_75, %c1_76, %c0_77], %67 {strides = array<i32>} : memref<18x18x4xf32, #tpu.memory_space<vmem>>, vector<16x16x4xf32>,
    %c2_78 = arith.constant 2 : index
    %c0_79 = arith.constant 0 : index
    %c0_80 = arith.constant 0 : index
    %69 = vector.load %arg6[%c2_78, %c0_79, %c0_80] : memref<18x18x4xf32, #tpu.memory_space<vmem>>, vector<1x18x4xf32>
    %c0_81 = arith.constant 0 : index
    %c0_82 = arith.constant 0 : index
    %c0_83 = arith.constant 0 : index
    %70 = vector.load %arg6[%c0_81, %c0_82, %c0_83] : memref<18x18x4xf32, #tpu.memory_space<vmem>>, vector<1x18x4xf32>
    tpu.vector_store %arg6[%c0_81, %c0_82, %c0_83], %69 {strides = array<i32>} : memref<18x18x4xf32, #tpu.memory_space<vmem>>, vector<1x18x4xf32>,
    %c15_84 = arith.constant 15 : index
    %c0_85 = arith.constant 0 : index
    %c0_86 = arith.constant 0 : index
    %71 = vector.load %arg6[%c15_84, %c0_85, %c0_86] : memref<18x18x4xf32, #tpu.memory_space<vmem>>, vector<1x18x4xf32>
    %c17_87 = arith.constant 17 : index
    %c0_88 = arith.constant 0 : index
    %c0_89 = arith.constant 0 : index
    %72 = vector.load %arg6[%c17_87, %c0_88, %c0_89] : memref<18x18x4xf32, #tpu.memory_space<vmem>>, vector<1x18x4xf32>
    tpu.vector_store %arg6[%c17_87, %c0_88, %c0_89], %71 {strides = array<i32>} : memref<18x18x4xf32, #tpu.memory_space<vmem>>, vector<1x18x4xf32>,
    %c0_90 = arith.constant 0 : index
    %c2_91 = arith.constant 2 : index
    %c0_92 = arith.constant 0 : index
    %73 = vector.load %arg6[%c0_90, %c2_91, %c0_92] : memref<18x18x4xf32, #tpu.memory_space<vmem>>, vector<18x1x4xf32>
    %c0_93 = arith.constant 0 : index
    %c0_94 = arith.constant 0 : index
    %c0_95 = arith.constant 0 : index
    %74 = vector.load %arg6[%c0_93, %c0_94, %c0_95] : memref<18x18x4xf32, #tpu.memory_space<vmem>>, vector<18x1x4xf32>
    tpu.vector_store %arg6[%c0_93, %c0_94, %c0_95], %73 {strides = array<i32>} : memref<18x18x4xf32, #tpu.memory_space<vmem>>, vector<18x1x4xf32>,
    %c0_96 = arith.constant 0 : index
    %c15_97 = arith.constant 15 : index
    %c0_98 = arith.constant 0 : index
    %75 = vector.load %arg6[%c0_96, %c15_97, %c0_98] : memref<18x18x4xf32, #tpu.memory_space<vmem>>, vector<18x1x4xf32>
    %c0_99 = arith.constant 0 : index
    %c17_100 = arith.constant 17 : index
    %c0_101 = arith.constant 0 : index
    %76 = vector.load %arg6[%c0_99, %c17_100, %c0_101] : memref<18x18x4xf32, #tpu.memory_space<vmem>>, vector<18x1x4xf32>
    tpu.vector_store %arg6[%c0_99, %c17_100, %c0_101], %75 {strides = array<i32>} : memref<18x18x4xf32, #tpu.memory_space<vmem>>, vector<18x1x4xf32>,
    %cst_102 = arith.constant 0.000000e+00 : f32
    %77 = vector.broadcast %cst_102 : f32 to vector<1x4xf32>
    %cst_103 = arith.constant 0.000000e+00 : f32
    %78 = vector.broadcast %cst_103 : f32 to vector<1x4xf32>
    %c0_104 = arith.constant 0 : index
    %c0_105 = arith.constant 0 : index
    %c0_106 = arith.constant 0 : index
    %79 = vector.load %arg6[%c0_104, %c0_105, %c0_106] : memref<18x18x4xf32, #tpu.memory_space<vmem>>, vector<16x16x4xf32>
    %80 = vector.shape_cast %79 : vector<16x16x4xf32> to vector<256x4xf32>
    %c0_107 = arith.constant 0 : index
    %c1_108 = arith.constant 1 : index
    %c0_109 = arith.constant 0 : index
    %81 = vector.load %arg6[%c0_107, %c1_108, %c0_109] : memref<18x18x4xf32, #tpu.memory_space<vmem>>, vector<16x16x4xf32>
    %82 = vector.shape_cast %81 : vector<16x16x4xf32> to vector<256x4xf32>
    %c0_110 = arith.constant 0 : index
    %c2_111 = arith.constant 2 : index
    %c0_112 = arith.constant 0 : index
    %83 = vector.load %arg6[%c0_110, %c2_111, %c0_112] : memref<18x18x4xf32, #tpu.memory_space<vmem>>, vector<16x16x4xf32>
    %84 = vector.shape_cast %83 : vector<16x16x4xf32> to vector<256x4xf32>
    %c1_113 = arith.constant 1 : index
    %c0_114 = arith.constant 0 : index
    %c0_115 = arith.constant 0 : index
    %85 = vector.load %arg6[%c1_113, %c0_114, %c0_115] : memref<18x18x4xf32, #tpu.memory_space<vmem>>, vector<16x16x4xf32>
    %86 = vector.shape_cast %85 : vector<16x16x4xf32> to vector<256x4xf32>
    %c1_116 = arith.constant 1 : index
    %c1_117 = arith.constant 1 : index
    %c0_118 = arith.constant 0 : index
    %87 = vector.load %arg6[%c1_116, %c1_117, %c0_118] : memref<18x18x4xf32, #tpu.memory_space<vmem>>, vector<16x16x4xf32>
    %88 = vector.shape_cast %87 : vector<16x16x4xf32> to vector<256x4xf32>
    %c1_119 = arith.constant 1 : index
    %c2_120 = arith.constant 2 : index
    %c0_121 = arith.constant 0 : index
    %89 = vector.load %arg6[%c1_119, %c2_120, %c0_121] : memref<18x18x4xf32, #tpu.memory_space<vmem>>, vector<16x16x4xf32>
    %90 = vector.shape_cast %89 : vector<16x16x4xf32> to vector<256x4xf32>
    %c2_122 = arith.constant 2 : index
    %c0_123 = arith.constant 0 : index
    %c0_124 = arith.constant 0 : index
    %91 = vector.load %arg6[%c2_122, %c0_123, %c0_124] : memref<18x18x4xf32, #tpu.memory_space<vmem>>, vector<16x16x4xf32>
    %92 = vector.shape_cast %91 : vector<16x16x4xf32> to vector<256x4xf32>
    %c2_125 = arith.constant 2 : index
    %c1_126 = arith.constant 1 : index
    %c0_127 = arith.constant 0 : index
    %93 = vector.load %arg6[%c2_125, %c1_126, %c0_127] : memref<18x18x4xf32, #tpu.memory_space<vmem>>, vector<16x16x4xf32>
    %94 = vector.shape_cast %93 : vector<16x16x4xf32> to vector<256x4xf32>
    %c2_128 = arith.constant 2 : index
    %c2_129 = arith.constant 2 : index
    %c0_130 = arith.constant 0 : index
    %95 = vector.load %arg6[%c2_128, %c2_129, %c0_130] : memref<18x18x4xf32, #tpu.memory_space<vmem>>, vector<16x16x4xf32>
    %96 = vector.shape_cast %95 : vector<16x16x4xf32> to vector<256x4xf32>
    %97 = tpu.concatenate %80, %82, %84, %86, %88, %90, %92, %94, %96 in 1 : vector<256x4xf32>, vector<256x4xf32>, vector<256x4xf32>, vector<256x4xf32>, vector<256x4xf32>, vector<256x4xf32>, vector<256x4xf32>, vector<256x4xf32>, vector<256x4xf32> -> vector<256x36xf32>
    %c0_131 = arith.constant 0 : index
    %c0_132 = arith.constant 0 : index
    %98 = vector.load %arg3[%c0_131, %c0_132] : memref<36x4xf32, #tpu.memory_space<vmem>>, vector<36x4xf32>
    %cst_133 = arith.constant dense<0.000000e+00> : vector<256x4xf32>
    %99 = tpu.matmul %97, %98, %cst_133 {dimension_numbers = #tpu.dot_dimension_numbers<[1], [0], [0], [1], [0, 0, 1, 1], [], []>} : vector<256x36xf32>, vector<36x4xf32>, vector<256x4xf32> -> vector<256x4xf32>
    %c0_134 = arith.constant 0 : index
    %c0_135 = arith.constant 0 : index
    %100 = vector.load %arg7[%c0_134, %c0_135] : memref<256x4xf32, #tpu.memory_space<vmem>>, vector<256x4xf32>
    tpu.vector_store %arg7[%c0_134, %c0_135], %99 {strides = array<i32>} : memref<256x4xf32, #tpu.memory_space<vmem>>, vector<256x4xf32>,
    %cst_136 = arith.constant dense<0.000000e+00> : vector<4xf32>
    %101 = vector.multi_reduction <add>, %99, %cst_136 [0] : vector<256x4xf32> to vector<4xf32>
    %102 = vector.shape_cast %101 : vector<4xf32> to vector<1x4xf32>
    %103 = arith.addf %77, %102 : vector<1x4xf32>
    %104 = arith.mulf %99, %99 : vector<256x4xf32>
    %cst_137 = arith.constant dense<0.000000e+00> : vector<4xf32>
    %105 = vector.multi_reduction <add>, %104, %cst_137 [0] : vector<256x4xf32> to vector<4xf32>
    %106 = vector.shape_cast %105 : vector<4xf32> to vector<1x4xf32>
    %107 = arith.addf %78, %106 : vector<1x4xf32>
    %cst_138 = arith.constant 2.560000e+02 : f32
    %108 = vector.broadcast %cst_138 : f32 to vector<1x4xf32>
    %109 = arith.divf %103, %108 : vector<1x4xf32>
    %cst_139 = arith.constant 2.560000e+02 : f32
    %110 = vector.broadcast %cst_139 : f32 to vector<1x4xf32>
    %111 = arith.divf %107, %110 : vector<1x4xf32>
    %112 = arith.mulf %109, %109 : vector<1x4xf32>
    %113 = arith.subf %111, %112 : vector<1x4xf32>
    %cst_140 = arith.constant 0.000000e+00 : f32
    %114 = vector.broadcast %cst_140 : f32 to vector<1x4xf32>
    %115 = arith.maximumf %113, %114 : vector<1x4xf32>
    %cst_141 = arith.constant 9.99999974E-6 : f32
    %116 = vector.broadcast %cst_141 : f32 to vector<1x4xf32>
    %117 = arith.addf %115, %116 : vector<1x4xf32>
    %118 = math.rsqrt %117 : vector<1x4xf32>
    %119 = arith.mulf %2, %118 : vector<1x4xf32>
    %120 = arith.mulf %109, %119 : vector<1x4xf32>
    %121 = arith.subf %3, %120 : vector<1x4xf32>
    %c0_142 = arith.constant 0 : index
    %c0_143 = arith.constant 0 : index
    %122 = vector.load %arg7[%c0_142, %c0_143] : memref<256x4xf32, #tpu.memory_space<vmem>>, vector<256x4xf32>
    %123 = vector.broadcast %119 : vector<1x4xf32> to vector<256x4xf32>
    %124 = arith.mulf %122, %123 : vector<256x4xf32>
    %125 = vector.broadcast %121 : vector<1x4xf32> to vector<256x4xf32>
    %126 = arith.addf %124, %125 : vector<256x4xf32>
    %127 = vector.shape_cast %126 : vector<256x4xf32> to vector<16x16x4xf32>
    %c0_144 = arith.constant 0 : index
    %c0_145 = arith.constant 0 : index
    %c0_146 = arith.constant 0 : index
    %c0_147 = arith.constant 0 : index
    %128 = vector.load %arg1[%c0_144, %c0_145, %c0_146, %c0_147] : memref<1x16x16x4xf32, #tpu.memory_space<vmem>>, vector<1x16x16x4xf32>
    %129 = vector.shape_cast %128 : vector<1x16x16x4xf32> to vector<16x16x4xf32>
    %130 = arith.addf %129, %127 : vector<16x16x4xf32>
    %c0_148 = arith.constant 0 : index
    %c0_149 = arith.constant 0 : index
    %c0_150 = arith.constant 0 : index
    %c0_151 = arith.constant 0 : index
    %131 = vector.load %arg5[%c0_148, %c0_149, %c0_150, %c0_151] : memref<1x16x16x4xf32, #tpu.memory_space<vmem>>, vector<1x16x16x4xf32>
    %132 = vector.shape_cast %131 : vector<1x16x16x4xf32> to vector<16x16x4xf32>
    %133 = vector.shape_cast %130 : vector<16x16x4xf32> to vector<1x16x16x4xf32>
    tpu.vector_store %arg5[%c0_148, %c0_149, %c0_150, %c0_151], %133 {strides = array<i32>} : memref<1x16x16x4xf32, #tpu.memory_space<vmem>>, vector<1x16x16x4xf32>,
    return
  }
  func.func @transform_0(%arg0: i32) -> (i32, i32, i32, i32) {
    %c0_i32 = arith.constant 0 : i32
    %c0_i32_0 = arith.constant 0 : i32
    %c0_i32_1 = arith.constant 0 : i32
    %c0_i32_2 = arith.constant 0 : i32
    return %arg0, %c0_i32, %c0_i32_0, %c0_i32_1 : i32, i32, i32, i32
  }
  func.func @transform_1(%arg0: i32) -> (i32, i32) {
    %c0_i32 = arith.constant 0 : i32
    %c0_i32_0 = arith.constant 0 : i32
    %c0_i32_1 = arith.constant 0 : i32
    return %c0_i32, %c0_i32_0 : i32, i32
  }
  func.func @transform_2(%arg0: i32) -> (i32, i32) {
    %c0_i32 = arith.constant 0 : i32
    %c0_i32_0 = arith.constant 0 : i32
    %c0_i32_1 = arith.constant 0 : i32
    return %c0_i32, %c0_i32_0 : i32, i32
  }
  func.func @transform_3(%arg0: i32) -> (i32, i32) {
    %c0_i32 = arith.constant 0 : i32
    %c0_i32_0 = arith.constant 0 : i32
    %c0_i32_1 = arith.constant 0 : i32
    return %c0_i32, %c0_i32_0 : i32, i32
  }
  func.func @transform_4(%arg0: i32) -> (i32, i32, i32, i32) {
    %c0_i32 = arith.constant 0 : i32
    %c0_i32_0 = arith.constant 0 : i32
    %c0_i32_1 = arith.constant 0 : i32
    %c0_i32_2 = arith.constant 0 : i32
    return %arg0, %c0_i32, %c0_i32_0, %c0_i32_1 : i32, i32, i32, i32
  }
}

</mosaic_0001>

<llo_original>
// kernel: tpu_custom_call.1
$region0: #{tpu_custom_call.1}
  #allocation0 [shape = 'u32[]', space=smem, size = 0x4, offset = 0x4, fixed_abs, tag = 'smem constant byte address 0x4 - core index']
  #allocation1 [shape = 'u32[144,128]{1,0:T(1,128)}', space=vmem, size = 0x12000, scoped, tag = 'internal scratch']
  #allocation2 [shape = 'f32[18,18,4]{2,1,0:T(8,128)}', space=vmem, size = 0x36000, scoped, tag = 'scratch operand']
  #allocation3 [shape = 'f32[256,4]{1,0:T(8,128)}', space=vmem, size = 0x20000, scoped, tag = 'scratch operand']
  %s0 = inlined_call_operand.hbm [shape: f32[2,16,16,4], index: 0, kind: input, shape index: {}]
  %s1 = inlined_call_operand.hbm [shape: f32[36,4], index: 1, kind: input, shape index: {}]
  %s2 = inlined_call_operand.hbm [shape: f32[36,4], index: 2, kind: input, shape index: {}]
  %s3 = inlined_call_operand.hbm [shape: f32[8,4], index: 3, kind: input, shape index: {}]
  %s4 = inlined_call_operand.hbm [shape: f32[2,16,16,4], index: 4, kind: output, shape index: {}]
  %s5 = sld [smem:[#allocation0]]
  $region65: #{tpu_custom_call.1} parent=0
    _
  %s7 = ssub.s32 1, %s5
  %s8 = scalar_select 0, %s7, %s5
  $region1: #{tpu_custom_call.1} parent=0
    #allocation4 [shape = 'u8[262144]{0}', space=vmem, size = 0x40000, scoped, tag = 'input window, operand 0']
    #allocation5 [shape = 's32[2]{0}', space=sflag, size = 0x8, scoped, tag = 'scoped memory for tpu_custom_call.1']
    #allocation6 [shape = 's32[2]{0}', space=sflag, size = 0x8, scoped, tag = 'scoped memory for tpu_custom_call.1']
    #allocation7 [shape = 'u8[20480]{0}', space=vmem, size = 0x5000, scoped, tag = 'input window, operand 1, single buffered']
    #allocation8 [shape = 's32[1]{0}', space=sflag, size = 0x4, scoped, tag = 'scoped memory for tpu_custom_call.1']
    #allocation9 [shape = 'u8[20480]{0}', space=vmem, size = 0x5000, scoped, tag = 'input window, operand 2, single buffered']
    #allocation10 [shape = 'u8[4096]{0}', space=vmem, size = 0x1000, scoped, tag = 'input window, operand 3, single buffered']
    #allocation11 [shape = 's32[1]{0}', space=sflag, size = 0x4, scoped, tag = 'scoped memory for tpu_custom_call.1']
    #allocation12 [shape = 'u8[262144]{0}', space=vmem, size = 0x40000, scoped, tag = 'output window, operand 0']
    %9 = vsyncpa [#allocation5], 0
    %s10 = scalar_lea.sflag [#allocation5], 1
    %11 = vsyncpa %s10, 0
    %12 = vsyncpa [#allocation8], 0
    %13 = vsyncpa [#allocation11], 0
    %14 = vsyncpa [#allocation6], 0
    %s15 = scalar_lea.sflag [#allocation6], 1
    %16 = vsyncpa %s15, 0
    loop: start=0, step=1, limit=4
    $region2: #{tpu_custom_call.1} parent=1 // loop_pre_header
      _
    $region3: #{tpu_custom_call.1} parent=1 // loop_header
      %s18 = sphi 0, %s22
      %p19 = scmp.ge.s32.totalorder %s18, 4
      %s28 = sphi 0, %s30
      %s31 = sphi 0, %s28
      %s32 = sphi 0, %s31
      %s48 = sphi 0, %s32
      %s52 = sphi 0, %s52
      %s54 = sphi 0, %s52
      %s55 = sphi 0, %s54
      %s69 = sphi 0, %s55
      %s73 = sphi 0, %s73
      %s75 = sphi 0, %s73
      %s76 = sphi 0, %s75
      %s90 = sphi 0, %s76
      %s94 = sphi 0, %s94
      %s96 = sphi 0, %s94
      %s97 = sphi 0, %s96
      %s111 = sphi 0, %s97
      %s117 = sphi 0, %s119
      %s120 = sphi 0, %s117
      %s121 = sphi 0, %s120
      %s137 = sphi 0, %s121
    $region4: #{tpu_custom_call.1} parent=1 // loop_header_branch
      %21 = sbr.rel (%p19) target = $region8
    $region5: #{tpu_custom_call.1} parent=1 // loop_body
      %s23 = ssub.s32 %s18, 1
      %s24 = ssub.s32 %s18, 2
      %s25 = sadd.s32 %s18, 1
      %s26 = ssub.s32 %s18, %s25
      %p27 = scmp.eq.s32.totalorder %s26, 0
      %s29 = sadd.s32 %s28, 1
      %s30 = scalar_select %p27, %s28, %s29
      %p33 = pneg %p27
      %p34 = scmp.eq.s32.totalorder %s18, 1
      %p35 = por %p33, %p34
      %p36 = scmp.ne.s32.totalorder %s28, %s31
      %p37 = scmp.eq.s32.totalorder %s18, 0
      %p38 = por %p36, %p37
      %p39 = scmp.ne.s32.totalorder %s28, %s31
      %p40 = scmp.eq.s32.totalorder %s23, 1
      %p41 = por %p39, %p40
      %p42 = scmp.ne.s32.totalorder %s31, %s32
      %p43 = scmp.eq.s32.totalorder %s23, 0
      %p44 = por %p42, %p43
      %p45 = scmp.ne.s32.totalorder %s31, %s32
      %p46 = scmp.eq.s32.totalorder %s24, 1
      %p47 = por %p45, %p46
      %p49 = scmp.ne.s32.totalorder %s32, %s48
      %p50 = scmp.eq.s32.totalorder %s24, 0
      %p51 = por %p49, %p50
      %s53 = sadd.s32 %s52, 1
      %p56 = scmp.eq.s32.totalorder %s18, 1
      %p57 = scmp.ne.s32.totalorder %s52, %s54
      %p58 = scmp.eq.s32.totalorder %s18, 0
      %p59 = por %p57, %p58
      %p60 = scmp.ne.s32.totalorder %s52, %s54
      %p61 = scmp.eq.s32.totalorder %s23, 1
      %p62 = por %p60, %p61
      %p63 = scmp.ne.s32.totalorder %s54, %s55
      %p64 = scmp.eq.s32.totalorder %s23, 0
      %p65 = por %p63, %p64
      %p66 = scmp.ne.s32.totalorder %s54, %s55
      %p67 = scmp.eq.s32.totalorder %s24, 1
      %p68 = por %p66, %p67
      %p70 = scmp.ne.s32.totalorder %s55, %s69
      %p71 = scmp.eq.s32.totalorder %s24, 0
      %p72 = por %p70, %p71
      %s74 = sadd.s32 %s73, 1
      %p77 = scmp.eq.s32.totalorder %s18, 1
      %p78 = scmp.ne.s32.totalorder %s73, %s75
      %p79 = scmp.eq.s32.totalorder %s18, 0
      %p80 = por %p78, %p79
      %p81 = scmp.ne.s32.totalorder %s73, %s75
      %p82 = scmp.eq.s32.totalorder %s23, 1
      %p83 = por %p81, %p82
      %p84 = scmp.ne.s32.totalorder %s75, %s76
      %p85 = scmp.eq.s32.totalorder %s23, 0
      %p86 = por %p84, %p85
      %p87 = scmp.ne.s32.totalorder %s75, %s76
      %p88 = scmp.eq.s32.totalorder %s24, 1
      %p89 = por %p87, %p88
      %p91 = scmp.ne.s32.totalorder %s76, %s90
      %p92 = scmp.eq.s32.totalorder %s24, 0
      %p93 = por %p91, %p92
      %s95 = sadd.s32 %s94, 1
      %p98 = scmp.eq.s32.totalorder %s18, 1
      %p99 = scmp.ne.s32.totalorder %s94, %s96
      %p100 = scmp.eq.s32.totalorder %s18, 0
      %p101 = por %p99, %p100
      %p102 = scmp.ne.s32.totalorder %s94, %s96
      %p103 = scmp.eq.s32.totalorder %s23, 1
      %p104 = por %p102, %p103
      %p105 = scmp.ne.s32.totalorder %s96, %s97
      %p106 = scmp.eq.s32.totalorder %s23, 0
      %p107 = por %p105, %p106
      %p108 = scmp.ne.s32.totalorder %s96, %s97
      %p109 = scmp.eq.s32.totalorder %s24, 1
      %p110 = por %p108, %p109
      %p112 = scmp.ne.s32.totalorder %s97, %s111
      %p113 = scmp.eq.s32.totalorder %s24, 0
      %p114 = por %p112, %p113
      %s115 = ssub.s32 %s18, %s25
      %p116 = scmp.eq.s32.totalorder %s115, 0
      %s118 = sadd.s32 %s117, 1
      %s119 = scalar_select %p116, %s117, %s118
      %p122 = pneg %p116
      %p123 = scmp.eq.s32.totalorder %s18, 1
      %p124 = por %p122, %p123
      %p125 = scmp.ne.s32.totalorder %s117, %s120
      %p126 = scmp.eq.s32.totalorder %s18, 0
      %p127 = por %p125, %p126
      %p128 = scmp.ne.s32.totalorder %s117, %s120
      %p129 = scmp.eq.s32.totalorder %s23, 1
      %p130 = por %p128, %p129
      %p131 = scmp.ne.s32.totalorder %s120, %s121
      %p132 = scmp.eq.s32.totalorder %s23, 0
      %p133 = por %p131, %p132
      %p134 = scmp.ne.s32.totalorder %s120, %s121
      %p135 = scmp.eq.s32.totalorder %s24, 1
      %p136 = por %p134, %p135
      %p138 = scmp.ne.s32.totalorder %s121, %s137
      %p139 = scmp.eq.s32.totalorder %s24, 0
      %p140 = por %p138, %p139
      %p141 = scmp.le.s32.totalorder 1, %s18
      %p142 = scmp.lt.s32.totalorder %s18, 3
      %p143 = pnand %p141, %p142
      %p144 = pneg %p143
      // Predicated region
      $region9: #{tpu_custom_call.1} parent=5 // pred_check
        _
      $region10: #{tpu_custom_call.1} parent=5 // pred_check_branch
        %146 = sbr.rel (%p143) target = $region12
      $region11: #{tpu_custom_call.1} parent=5 // pred_region
        %s147 = ssub.s32 %s18, 1
        // Predicated region
        $region13: #{tpu_custom_call.1} parent=11 // pred_check
          %p148 = pneg %p65
        $region14: #{tpu_custom_call.1} parent=11 // pred_check_branch
          %150 = sbr.rel (%p148) target = $region16
        $region15: #{tpu_custom_call.1} parent=11 // pred_region
          %s152 = ssub.s32 640, 640
          %153 = vsyncadd [#allocation8], %s152
          %s154 = sshll.u32 [#allocation7], 4
          %s155 = int_to_ptr.vmem [resolvable:$true] %s154
          %160 = dma.hbm_to_vmem [thread:$0]  %s1, 640, %s155, [#allocation8], 128, 128, 8
        $region16: #{tpu_custom_call.1} parent=11 // pred_fallthru
          _
        // Predicated region
        $region17: #{tpu_custom_call.1} parent=11 // pred_check
          %p161 = pneg %p86
        $region18: #{tpu_custom_call.1} parent=11 // pred_check_branch
          %163 = sbr.rel (%p161) target = $region20
        $region19: #{tpu_custom_call.1} parent=11 // pred_region
          %s165 = ssub.s32 640, 640
          %166 = vsyncadd [#allocation8], %s165
          %s167 = sshll.u32 [#allocation9], 4
          %s168 = int_to_ptr.vmem [resolvable:$true] %s167
          %173 = dma.hbm_to_vmem [thread:$0]  %s2, 640, %s168, [#allocation8], 128, 128, 8
        $region20: #{tpu_custom_call.1} parent=11 // pred_fallthru
          _
        // Predicated region
        $region21: #{tpu_custom_call.1} parent=11 // pred_check
          %p174 = pneg %p107
        $region22: #{tpu_custom_call.1} parent=11 // pred_check_branch
          %176 = sbr.rel (%p174) target = $region24
        $region23: #{tpu_custom_call.1} parent=11 // pred_region
          %s178 = ssub.s32 128, 128
          %179 = vsyncadd [#allocation11], %s178
          %s181 = sshll.u32 [#allocation10], 4
          %s182 = int_to_ptr.vmem [resolvable:$true] %s181
          %184 = dma.hbm_to_vmem [thread:$0]  %s3, 128, %s182, [#allocation11]
        $region24: #{tpu_custom_call.1} parent=11 // pred_fallthru
          _
      $region12: #{tpu_custom_call.1} parent=5 // pred_fallthru
        _
      %p185 = scmp.lt.s32.totalorder %s18, 2
      // Predicated region
      $region25: #{tpu_custom_call.1} parent=5 // pred_check
        %p186 = pneg %p185
      $region26: #{tpu_custom_call.1} parent=5 // pred_check_branch
        %188 = sbr.rel (%p186) target = $region28
      $region27: #{tpu_custom_call.1} parent=5 // pred_region
        // Predicated region
        $region29: #{tpu_custom_call.1} parent=27 // pred_check
          %p189 = pneg %p38
        $region30: #{tpu_custom_call.1} parent=27 // pred_check_branch
          %191 = sbr.rel (%p189) target = $region32
        $region31: #{tpu_custom_call.1} parent=27 // pred_region
          %s192 = sand.u32 %s28, 1
          %s193 = scalar_lea.sflag [#allocation5], %s192
          %s194 = sand.u32 %s28, 1
          %s195 = smul.addr %s194, 256
          %s196 = scalar_lea.vmem [#allocation4], %s195
          %s198 = ssub.s32 4096, 4096
          %199 = vsyncadd %s193, %s198
          %s200 = smul.addr %s18, 32
          %s201 = smul.addr %s200, 128
          %s202 = scalar_lea.hbm %s0, %s201
          %s203 = sshll.u32 %s196, 4
          %s204 = int_to_ptr.vmem [resolvable:$true] %s203
          %209 = dma.hbm_to_vmem [thread:$0]  %s202, 4096, %s204, %s193, 128, 128, 8
        $region32: #{tpu_custom_call.1} parent=27 // pred_fallthru
          _
      $region28: #{tpu_custom_call.1} parent=5 // pred_fallthru
        _
      %p210 = scmp.le.s32.totalorder 1, %s18
      %p211 = scmp.lt.s32.totalorder %s18, 3
      %p212 = pnand %p210, %p211
      %p213 = pneg %p212
      // Predicated region
      $region33: #{tpu_custom_call.1} parent=5 // pred_check
        _
      $region34: #{tpu_custom_call.1} parent=5 // pred_check_branch
        %215 = sbr.rel (%p212) target = $region36
      $region35: #{tpu_custom_call.1} parent=5 // pred_region
        %s216 = ssub.s32 %s18, 1
        %s217 = sand.u32 %s31, 1
        %s218 = scalar_lea.sflag [#allocation5], %s217
        %s219 = sand.u32 %s31, 1
        %s220 = smul.addr %s219, 256
        %s221 = scalar_lea.vmem [#allocation4], %s220
        // Predicated region
        $region37: #{tpu_custom_call.1} parent=35 // pred_check
          %p222 = pneg %p44
        $region38: #{tpu_custom_call.1} parent=35 // pred_check_branch
          %224 = sbr.rel (%p222) target = $region40
        $region39: #{tpu_custom_call.1} parent=35 // pred_region
          %225 = dma.done %s218, 4096
        $region40: #{tpu_custom_call.1} parent=35 // pred_fallthru
          _
        // Predicated region
        $region41: #{tpu_custom_call.1} parent=35 // pred_check
          %p226 = pneg %p65
        $region42: #{tpu_custom_call.1} parent=35 // pred_check_branch
          %228 = sbr.rel (%p226) target = $region44
        $region43: #{tpu_custom_call.1} parent=35 // pred_region
          %229 = dma.done [#allocation8], 640
        $region44: #{tpu_custom_call.1} parent=35 // pred_fallthru
          _
        // Predicated region
        $region45: #{tpu_custom_call.1} parent=35 // pred_check
          %p230 = pneg %p86
        $region46: #{tpu_custom_call.1} parent=35 // pred_check_branch
          %232 = sbr.rel (%p230) target = $region48
        $region47: #{tpu_custom_call.1} parent=35 // pred_region
          %233 = dma.done [#allocation8], 640
        $region48: #{tpu_custom_call.1} parent=35 // pred_fallthru
          _
        // Predicated region
        $region49: #{tpu_custom_call.1} parent=35 // pred_check
          %p234 = pneg %p107
        $region50: #{tpu_custom_call.1} parent=35 // pred_check_branch
          %236 = sbr.rel (%p234) target = $region52
        $region51: #{tpu_custom_call.1} parent=35 // pred_region
          %237 = dma.done [#allocation11], 128
        $region52: #{tpu_custom_call.1} parent=35 // pred_fallthru
          _
        %s238 = sand.u32 %s31, 1
        %s239 = scalar_lea.sflag [#allocation5], %s238
        %s240 = sand.u32 %s31, 1
        %s241 = smul.addr %s240, 256
        %s242 = scalar_lea.vmem [#allocation4], %s241
        %p243 = pneg %p44
        %p244 = pneg %p41
        %p245 = pneg %p65
        %p246 = pneg %p62
        %p247 = pneg %p86
        %p248 = pneg %p83
        %p249 = pneg %p107
        %p250 = pneg %p104
        %p251 = pneg %p133
        %p252 = pneg %p130
        %s253 = sand.u32 %s120, 1
        %s254 = scalar_lea.sflag [#allocation6], %s253
        %s255 = sand.u32 %s120, 1
        %s256 = smul.addr %s255, 256
        %s257 = scalar_lea.vmem [#allocation12], %s256
        %v258 = vld [vmem:[#allocation10] sm:$0x1]
        %v259 = vld [vmem:[#allocation10 + $0x1] sm:$0x1]
        %v260 = vld [vmem:[#allocation10 + $0x2] sm:$0x1]
        %v261 = vld [vmem:[#allocation10 + $0x3] sm:$0x1]
        %v262 = vld [vmem:[%s221] sm:$0xff]
        %v263 = vld [vmem:[%s221 + $0x8] sm:$0xff]
        %v264 = vld [vmem:[%s221 + $0x10] sm:$0xff]
        %v265 = vld [vmem:[%s221 + $0x18] sm:$0xff]
        %v266 = vld [vmem:[%s221 + $0x20] sm:$0xff]
        %v267 = vld [vmem:[%s221 + $0x28] sm:$0xff]
        %v268 = vld [vmem:[%s221 + $0x30] sm:$0xff]
        %v269 = vld [vmem:[%s221 + $0x38] sm:$0xff]
        %v270 = vld [vmem:[%s221 + $0x40] sm:$0xff]
        %v271 = vld [vmem:[%s221 + $0x48] sm:$0xff]
        %v272 = vld [vmem:[%s221 + $0x50] sm:$0xff]
        %v273 = vld [vmem:[%s221 + $0x58] sm:$0xff]
        %v274 = vld [vmem:[%s221 + $0x60] sm:$0xff]
        %v275 = vld [vmem:[%s221 + $0x68] sm:$0xff]
        %v276 = vld [vmem:[%s221 + $0x70] sm:$0xff]
        %v277 = vld [vmem:[%s221 + $0x78] sm:$0xff]
        %v278 = vld [vmem:[%s221 + $0x80] sm:$0xff]
        %v279 = vld [vmem:[%s221 + $0x88] sm:$0xff]
        %v280 = vld [vmem:[%s221 + $0x90] sm:$0xff]
        %v281 = vld [vmem:[%s221 + $0x98] sm:$0xff]
        %v282 = vld [vmem:[%s221 + $0xa0] sm:$0xff]
        %v283 = vld [vmem:[%s221 + $0xa8] sm:$0xff]
        %v284 = vld [vmem:[%s221 + $0xb0] sm:$0xff]
        %v285 = vld [vmem:[%s221 + $0xb8] sm:$0xff]
        %v286 = vld [vmem:[%s221 + $0xc0] sm:$0xff]
        %v287 = vld [vmem:[%s221 + $0xc8] sm:$0xff]
        %v288 = vld [vmem:[%s221 + $0xd0] sm:$0xff]
        %v289 = vld [vmem:[%s221 + $0xd8] sm:$0xff]
        %v290 = vld [vmem:[%s221 + $0xe0] sm:$0xff]
        %v291 = vld [vmem:[%s221 + $0xe8] sm:$0xff]
        %v292 = vld [vmem:[%s221 + $0xf0] sm:$0xff]
        %v293 = vld [vmem:[%s221 + $0xf8] sm:$0xff]
        %s294 = scalar_lea.vmem [#allocation2], 24
        %vm295 = vcmask 31744
        %296 = vst.msk [vmem:[%s294 + $0x1] sm:$0xff] %vm295, %v262
        %297 = vst.msk [vmem:[%s294 + $0x9] sm:$0xff] %vm295, %v263
        %298 = vst.msk [vmem:[%s294 + $0x19] sm:$0xff] %vm295, %v264
        %299 = vst.msk [vmem:[%s294 + $0x21] sm:$0xff] %vm295, %v265
        %300 = vst.msk [vmem:[%s294 + $0x31] sm:$0xff] %vm295, %v266
        %301 = vst.msk [vmem:[%s294 + $0x39] sm:$0xff] %vm295, %v267
        %302 = vst.msk [vmem:[%s294 + $0x49] sm:$0xff] %vm295, %v268
        %303 = vst.msk [vmem:[%s294 + $0x51] sm:$0xff] %vm295, %v269
        %304 = vst.msk [vmem:[%s294 + $0x61] sm:$0xff] %vm295, %v270
        %305 = vst.msk [vmem:[%s294 + $0x69] sm:$0xff] %vm295, %v271
        %306 = vst.msk [vmem:[%s294 + $0x79] sm:$0xff] %vm295, %v272
        %307 = vst.msk [vmem:[%s294 + $0x81] sm:$0xff] %vm295, %v273
        %308 = vst.msk [vmem:[%s294 + $0x91] sm:$0xff] %vm295, %v274
        %309 = vst.msk [vmem:[%s294 + $0x99] sm:$0xff] %vm295, %v275
        %310 = vst.msk [vmem:[%s294 + $0xa9] sm:$0xff] %vm295, %v276
        %311 = vst.msk [vmem:[%s294 + $0xb1] sm:$0xff] %vm295, %v277
        %312 = vst.msk [vmem:[%s294 + $0xc1] sm:$0xff] %vm295, %v278
        %313 = vst.msk [vmem:[%s294 + $0xc9] sm:$0xff] %vm295, %v279
        %314 = vst.msk [vmem:[%s294 + $0xd9] sm:$0xff] %vm295, %v280
        %315 = vst.msk [vmem:[%s294 + $0xe1] sm:$0xff] %vm295, %v281
        %316 = vst.msk [vmem:[%s294 + $0xf1] sm:$0xff] %vm295, %v282
        %317 = vst.msk [vmem:[%s294 + $0xf9] sm:$0xff] %vm295, %v283
        %318 = vst.msk [vmem:[%s294 + $0x109] sm:$0xff] %vm295, %v284
        %319 = vst.msk [vmem:[%s294 + $0x111] sm:$0xff] %vm295, %v285
        %320 = vst.msk [vmem:[%s294 + $0x121] sm:$0xff] %vm295, %v286
        %321 = vst.msk [vmem:[%s294 + $0x129] sm:$0xff] %vm295, %v287
        %322 = vst.msk [vmem:[%s294 + $0x139] sm:$0xff] %vm295, %v288
        %323 = vst.msk [vmem:[%s294 + $0x141] sm:$0xff] %vm295, %v289
        %324 = vst.msk [vmem:[%s294 + $0x151] sm:$0xff] %vm295, %v290
        %325 = vst.msk [vmem:[%s294 + $0x159] sm:$0xff] %vm295, %v291
        %326 = vst.msk [vmem:[%s294 + $0x169] sm:$0xff] %vm295, %v292
        %327 = vst.msk [vmem:[%s294 + $0x171] sm:$0xff] %vm295, %v293
        %s328 = scalar_lea.vmem [#allocation2], 48
        %v329 = vld [vmem:[%s328] sm:$0xff]
        %v330 = vld [vmem:[%s328 + $0x8] sm:$0xff]
        %v331 = vld [vmem:[%s328 + $0x10] sm:$0x3]
        %332 = vst.msk [vmem:[#allocation2] sm:$0xff] %vm295, %v329
        %333 = vst.msk [vmem:[#allocation2 + $0x8] sm:$0xff] %vm295, %v330
        %vm334 = vcmask 25600
        %335 = vst.msk [vmem:[#allocation2 + $0x10] sm:$0x3] %vm334, %v331
        %s336 = scalar_lea.vmem [#allocation2], 360
        %v337 = vld [vmem:[%s336] sm:$0xff]
        %v338 = vld [vmem:[%s336 + $0x8] sm:$0xff]
        %v339 = vld [vmem:[%s336 + $0x10] sm:$0x3]
        %s340 = scalar_lea.vmem [#allocation2], 408
        %341 = vst.msk [vmem:[%s340] sm:$0xff] %vm295, %v337
        %342 = vst.msk [vmem:[%s340 + $0x8] sm:$0xff] %vm295, %v338
        %343 = vst.msk [vmem:[%s340 + $0x10] sm:$0x3] %vm334, %v339
        %v344 = vld [vmem:[#allocation2 + $0x2] sm:$0x1]
        %v345 = vld [vmem:[#allocation2 + $0x1a] sm:$0x1]
        %v346 = vld [vmem:[#allocation2 + $0x32] sm:$0x1]
        %v347 = vld [vmem:[#allocation2 + $0x4a] sm:$0x1]
        %v348 = vld [vmem:[#allocation2 + $0x62] sm:$0x1]
        %v349 = vld [vmem:[#allocation2 + $0x7a] sm:$0x1]
        %v350 = vld [vmem:[#allocation2 + $0x92] sm:$0x1]
        %v351 = vld [vmem:[#allocation2 + $0xaa] sm:$0x1]
        %v352 = vld [vmem:[#allocation2 + $0xc2] sm:$0x1]
        %v353 = vld [vmem:[#allocation2 + $0xda] sm:$0x1]
        %v354 = vld [vmem:[#allocation2 + $0xf2] sm:$0x1]
        %v355 = vld [vmem:[#allocation2 + $0x10a] sm:$0x1]
        %v356 = vld [vmem:[#allocation2 + $0x122] sm:$0x1]
        %v357 = vld [vmem:[#allocation2 + $0x13a] sm:$0x1]
        %v358 = vld [vmem:[#allocation2 + $0x152] sm:$0x1]
        %v359 = vld [vmem:[#allocation2 + $0x16a] sm:$0x1]
        %v360 = vld [vmem:[#allocation2 + $0x182] sm:$0x1]
        %v361 = vld [vmem:[#allocation2 + $0x19a] sm:$0x1]
        %vm362 = vcmask 24576
        %363 = vst.msk [vmem:[#allocation2] sm:$0x1] %vm362, %v344
        %364 = vst.msk [vmem:[#allocation2 + $0x18] sm:$0x1] %vm362, %v345
        %365 = vst.msk [vmem:[#allocation2 + $0x30] sm:$0x1] %vm362, %v346
        %366 = vst.msk [vmem:[#allocation2 + $0x48] sm:$0x1] %vm362, %v347
        %367 = vst.msk [vmem:[#allocation2 + $0x60] sm:$0x1] %vm362, %v348
        %368 = vst.msk [vmem:[#allocation2 + $0x78] sm:$0x1] %vm362, %v349
        %369 = vst.msk [vmem:[#allocation2 + $0x90] sm:$0x1] %vm362, %v350
        %370 = vst.msk [vmem:[#allocation2 + $0xa8] sm:$0x1] %vm362, %v351
        %371 = vst.msk [vmem:[#allocation2 + $0xc0] sm:$0x1] %vm362, %v352
        %372 = vst.msk [vmem:[#allocation2 + $0xd8] sm:$0x1] %vm362, %v353
        %373 = vst.msk [vmem:[#allocation2 + $0xf0] sm:$0x1] %vm362, %v354
        %374 = vst.msk [vmem:[#allocation2 + $0x108] sm:$0x1] %vm362, %v355
        %375 = vst.msk [vmem:[#allocation2 + $0x120] sm:$0x1] %vm362, %v356
        %376 = vst.msk [vmem:[#allocation2 + $0x138] sm:$0x1] %vm362, %v357
        %377 = vst.msk [vmem:[#allocation2 + $0x150] sm:$0x1] %vm362, %v358
        %378 = vst.msk [vmem:[#allocation2 + $0x168] sm:$0x1] %vm362, %v359
        %379 = vst.msk [vmem:[#allocation2 + $0x180] sm:$0x1] %vm362, %v360
        %380 = vst.msk [vmem:[#allocation2 + $0x198] sm:$0x1] %vm362, %v361
        %v381 = vld [vmem:[#allocation2 + $0xf] sm:$0x1]
        %v382 = vld [vmem:[#allocation2 + $0x27] sm:$0x1]
        %v383 = vld [vmem:[#allocation2 + $0x3f] sm:$0x1]
        %v384 = vld [vmem:[#allocation2 + $0x57] sm:$0x1]
        %v385 = vld [vmem:[#allocation2 + $0x6f] sm:$0x1]
        %v386 = vld [vmem:[#allocation2 + $0x87] sm:$0x1]
        %v387 = vld [vmem:[#allocation2 + $0x9f] sm:$0x1]
        %v388 = vld [vmem:[#allocation2 + $0xb7] sm:$0x1]
        %v389 = vld [vmem:[#allocation2 + $0xcf] sm:$0x1]
        %v390 = vld [vmem:[#allocation2 + $0xe7] sm:$0x1]
        %v391 = vld [vmem:[#allocation2 + $0xff] sm:$0x1]
        %v392 = vld [vmem:[#allocation2 + $0x117] sm:$0x1]
        %v393 = vld [vmem:[#allocation2 + $0x12f] sm:$0x1]
        %v394 = vld [vmem:[#allocation2 + $0x147] sm:$0x1]
        %v395 = vld [vmem:[#allocation2 + $0x15f] sm:$0x1]
        %v396 = vld [vmem:[#allocation2 + $0x177] sm:$0x1]
        %v397 = vld [vmem:[#allocation2 + $0x18f] sm:$0x1]
        %v398 = vld [vmem:[#allocation2 + $0x1a7] sm:$0x1]
        %399 = vst.msk [vmem:[#allocation2 + $0x11] sm:$0x1] %vm362, %v381
        %400 = vst.msk [vmem:[#allocation2 + $0x29] sm:$0x1] %vm362, %v382
        %401 = vst.msk [vmem:[#allocation2 + $0x41] sm:$0x1] %vm362, %v383
        %402 = vst.msk [vmem:[#allocation2 + $0x59] sm:$0x1] %vm362, %v384
        %403 = vst.msk [vmem:[#allocation2 + $0x71] sm:$0x1] %vm362, %v385
        %404 = vst.msk [vmem:[#allocation2 + $0x89] sm:$0x1] %vm362, %v386
        %405 = vst.msk [vmem:[#allocation2 + $0xa1] sm:$0x1] %vm362, %v387
        %406 = vst.msk [vmem:[#allocation2 + $0xb9] sm:$0x1] %vm362, %v388
        %407 = vst.msk [vmem:[#allocation2 + $0xd1] sm:$0x1] %vm362, %v389
        %408 = vst.msk [vmem:[#allocation2 + $0xe9] sm:$0x1] %vm362, %v390
        %409 = vst.msk [vmem:[#allocation2 + $0x101] sm:$0x1] %vm362, %v391
        %410 = vst.msk [vmem:[#allocation2 + $0x119] sm:$0x1] %vm362, %v392
        %411 = vst.msk [vmem:[#allocation2 + $0x131] sm:$0x1] %vm362, %v393
        %412 = vst.msk [vmem:[#allocation2 + $0x149] sm:$0x1] %vm362, %v394
        %413 = vst.msk [vmem:[#allocation2 + $0x161] sm:$0x1] %vm362, %v395
        %414 = vst.msk [vmem:[#allocation2 + $0x179] sm:$0x1] %vm362, %v396
        %415 = vst.msk [vmem:[#allocation2 + $0x191] sm:$0x1] %vm362, %v397
        %416 = vst.msk [vmem:[#allocation2 + $0x1a9] sm:$0x1] %vm362, %v398
        %v417 = vld [vmem:[#allocation2] sm:$0xff]
        %v418 = vld [vmem:[#allocation2 + $0x8] sm:$0xff]
        %v419 = vld [vmem:[#allocation2 + $0x18] sm:$0xff]
        %v420 = vld [vmem:[#allocation2 + $0x20] sm:$0xff]
        %v421 = vld [vmem:[#allocation2 + $0x30] sm:$0xff]
        %v422 = vld [vmem:[#allocation2 + $0x38] sm:$0xff]
        %v423 = vld [vmem:[#allocation2 + $0x48] sm:$0xff]
        %v424 = vld [vmem:[#allocation2 + $0x50] sm:$0xff]
        %v425 = vld [vmem:[#allocation2 + $0x60] sm:$0xff]
        %v426 = vld [vmem:[#allocation2 + $0x68] sm:$0xff]
        %v427 = vld [vmem:[#allocation2 + $0x78] sm:$0xff]
        %v428 = vld [vmem:[#allocation2 + $0x80] sm:$0xff]
        %v429 = vld [vmem:[#allocation2 + $0x90] sm:$0xff]
        %v430 = vld [vmem:[#allocation2 + $0x98] sm:$0xff]
        %v431 = vld [vmem:[#allocation2 + $0xa8] sm:$0xff]
        %v432 = vld [vmem:[#allocation2 + $0xb0] sm:$0xff]
        %v433 = vld [vmem:[#allocation2 + $0xc0] sm:$0xff]
        %v434 = vld [vmem:[#allocation2 + $0xc8] sm:$0xff]
        %v435 = vld [vmem:[#allocation2 + $0xd8] sm:$0xff]
        %v436 = vld [vmem:[#allocation2 + $0xe0] sm:$0xff]
        %v437 = vld [vmem:[#allocation2 + $0xf0] sm:$0xff]
        %v438 = vld [vmem:[#allocation2 + $0xf8] sm:$0xff]
        %v439 = vld [vmem:[#allocation2 + $0x108] sm:$0xff]
        %v440 = vld [vmem:[#allocation2 + $0x110] sm:$0xff]
        %v441 = vld [vmem:[#allocation2 + $0x120] sm:$0xff]
        %v442 = vld [vmem:[#allocation2 + $0x128] sm:$0xff]
        %v443 = vld [vmem:[#allocation2 + $0x138] sm:$0xff]
        %v444 = vld [vmem:[#allocation2 + $0x140] sm:$0xff]
        %v445 = vld [vmem:[#allocation2 + $0x150] sm:$0xff]
        %v446 = vld [vmem:[#allocation2 + $0x158] sm:$0xff]
        %v447 = vld [vmem:[#allocation2 + $0x168] sm:$0xff]
        %v448 = vld [vmem:[#allocation2 + $0x170] sm:$0xff]
        %v449 = vld [vmem:[#allocation2 + $0x1] sm:$0xff]
        %v450 = vld [vmem:[#allocation2 + $0x9] sm:$0xff]
        %v451 = vld [vmem:[#allocation2 + $0x19] sm:$0xff]
        %v452 = vld [vmem:[#allocation2 + $0x21] sm:$0xff]
        %v453 = vld [vmem:[#allocation2 + $0x31] sm:$0xff]
        %v454 = vld [vmem:[#allocation2 + $0x39] sm:$0xff]
        %v455 = vld [vmem:[#allocation2 + $0x49] sm:$0xff]
        %v456 = vld [vmem:[#allocation2 + $0x51] sm:$0xff]
        %v457 = vld [vmem:[#allocation2 + $0x61] sm:$0xff]
        %v458 = vld [vmem:[#allocation2 + $0x69] sm:$0xff]
        %v459 = vld [vmem:[#allocation2 + $0x79] sm:$0xff]
        %v460 = vld [vmem:[#allocation2 + $0x81] sm:$0xff]
        %v461 = vld [vmem:[#allocation2 + $0x91] sm:$0xff]
        %v462 = vld [vmem:[#allocation2 + $0x99] sm:$0xff]
        %v463 = vld [vmem:[#allocation2 + $0xa9] sm:$0xff]
        %v464 = vld [vmem:[#allocation2 + $0xb1] sm:$0xff]
        %v465 = vld [vmem:[#allocation2 + $0xc1] sm:$0xff]
        %v466 = vld [vmem:[#allocation2 + $0xc9] sm:$0xff]
        %v467 = vld [vmem:[#allocation2 + $0xd9] sm:$0xff]
        %v468 = vld [vmem:[#allocation2 + $0xe1] sm:$0xff]
        %v469 = vld [vmem:[#allocation2 + $0xf1] sm:$0xff]
        %v470 = vld [vmem:[#allocation2 + $0xf9] sm:$0xff]
        %v471 = vld [vmem:[#allocation2 + $0x109] sm:$0xff]
        %v472 = vld [vmem:[#allocation2 + $0x111] sm:$0xff]
        %v473 = vld [vmem:[#allocation2 + $0x121] sm:$0xff]
        %v474 = vld [vmem:[#allocation2 + $0x129] sm:$0xff]
        %v475 = vld [vmem:[#allocation2 + $0x139] sm:$0xff]
        %v476 = vld [vmem:[#allocation2 + $0x141] sm:$0xff]
        %v477 = vld [vmem:[#allocation2 + $0x151] sm:$0xff]
        %v478 = vld [vmem:[#allocation2 + $0x159] sm:$0xff]
        %v479 = vld [vmem:[#allocation2 + $0x169] sm:$0xff]
        %v480 = vld [vmem:[#allocation2 + $0x171] sm:$0xff]
        %v481 = vld [vmem:[#allocation2 + $0x2] sm:$0xff]
        %v482 = vld [vmem:[#allocation2 + $0xa] sm:$0xff]
        %v483 = vld [vmem:[#allocation2 + $0x1a] sm:$0xff]
        %v484 = vld [vmem:[#allocation2 + $0x22] sm:$0xff]
        %v485 = vld [vmem:[#allocation2 + $0x32] sm:$0xff]
        %v486 = vld [vmem:[#allocation2 + $0x3a] sm:$0xff]
        %v487 = vld [vmem:[#allocation2 + $0x4a] sm:$0xff]
        %v488 = vld [vmem:[#allocation2 + $0x52] sm:$0xff]
        %v489 = vld [vmem:[#allocation2 + $0x62] sm:$0xff]
        %v490 = vld [vmem:[#allocation2 + $0x6a] sm:$0xff]
        %v491 = vld [vmem:[#allocation2 + $0x7a] sm:$0xff]
        %v492 = vld [vmem:[#allocation2 + $0x82] sm:$0xff]
        %v493 = vld [vmem:[#allocation2 + $0x92] sm:$0xff]
        %v494 = vld [vmem:[#allocation2 + $0x9a] sm:$0xff]
        %v495 = vld [vmem:[#allocation2 + $0xaa] sm:$0xff]
        %v496 = vld [vmem:[#allocation2 + $0xb2] sm:$0xff]
        %v497 = vld [vmem:[#allocation2 + $0xc2] sm:$0xff]
        %v498 = vld [vmem:[#allocation2 + $0xca] sm:$0xff]
        %v499 = vld [vmem:[#allocation2 + $0xda] sm:$0xff]
        %v500 = vld [vmem:[#allocation2 + $0xe2] sm:$0xff]
        %v501 = vld [vmem:[#allocation2 + $0xf2] sm:$0xff]
        %v502 = vld [vmem:[#allocation2 + $0xfa] sm:$0xff]
        %v503 = vld [vmem:[#allocation2 + $0x10a] sm:$0xff]
        %v504 = vld [vmem:[#allocation2 + $0x112] sm:$0xff]
        %v505 = vld [vmem:[#allocation2 + $0x122] sm:$0xff]
        %v506 = vld [vmem:[#allocation2 + $0x12a] sm:$0xff]
        %v507 = vld [vmem:[#allocation2 + $0x13a] sm:$0xff]
        %v508 = vld [vmem:[#allocation2 + $0x142] sm:$0xff]
        %v509 = vld [vmem:[#allocation2 + $0x152] sm:$0xff]
        %v510 = vld [vmem:[#allocation2 + $0x15a] sm:$0xff]
        %v511 = vld [vmem:[#allocation2 + $0x16a] sm:$0xff]
        %v512 = vld [vmem:[#allocation2 + $0x172] sm:$0xff]
        %v513 = vld [vmem:[%s294] sm:$0xff]
        %v514 = vld [vmem:[%s294 + $0x8] sm:$0xff]
        %v515 = vld [vmem:[%s294 + $0x18] sm:$0xff]
        %v516 = vld [vmem:[%s294 + $0x20] sm:$0xff]
        %v517 = vld [vmem:[%s294 + $0x30] sm:$0xff]
        %v518 = vld [vmem:[%s294 + $0x38] sm:$0xff]
        %v519 = vld [vmem:[%s294 + $0x48] sm:$0xff]
        %v520 = vld [vmem:[%s294 + $0x50] sm:$0xff]
        %v521 = vld [vmem:[%s294 + $0x60] sm:$0xff]
        %v522 = vld [vmem:[%s294 + $0x68] sm:$0xff]
        %v523 = vld [vmem:[%s294 + $0x78] sm:$0xff]
        %v524 = vld [vmem:[%s294 + $0x80] sm:$0xff]
        %v525 = vld [vmem:[%s294 + $0x90] sm:$0xff]
        %v526 = vld [vmem:[%s294 + $0x98] sm:$0xff]
        %v527 = vld [vmem:[%s294 + $0xa8] sm:$0xff]
        %v528 = vld [vmem:[%s294 + $0xb0] sm:$0xff]
        %v529 = vld [vmem:[%s294 + $0xc0] sm:$0xff]
        %v530 = vld [vmem:[%s294 + $0xc8] sm:$0xff]
        %v531 = vld [vmem:[%s294 + $0xd8] sm:$0xff]
        %v532 = vld [vmem:[%s294 + $0xe0] sm:$0xff]
        %v533 = vld [vmem:[%s294 + $0xf0] sm:$0xff]
        %v534 = vld [vmem:[%s294 + $0xf8] sm:$0xff]
        %v535 = vld [vmem:[%s294 + $0x108] sm:$0xff]
        %v536 = vld [vmem:[%s294 + $0x110] sm:$0xff]
        %v537 = vld [vmem:[%s294 + $0x120] sm:$0xff]
        %v538 = vld [vmem:[%s294 + $0x128] sm:$0xff]
        %v539 = vld [vmem:[%s294 + $0x138] sm:$0xff]
        %v540 = vld [vmem:[%s294 + $0x140] sm:$0xff]
        %v541 = vld [vmem:[%s294 + $0x150] sm:$0xff]
        %v542 = vld [vmem:[%s294 + $0x158] sm:$0xff]
        %v543 = vld [vmem:[%s294 + $0x168] sm:$0xff]
        %v544 = vld [vmem:[%s294 + $0x170] sm:$0xff]
        %v545 = vld [vmem:[%s294 + $0x1] sm:$0xff]
        %v546 = vld [vmem:[%s294 + $0x9] sm:$0xff]
        %v547 = vld [vmem:[%s294 + $0x19] sm:$0xff]
        %v548 = vld [vmem:[%s294 + $0x21] sm:$0xff]
        %v549 = vld [vmem:[%s294 + $0x31] sm:$0xff]
        %v550 = vld [vmem:[%s294 + $0x39] sm:$0xff]
        %v551 = vld [vmem:[%s294 + $0x49] sm:$0xff]
        %v552 = vld [vmem:[%s294 + $0x51] sm:$0xff]
        %v553 = vld [vmem:[%s294 + $0x61] sm:$0xff]
        %v554 = vld [vmem:[%s294 + $0x69] sm:$0xff]
        %v555 = vld [vmem:[%s294 + $0x79] sm:$0xff]
        %v556 = vld [vmem:[%s294 + $0x81] sm:$0xff]
        %v557 = vld [vmem:[%s294 + $0x91] sm:$0xff]
        %v558 = vld [vmem:[%s294 + $0x99] sm:$0xff]
        %v559 = vld [vmem:[%s294 + $0xa9] sm:$0xff]
        %v560 = vld [vmem:[%s294 + $0xb1] sm:$0xff]
        %v561 = vld [vmem:[%s294 + $0xc1] sm:$0xff]
        %v562 = vld [vmem:[%s294 + $0xc9] sm:$0xff]
        %v563 = vld [vmem:[%s294 + $0xd9] sm:$0xff]
        %v564 = vld [vmem:[%s294 + $0xe1] sm:$0xff]
        %v565 = vld [vmem:[%s294 + $0xf1] sm:$0xff]
        %v566 = vld [vmem:[%s294 + $0xf9] sm:$0xff]
        %v567 = vld [vmem:[%s294 + $0x109] sm:$0xff]
        %v568 = vld [vmem:[%s294 + $0x111] sm:$0xff]
        %v569 = vld [vmem:[%s294 + $0x121] sm:$0xff]
        %v570 = vld [vmem:[%s294 + $0x129] sm:$0xff]
        %v571 = vld [vmem:[%s294 + $0x139] sm:$0xff]
        %v572 = vld [vmem:[%s294 + $0x141] sm:$0xff]
        %v573 = vld [vmem:[%s294 + $0x151] sm:$0xff]
        %v574 = vld [vmem:[%s294 + $0x159] sm:$0xff]
        %v575 = vld [vmem:[%s294 + $0x169] sm:$0xff]
        %v576 = vld [vmem:[%s294 + $0x171] sm:$0xff]
        %v577 = vld [vmem:[%s294 + $0x2] sm:$0xff]
        %v578 = vld [vmem:[%s294 + $0xa] sm:$0xff]
        %v579 = vld [vmem:[%s294 + $0x1a] sm:$0xff]
        %v580 = vld [vmem:[%s294 + $0x22] sm:$0xff]
        %v581 = vld [vmem:[%s294 + $0x32] sm:$0xff]
        %v582 = vld [vmem:[%s294 + $0x3a] sm:$0xff]
        %v583 = vld [vmem:[%s294 + $0x4a] sm:$0xff]
        %v584 = vld [vmem:[%s294 + $0x52] sm:$0xff]
        %v585 = vld [vmem:[%s294 + $0x62] sm:$0xff]
        %v586 = vld [vmem:[%s294 + $0x6a] sm:$0xff]
        %v587 = vld [vmem:[%s294 + $0x7a] sm:$0xff]
        %v588 = vld [vmem:[%s294 + $0x82] sm:$0xff]
        %v589 = vld [vmem:[%s294 + $0x92] sm:$0xff]
        %v590 = vld [vmem:[%s294 + $0x9a] sm:$0xff]
        %v591 = vld [vmem:[%s294 + $0xaa] sm:$0xff]
        %v592 = vld [vmem:[%s294 + $0xb2] sm:$0xff]
        %v593 = vld [vmem:[%s294 + $0xc2] sm:$0xff]
        %v594 = vld [vmem:[%s294 + $0xca] sm:$0xff]
        %v595 = vld [vmem:[%s294 + $0xda] sm:$0xff]
        %v596 = vld [vmem:[%s294 + $0xe2] sm:$0xff]
        %v597 = vld [vmem:[%s294 + $0xf2] sm:$0xff]
        %v598 = vld [vmem:[%s294 + $0xfa] sm:$0xff]
        %v599 = vld [vmem:[%s294 + $0x10a] sm:$0xff]
        %v600 = vld [vmem:[%s294 + $0x112] sm:$0xff]
        %v601 = vld [vmem:[%s294 + $0x122] sm:$0xff]
        %v602 = vld [vmem:[%s294 + $0x12a] sm:$0xff]
        %v603 = vld [vmem:[%s294 + $0x13a] sm:$0xff]
        %v604 = vld [vmem:[%s294 + $0x142] sm:$0xff]
        %v605 = vld [vmem:[%s294 + $0x152] sm:$0xff]
        %v606 = vld [vmem:[%s294 + $0x15a] sm:$0xff]
        %v607 = vld [vmem:[%s294 + $0x16a] sm:$0xff]
        %v608 = vld [vmem:[%s294 + $0x172] sm:$0xff]
        %v609 = vld [vmem:[%s328] sm:$0xff]
        %v610 = vld [vmem:[%s328 + $0x8] sm:$0xff]
        %v611 = vld [vmem:[%s328 + $0x18] sm:$0xff]
        %v612 = vld [vmem:[%s328 + $0x20] sm:$0xff]
        %v613 = vld [vmem:[%s328 + $0x30] sm:$0xff]
        %v614 = vld [vmem:[%s328 + $0x38] sm:$0xff]
        %v615 = vld [vmem:[%s328 + $0x48] sm:$0xff]
        %v616 = vld [vmem:[%s328 + $0x50] sm:$0xff]
        %v617 = vld [vmem:[%s328 + $0x60] sm:$0xff]
        %v618 = vld [vmem:[%s328 + $0x68] sm:$0xff]
        %v619 = vld [vmem:[%s328 + $0x78] sm:$0xff]
        %v620 = vld [vmem:[%s328 + $0x80] sm:$0xff]
        %v621 = vld [vmem:[%s328 + $0x90] sm:$0xff]
        %v622 = vld [vmem:[%s328 + $0x98] sm:$0xff]
        %v623 = vld [vmem:[%s328 + $0xa8] sm:$0xff]
        %v624 = vld [vmem:[%s328 + $0xb0] sm:$0xff]
        %v625 = vld [vmem:[%s328 + $0xc0] sm:$0xff]
        %v626 = vld [vmem:[%s328 + $0xc8] sm:$0xff]
        %v627 = vld [vmem:[%s328 + $0xd8] sm:$0xff]
        %v628 = vld [vmem:[%s328 + $0xe0] sm:$0xff]
        %v629 = vld [vmem:[%s328 + $0xf0] sm:$0xff]
        %v630 = vld [vmem:[%s328 + $0xf8] sm:$0xff]
        %v631 = vld [vmem:[%s328 + $0x108] sm:$0xff]
        %v632 = vld [vmem:[%s328 + $0x110] sm:$0xff]
        %v633 = vld [vmem:[%s328 + $0x120] sm:$0xff]
        %v634 = vld [vmem:[%s328 + $0x128] sm:$0xff]
        %v635 = vld [vmem:[%s328 + $0x138] sm:$0xff]
        %v636 = vld [vmem:[%s328 + $0x140] sm:$0xff]
        %v637 = vld [vmem:[%s328 + $0x150] sm:$0xff]
        %v638 = vld [vmem:[%s328 + $0x158] sm:$0xff]
        %v639 = vld [vmem:[%s328 + $0x168] sm:$0xff]
        %v640 = vld [vmem:[%s328 + $0x170] sm:$0xff]
        %v641 = vld [vmem:[%s328 + $0x1] sm:$0xff]
        %v642 = vld [vmem:[%s328 + $0x9] sm:$0xff]
        %v643 = vld [vmem:[%s328 + $0x19] sm:$0xff]
        %v644 = vld [vmem:[%s328 + $0x21] sm:$0xff]
        %v645 = vld [vmem:[%s328 + $0x31] sm:$0xff]
        %v646 = vld [vmem:[%s328 + $0x39] sm:$0xff]
        %v647 = vld [vmem:[%s328 + $0x49] sm:$0xff]
        %v648 = vld [vmem:[%s328 + $0x51] sm:$0xff]
        %v649 = vld [vmem:[%s328 + $0x61] sm:$0xff]
        %v650 = vld [vmem:[%s328 + $0x69] sm:$0xff]
        %v651 = vld [vmem:[%s328 + $0x79] sm:$0xff]
        %v652 = vld [vmem:[%s328 + $0x81] sm:$0xff]
        %v653 = vld [vmem:[%s328 + $0x91] sm:$0xff]
        %v654 = vld [vmem:[%s328 + $0x99] sm:$0xff]
        %v655 = vld [vmem:[%s328 + $0xa9] sm:$0xff]
        %v656 = vld [vmem:[%s328 + $0xb1] sm:$0xff]
        %v657 = vld [vmem:[%s328 + $0xc1] sm:$0xff]
        %v658 = vld [vmem:[%s328 + $0xc9] sm:$0xff]
        %v659 = vld [vmem:[%s328 + $0xd9] sm:$0xff]
        %v660 = vld [vmem:[%s328 + $0xe1] sm:$0xff]
        %v661 = vld [vmem:[%s328 + $0xf1] sm:$0xff]
        %v662 = vld [vmem:[%s328 + $0xf9] sm:$0xff]
        %v663 = vld [vmem:[%s328 + $0x109] sm:$0xff]
        %v664 = vld [vmem:[%s328 + $0x111] sm:$0xff]
        %v665 = vld [vmem:[%s328 + $0x121] sm:$0xff]
        %v666 = vld [vmem:[%s328 + $0x129] sm:$0xff]
        %v667 = vld [vmem:[%s328 + $0x139] sm:$0xff]
        %v668 = vld [vmem:[%s328 + $0x141] sm:$0xff]
        %v669 = vld [vmem:[%s328 + $0x151] sm:$0xff]
        %v670 = vld [vmem:[%s328 + $0x159] sm:$0xff]
        %v671 = vld [vmem:[%s328 + $0x169] sm:$0xff]
        %v672 = vld [vmem:[%s328 + $0x171] sm:$0xff]
        %v673 = vld [vmem:[%s328 + $0x2] sm:$0xff]
        %v674 = vld [vmem:[%s328 + $0xa] sm:$0xff]
        %v675 = vld [vmem:[%s328 + $0x1a] sm:$0xff]
        %v676 = vld [vmem:[%s328 + $0x22] sm:$0xff]
        %v677 = vld [vmem:[%s328 + $0x32] sm:$0xff]
        %v678 = vld [vmem:[%s328 + $0x3a] sm:$0xff]
        %v679 = vld [vmem:[%s328 + $0x4a] sm:$0xff]
        %v680 = vld [vmem:[%s328 + $0x52] sm:$0xff]
        %v681 = vld [vmem:[%s328 + $0x62] sm:$0xff]
        %v682 = vld [vmem:[%s328 + $0x6a] sm:$0xff]
        %v683 = vld [vmem:[%s328 + $0x7a] sm:$0xff]
        %v684 = vld [vmem:[%s328 + $0x82] sm:$0xff]
        %v685 = vld [vmem:[%s328 + $0x92] sm:$0xff]
        %v686 = vld [vmem:[%s328 + $0x9a] sm:$0xff]
        %v687 = vld [vmem:[%s328 + $0xaa] sm:$0xff]
        %v688 = vld [vmem:[%s328 + $0xb2] sm:$0xff]
        %v689 = vld [vmem:[%s328 + $0xc2] sm:$0xff]
        %v690 = vld [vmem:[%s328 + $0xca] sm:$0xff]
        %v691 = vld [vmem:[%s328 + $0xda] sm:$0xff]
        %v692 = vld [vmem:[%s328 + $0xe2] sm:$0xff]
        %v693 = vld [vmem:[%s328 + $0xf2] sm:$0xff]
        %v694 = vld [vmem:[%s328 + $0xfa] sm:$0xff]
        %v695 = vld [vmem:[%s328 + $0x10a] sm:$0xff]
        %v696 = vld [vmem:[%s328 + $0x112] sm:$0xff]
        %v697 = vld [vmem:[%s328 + $0x122] sm:$0xff]
        %v698 = vld [vmem:[%s328 + $0x12a] sm:$0xff]
        %v699 = vld [vmem:[%s328 + $0x13a] sm:$0xff]
        %v700 = vld [vmem:[%s328 + $0x142] sm:$0xff]
        %v701 = vld [vmem:[%s328 + $0x152] sm:$0xff]
        %v702 = vld [vmem:[%s328 + $0x15a] sm:$0xff]
        %v703 = vld [vmem:[%s328 + $0x16a] sm:$0xff]
        %v704 = vld [vmem:[%s328 + $0x172] sm:$0xff]
        %737 = vrot.lane.b32.xlu0 %v449, 4
        %v738 = vpop.permute.xlu0 %737
        %739 = vrot.lane.b32.xlu0 %v450, 4
        %v740 = vpop.permute.xlu0 %739
        %741 = vrot.lane.b32.xlu0 %v451, 4
        %v742 = vpop.permute.xlu0 %741
        %743 = vrot.lane.b32.xlu0 %v452, 4
        %v744 = vpop.permute.xlu0 %743
        %745 = vrot.lane.b32.xlu0 %v453, 4
        %v746 = vpop.permute.xlu0 %745
        %747 = vrot.lane.b32.xlu0 %v454, 4
        %v748 = vpop.permute.xlu0 %747
        %749 = vrot.lane.b32.xlu0 %v455, 4
        %v750 = vpop.permute.xlu0 %749
        %751 = vrot.lane.b32.xlu0 %v456, 4
        %v752 = vpop.permute.xlu0 %751
        %753 = vrot.lane.b32.xlu0 %v457, 4
        %v754 = vpop.permute.xlu0 %753
        %755 = vrot.lane.b32.xlu0 %v458, 4
        %v756 = vpop.permute.xlu0 %755
        %757 = vrot.lane.b32.xlu0 %v459, 4
        %v758 = vpop.permute.xlu0 %757
        %759 = vrot.lane.b32.xlu0 %v460, 4
        %v760 = vpop.permute.xlu0 %759
        %761 = vrot.lane.b32.xlu0 %v461, 4
        %v762 = vpop.permute.xlu0 %761
        %763 = vrot.lane.b32.xlu0 %v462, 4
        %v764 = vpop.permute.xlu0 %763
        %765 = vrot.lane.b32.xlu0 %v463, 4
        %v766 = vpop.permute.xlu0 %765
        %767 = vrot.lane.b32.xlu0 %v464, 4
        %v768 = vpop.permute.xlu0 %767
        %769 = vrot.lane.b32.xlu0 %v465, 4
        %v770 = vpop.permute.xlu0 %769
        %771 = vrot.lane.b32.xlu0 %v466, 4
        %v772 = vpop.permute.xlu0 %771
        %773 = vrot.lane.b32.xlu0 %v467, 4
        %v774 = vpop.permute.xlu0 %773
        %775 = vrot.lane.b32.xlu0 %v468, 4
        %v776 = vpop.permute.xlu0 %775
        %777 = vrot.lane.b32.xlu0 %v469, 4
        %v778 = vpop.permute.xlu0 %777
        %779 = vrot.lane.b32.xlu0 %v470, 4
        %v780 = vpop.permute.xlu0 %779
        %781 = vrot.lane.b32.xlu0 %v471, 4
        %v782 = vpop.permute.xlu0 %781
        %783 = vrot.lane.b32.xlu0 %v472, 4
        %v784 = vpop.permute.xlu0 %783
        %785 = vrot.lane.b32.xlu0 %v473, 4
        %v786 = vpop.permute.xlu0 %785
        %787 = vrot.lane.b32.xlu0 %v474, 4
        %v788 = vpop.permute.xlu0 %787
        %789 = vrot.lane.b32.xlu0 %v475, 4
        %v790 = vpop.permute.xlu0 %789
        %791 = vrot.lane.b32.xlu0 %v476, 4
        %v792 = vpop.permute.xlu0 %791
        %793 = vrot.lane.b32.xlu0 %v477, 4
        %v794 = vpop.permute.xlu0 %793
        %795 = vrot.lane.b32.xlu0 %v478, 4
        %v796 = vpop.permute.xlu0 %795
        %797 = vrot.lane.b32.xlu0 %v479, 4
        %v798 = vpop.permute.xlu0 %797
        %799 = vrot.lane.b32.xlu0 %v480, 4
        %v800 = vpop.permute.xlu0 %799
        %865 = vrot.lane.b32.xlu0 %v481, 8
        %v866 = vpop.permute.xlu0 %865
        %867 = vrot.lane.b32.xlu0 %v482, 8
        %v868 = vpop.permute.xlu0 %867
        %869 = vrot.lane.b32.xlu0 %v483, 8
        %v870 = vpop.permute.xlu0 %869
        %871 = vrot.lane.b32.xlu0 %v484, 8
        %v872 = vpop.permute.xlu0 %871
        %873 = vrot.lane.b32.xlu0 %v485, 8
        %v874 = vpop.permute.xlu0 %873
        %875 = vrot.lane.b32.xlu0 %v486, 8
        %v876 = vpop.permute.xlu0 %875
        %877 = vrot.lane.b32.xlu0 %v487, 8
        %v878 = vpop.permute.xlu0 %877
        %879 = vrot.lane.b32.xlu0 %v488, 8
        %v880 = vpop.permute.xlu0 %879
        %881 = vrot.lane.b32.xlu0 %v489, 8
        %v882 = vpop.permute.xlu0 %881
        %883 = vrot.lane.b32.xlu0 %v490, 8
        %v884 = vpop.permute.xlu0 %883
        %885 = vrot.lane.b32.xlu0 %v491, 8
        %v886 = vpop.permute.xlu0 %885
        %887 = vrot.lane.b32.xlu0 %v492, 8
        %v888 = vpop.permute.xlu0 %887
        %889 = vrot.lane.b32.xlu0 %v493, 8
        %v890 = vpop.permute.xlu0 %889
        %891 = vrot.lane.b32.xlu0 %v494, 8
        %v892 = vpop.permute.xlu0 %891
        %893 = vrot.lane.b32.xlu0 %v495, 8
        %v894 = vpop.permute.xlu0 %893
        %895 = vrot.lane.b32.xlu0 %v496, 8
        %v896 = vpop.permute.xlu0 %895
        %897 = vrot.lane.b32.xlu0 %v497, 8
        %v898 = vpop.permute.xlu0 %897
        %899 = vrot.lane.b32.xlu0 %v498, 8
        %v900 = vpop.permute.xlu0 %899
        %901 = vrot.lane.b32.xlu0 %v499, 8
        %v902 = vpop.permute.xlu0 %901
        %903 = vrot.lane.b32.xlu0 %v500, 8
        %v904 = vpop.permute.xlu0 %903
        %905 = vrot.lane.b32.xlu0 %v501, 8
        %v906 = vpop.permute.xlu0 %905
        %907 = vrot.lane.b32.xlu0 %v502, 8
        %v908 = vpop.permute.xlu0 %907
        %909 = vrot.lane.b32.xlu0 %v503, 8
        %v910 = vpop.permute.xlu0 %909
        %911 = vrot.lane.b32.xlu0 %v504, 8
        %v912 = vpop.permute.xlu0 %911
        %913 = vrot.lane.b32.xlu0 %v505, 8
        %v914 = vpop.permute.xlu0 %913
        %915 = vrot.lane.b32.xlu0 %v506, 8
        %v916 = vpop.permute.xlu0 %915
        %917 = vrot.lane.b32.xlu0 %v507, 8
        %v918 = vpop.permute.xlu0 %917
        %919 = vrot.lane.b32.xlu0 %v508, 8
        %v920 = vpop.permute.xlu0 %919
        %921 = vrot.lane.b32.xlu0 %v509, 8
        %v922 = vpop.permute.xlu0 %921
        %923 = vrot.lane.b32.xlu0 %v510, 8
        %v924 = vpop.permute.xlu0 %923
        %925 = vrot.lane.b32.xlu0 %v511, 8
        %v926 = vpop.permute.xlu0 %925
        %927 = vrot.lane.b32.xlu0 %v512, 8
        %v928 = vpop.permute.xlu0 %927
        %993 = vrot.lane.b32.xlu0 %v513, 12
        %v994 = vpop.permute.xlu0 %993
        %995 = vrot.lane.b32.xlu0 %v514, 12
        %v996 = vpop.permute.xlu0 %995
        %997 = vrot.lane.b32.xlu0 %v515, 12
        %v998 = vpop.permute.xlu0 %997
        %999 = vrot.lane.b32.xlu0 %v516, 12
        %v1000 = vpop.permute.xlu0 %999
        %1001 = vrot.lane.b32.xlu0 %v517, 12
        %v1002 = vpop.permute.xlu0 %1001
        %1003 = vrot.lane.b32.xlu0 %v518, 12
        %v1004 = vpop.permute.xlu0 %1003
        %1005 = vrot.lane.b32.xlu0 %v519, 12
        %v1006 = vpop.permute.xlu0 %1005
        %1007 = vrot.lane.b32.xlu0 %v520, 12
        %v1008 = vpop.permute.xlu0 %1007
        %1009 = vrot.lane.b32.xlu0 %v521, 12
        %v1010 = vpop.permute.xlu0 %1009
        %1011 = vrot.lane.b32.xlu0 %v522, 12
        %v1012 = vpop.permute.xlu0 %1011
        %1013 = vrot.lane.b32.xlu0 %v523, 12
        %v1014 = vpop.permute.xlu0 %1013
        %1015 = vrot.lane.b32.xlu0 %v524, 12
        %v1016 = vpop.permute.xlu0 %1015
        %1017 = vrot.lane.b32.xlu0 %v525, 12
        %v1018 = vpop.permute.xlu0 %1017
        %1019 = vrot.lane.b32.xlu0 %v526, 12
        %v1020 = vpop.permute.xlu0 %1019
        %1021 = vrot.lane.b32.xlu0 %v527, 12
        %v1022 = vpop.permute.xlu0 %1021
        %1023 = vrot.lane.b32.xlu0 %v528, 12
        %v1024 = vpop.permute.xlu0 %1023
        %1025 = vrot.lane.b32.xlu0 %v529, 12
        %v1026 = vpop.permute.xlu0 %1025
        %1027 = vrot.lane.b32.xlu0 %v530, 12
        %v1028 = vpop.permute.xlu0 %1027
        %1029 = vrot.lane.b32.xlu0 %v531, 12
        %v1030 = vpop.permute.xlu0 %1029
        %1031 = vrot.lane.b32.xlu0 %v532, 12
        %v1032 = vpop.permute.xlu0 %1031
        %1033 = vrot.lane.b32.xlu0 %v533, 12
        %v1034 = vpop.permute.xlu0 %1033
        %1035 = vrot.lane.b32.xlu0 %v534, 12
        %v1036 = vpop.permute.xlu0 %1035
        %1037 = vrot.lane.b32.xlu0 %v535, 12
        %v1038 = vpop.permute.xlu0 %1037
        %1039 = vrot.lane.b32.xlu0 %v536, 12
        %v1040 = vpop.permute.xlu0 %1039
        %1041 = vrot.lane.b32.xlu0 %v537, 12
        %v1042 = vpop.permute.xlu0 %1041
        %1043 = vrot.lane.b32.xlu0 %v538, 12
        %v1044 = vpop.permute.xlu0 %1043
        %1045 = vrot.lane.b32.xlu0 %v539, 12
        %v1046 = vpop.permute.xlu0 %1045
        %1047 = vrot.lane.b32.xlu0 %v540, 12
        %v1048 = vpop.permute.xlu0 %1047
        %1049 = vrot.lane.b32.xlu0 %v541, 12
        %v1050 = vpop.permute.xlu0 %1049
        %1051 = vrot.lane.b32.xlu0 %v542, 12
        %v1052 = vpop.permute.xlu0 %1051
        %1053 = vrot.lane.b32.xlu0 %v543, 12
        %v1054 = vpop.permute.xlu0 %1053
        %1055 = vrot.lane.b32.xlu0 %v544, 12
        %v1056 = vpop.permute.xlu0 %1055
        %1121 = vrot.lane.b32.xlu0 %v545, 16
        %v1122 = vpop.permute.xlu0 %1121
        %1123 = vrot.lane.b32.xlu0 %v546, 16
        %v1124 = vpop.permute.xlu0 %1123
        %1125 = vrot.lane.b32.xlu0 %v547, 16
        %v1126 = vpop.permute.xlu0 %1125
        %1127 = vrot.lane.b32.xlu0 %v548, 16
        %v1128 = vpop.permute.xlu0 %1127
        %1129 = vrot.lane.b32.xlu0 %v549, 16
        %v1130 = vpop.permute.xlu0 %1129
        %1131 = vrot.lane.b32.xlu0 %v550, 16
        %v1132 = vpop.permute.xlu0 %1131
        %1133 = vrot.lane.b32.xlu0 %v551, 16
        %v1134 = vpop.permute.xlu0 %1133
        %1135 = vrot.lane.b32.xlu0 %v552, 16
        %v1136 = vpop.permute.xlu0 %1135
        %1137 = vrot.lane.b32.xlu0 %v553, 16
        %v1138 = vpop.permute.xlu0 %1137
        %1139 = vrot.lane.b32.xlu0 %v554, 16
        %v1140 = vpop.permute.xlu0 %1139
        %1141 = vrot.lane.b32.xlu0 %v555, 16
        %v1142 = vpop.permute.xlu0 %1141
        %1143 = vrot.lane.b32.xlu0 %v556, 16
        %v1144 = vpop.permute.xlu0 %1143
        %1145 = vrot.lane.b32.xlu0 %v557, 16
        %v1146 = vpop.permute.xlu0 %1145
        %1147 = vrot.lane.b32.xlu0 %v558, 16
        %v1148 = vpop.permute.xlu0 %1147
        %1149 = vrot.lane.b32.xlu0 %v559, 16
        %v1150 = vpop.permute.xlu0 %1149
        %1151 = vrot.lane.b32.xlu0 %v560, 16
        %v1152 = vpop.permute.xlu0 %1151
        %1153 = vrot.lane.b32.xlu0 %v561, 16
        %v1154 = vpop.permute.xlu0 %1153
        %1155 = vrot.lane.b32.xlu0 %v562, 16
        %v1156 = vpop.permute.xlu0 %1155
        %1157 = vrot.lane.b32.xlu0 %v563, 16
        %v1158 = vpop.permute.xlu0 %1157
        %1159 = vrot.lane.b32.xlu0 %v564, 16
        %v1160 = vpop.permute.xlu0 %1159
        %1161 = vrot.lane.b32.xlu0 %v565, 16
        %v1162 = vpop.permute.xlu0 %1161
        %1163 = vrot.lane.b32.xlu0 %v566, 16
        %v1164 = vpop.permute.xlu0 %1163
        %1165 = vrot.lane.b32.xlu0 %v567, 16
        %v1166 = vpop.permute.xlu0 %1165
        %1167 = vrot.lane.b32.xlu0 %v568, 16
        %v1168 = vpop.permute.xlu0 %1167
        %1169 = vrot.lane.b32.xlu0 %v569, 16
        %v1170 = vpop.permute.xlu0 %1169
        %1171 = vrot.lane.b32.xlu0 %v570, 16
        %v1172 = vpop.permute.xlu0 %1171
        %1173 = vrot.lane.b32.xlu0 %v571, 16
        %v1174 = vpop.permute.xlu0 %1173
        %1175 = vrot.lane.b32.xlu0 %v572, 16
        %v1176 = vpop.permute.xlu0 %1175
        %1177 = vrot.lane.b32.xlu0 %v573, 16
        %v1178 = vpop.permute.xlu0 %1177
        %1179 = vrot.lane.b32.xlu0 %v574, 16
        %v1180 = vpop.permute.xlu0 %1179
        %1181 = vrot.lane.b32.xlu0 %v575, 16
        %v1182 = vpop.permute.xlu0 %1181
        %1183 = vrot.lane.b32.xlu0 %v576, 16
        %v1184 = vpop.permute.xlu0 %1183
        %1249 = vrot.lane.b32.xlu0 %v577, 20
        %v1250 = vpop.permute.xlu0 %1249
        %1251 = vrot.lane.b32.xlu0 %v578, 20
        %v1252 = vpop.permute.xlu0 %1251
        %1253 = vrot.lane.b32.xlu0 %v579, 20
        %v1254 = vpop.permute.xlu0 %1253
        %1255 = vrot.lane.b32.xlu0 %v580, 20
        %v1256 = vpop.permute.xlu0 %1255
        %1257 = vrot.lane.b32.xlu0 %v581, 20
        %v1258 = vpop.permute.xlu0 %1257
        %1259 = vrot.lane.b32.xlu0 %v582, 20
        %v1260 = vpop.permute.xlu0 %1259
        %1261 = vrot.lane.b32.xlu0 %v583, 20
        %v1262 = vpop.permute.xlu0 %1261
        %1263 = vrot.lane.b32.xlu0 %v584, 20
        %v1264 = vpop.permute.xlu0 %1263
        %1265 = vrot.lane.b32.xlu0 %v585, 20
        %v1266 = vpop.permute.xlu0 %1265
        %1267 = vrot.lane.b32.xlu0 %v586, 20
        %v1268 = vpop.permute.xlu0 %1267
        %1269 = vrot.lane.b32.xlu0 %v587, 20
        %v1270 = vpop.permute.xlu0 %1269
        %1271 = vrot.lane.b32.xlu0 %v588, 20
        %v1272 = vpop.permute.xlu0 %1271
        %1273 = vrot.lane.b32.xlu0 %v589, 20
        %v1274 = vpop.permute.xlu0 %1273
        %1275 = vrot.lane.b32.xlu0 %v590, 20
        %v1276 = vpop.permute.xlu0 %1275
        %1277 = vrot.lane.b32.xlu0 %v591, 20
        %v1278 = vpop.permute.xlu0 %1277
        %1279 = vrot.lane.b32.xlu0 %v592, 20
        %v1280 = vpop.permute.xlu0 %1279
        %1281 = vrot.lane.b32.xlu0 %v593, 20
        %v1282 = vpop.permute.xlu0 %1281
        %1283 = vrot.lane.b32.xlu0 %v594, 20
        %v1284 = vpop.permute.xlu0 %1283
        %1285 = vrot.lane.b32.xlu0 %v595, 20
        %v1286 = vpop.permute.xlu0 %1285
        %1287 = vrot.lane.b32.xlu0 %v596, 20
        %v1288 = vpop.permute.xlu0 %1287
        %1289 = vrot.lane.b32.xlu0 %v597, 20
        %v1290 = vpop.permute.xlu0 %1289
        %1291 = vrot.lane.b32.xlu0 %v598, 20
        %v1292 = vpop.permute.xlu0 %1291
        %1293 = vrot.lane.b32.xlu0 %v599, 20
        %v1294 = vpop.permute.xlu0 %1293
        %1295 = vrot.lane.b32.xlu0 %v600, 20
        %v1296 = vpop.permute.xlu0 %1295
        %1297 = vrot.lane.b32.xlu0 %v601, 20
        %v1298 = vpop.permute.xlu0 %1297
        %1299 = vrot.lane.b32.xlu0 %v602, 20
        %v1300 = vpop.permute.xlu0 %1299
        %1301 = vrot.lane.b32.xlu0 %v603, 20
        %v1302 = vpop.permute.xlu0 %1301
        %1303 = vrot.lane.b32.xlu0 %v604, 20
        %v1304 = vpop.permute.xlu0 %1303
        %1305 = vrot.lane.b32.xlu0 %v605, 20
        %v1306 = vpop.permute.xlu0 %1305
        %1307 = vrot.lane.b32.xlu0 %v606, 20
        %v1308 = vpop.permute.xlu0 %1307
        %1309 = vrot.lane.b32.xlu0 %v607, 20
        %v1310 = vpop.permute.xlu0 %1309
        %1311 = vrot.lane.b32.xlu0 %v608, 20
        %v1312 = vpop.permute.xlu0 %1311
        %1377 = vrot.lane.b32.xlu0 %v609, 24
        %v1378 = vpop.permute.xlu0 %1377
        %1379 = vrot.lane.b32.xlu0 %v610, 24
        %v1380 = vpop.permute.xlu0 %1379
        %1381 = vrot.lane.b32.xlu0 %v611, 24
        %v1382 = vpop.permute.xlu0 %1381
        %1383 = vrot.lane.b32.xlu0 %v612, 24
        %v1384 = vpop.permute.xlu0 %1383
        %1385 = vrot.lane.b32.xlu0 %v613, 24
        %v1386 = vpop.permute.xlu0 %1385
        %1387 = vrot.lane.b32.xlu0 %v614, 24
        %v1388 = vpop.permute.xlu0 %1387
        %1389 = vrot.lane.b32.xlu0 %v615, 24
        %v1390 = vpop.permute.xlu0 %1389
        %1391 = vrot.lane.b32.xlu0 %v616, 24
        %v1392 = vpop.permute.xlu0 %1391
        %1393 = vrot.lane.b32.xlu0 %v617, 24
        %v1394 = vpop.permute.xlu0 %1393
        %1395 = vrot.lane.b32.xlu0 %v618, 24
        %v1396 = vpop.permute.xlu0 %1395
        %1397 = vrot.lane.b32.xlu0 %v619, 24
        %v1398 = vpop.permute.xlu0 %1397
        %1399 = vrot.lane.b32.xlu0 %v620, 24
        %v1400 = vpop.permute.xlu0 %1399
        %1401 = vrot.lane.b32.xlu0 %v621, 24
        %v1402 = vpop.permute.xlu0 %1401
        %1403 = vrot.lane.b32.xlu0 %v622, 24
        %v1404 = vpop.permute.xlu0 %1403
        %1405 = vrot.lane.b32.xlu0 %v623, 24
        %v1406 = vpop.permute.xlu0 %1405
        %1407 = vrot.lane.b32.xlu0 %v624, 24
        %v1408 = vpop.permute.xlu0 %1407
        %1409 = vrot.lane.b32.xlu0 %v625, 24
        %v1410 = vpop.permute.xlu0 %1409
        %1411 = vrot.lane.b32.xlu0 %v626, 24
        %v1412 = vpop.permute.xlu0 %1411
        %1413 = vrot.lane.b32.xlu0 %v627, 24
        %v1414 = vpop.permute.xlu0 %1413
        %1415 = vrot.lane.b32.xlu0 %v628, 24
        %v1416 = vpop.permute.xlu0 %1415
        %1417 = vrot.lane.b32.xlu0 %v629, 24
        %v1418 = vpop.permute.xlu0 %1417
        %1419 = vrot.lane.b32.xlu0 %v630, 24
        %v1420 = vpop.permute.xlu0 %1419
        %1421 = vrot.lane.b32.xlu0 %v631, 24
        %v1422 = vpop.permute.xlu0 %1421
        %1423 = vrot.lane.b32.xlu0 %v632, 24
        %v1424 = vpop.permute.xlu0 %1423
        %1425 = vrot.lane.b32.xlu0 %v633, 24
        %v1426 = vpop.permute.xlu0 %1425
        %1427 = vrot.lane.b32.xlu0 %v634, 24
        %v1428 = vpop.permute.xlu0 %1427
        %1429 = vrot.lane.b32.xlu0 %v635, 24
        %v1430 = vpop.permute.xlu0 %1429
        %1431 = vrot.lane.b32.xlu0 %v636, 24
        %v1432 = vpop.permute.xlu0 %1431
        %1433 = vrot.lane.b32.xlu0 %v637, 24
        %v1434 = vpop.permute.xlu0 %1433
        %1435 = vrot.lane.b32.xlu0 %v638, 24
        %v1436 = vpop.permute.xlu0 %1435
        %1437 = vrot.lane.b32.xlu0 %v639, 24
        %v1438 = vpop.permute.xlu0 %1437
        %1439 = vrot.lane.b32.xlu0 %v640, 24
        %v1440 = vpop.permute.xlu0 %1439
        %1505 = vrot.lane.b32.xlu0 %v641, 28
        %v1506 = vpop.permute.xlu0 %1505
        %1507 = vrot.lane.b32.xlu0 %v642, 28
        %v1508 = vpop.permute.xlu0 %1507
        %1509 = vrot.lane.b32.xlu0 %v643, 28
        %v1510 = vpop.permute.xlu0 %1509
        %1511 = vrot.lane.b32.xlu0 %v644, 28
        %v1512 = vpop.permute.xlu0 %1511
        %1513 = vrot.lane.b32.xlu0 %v645, 28
        %v1514 = vpop.permute.xlu0 %1513
        %1515 = vrot.lane.b32.xlu0 %v646, 28
        %v1516 = vpop.permute.xlu0 %1515
        %1517 = vrot.lane.b32.xlu0 %v647, 28
        %v1518 = vpop.permute.xlu0 %1517
        %1519 = vrot.lane.b32.xlu0 %v648, 28
        %v1520 = vpop.permute.xlu0 %1519
        %1521 = vrot.lane.b32.xlu0 %v649, 28
        %v1522 = vpop.permute.xlu0 %1521
        %1523 = vrot.lane.b32.xlu0 %v650, 28
        %v1524 = vpop.permute.xlu0 %1523
        %1525 = vrot.lane.b32.xlu0 %v651, 28
        %v1526 = vpop.permute.xlu0 %1525
        %1527 = vrot.lane.b32.xlu0 %v652, 28
        %v1528 = vpop.permute.xlu0 %1527
        %1529 = vrot.lane.b32.xlu0 %v653, 28
        %v1530 = vpop.permute.xlu0 %1529
        %1531 = vrot.lane.b32.xlu0 %v654, 28
        %v1532 = vpop.permute.xlu0 %1531
        %1533 = vrot.lane.b32.xlu0 %v655, 28
        %v1534 = vpop.permute.xlu0 %1533
        %1535 = vrot.lane.b32.xlu0 %v656, 28
        %v1536 = vpop.permute.xlu0 %1535
        %1537 = vrot.lane.b32.xlu0 %v657, 28
        %v1538 = vpop.permute.xlu0 %1537
        %1539 = vrot.lane.b32.xlu0 %v658, 28
        %v1540 = vpop.permute.xlu0 %1539
        %1541 = vrot.lane.b32.xlu0 %v659, 28
        %v1542 = vpop.permute.xlu0 %1541
        %1543 = vrot.lane.b32.xlu0 %v660, 28
        %v1544 = vpop.permute.xlu0 %1543
        %1545 = vrot.lane.b32.xlu0 %v661, 28
        %v1546 = vpop.permute.xlu0 %1545
        %1547 = vrot.lane.b32.xlu0 %v662, 28
        %v1548 = vpop.permute.xlu0 %1547
        %1549 = vrot.lane.b32.xlu0 %v663, 28
        %v1550 = vpop.permute.xlu0 %1549
        %1551 = vrot.lane.b32.xlu0 %v664, 28
        %v1552 = vpop.permute.xlu0 %1551
        %1553 = vrot.lane.b32.xlu0 %v665, 28
        %v1554 = vpop.permute.xlu0 %1553
        %1555 = vrot.lane.b32.xlu0 %v666, 28
        %v1556 = vpop.permute.xlu0 %1555
        %1557 = vrot.lane.b32.xlu0 %v667, 28
        %v1558 = vpop.permute.xlu0 %1557
        %1559 = vrot.lane.b32.xlu0 %v668, 28
        %v1560 = vpop.permute.xlu0 %1559
        %1561 = vrot.lane.b32.xlu0 %v669, 28
        %v1562 = vpop.permute.xlu0 %1561
        %1563 = vrot.lane.b32.xlu0 %v670, 28
        %v1564 = vpop.permute.xlu0 %1563
        %1565 = vrot.lane.b32.xlu0 %v671, 28
        %v1566 = vpop.permute.xlu0 %1565
        %1567 = vrot.lane.b32.xlu0 %v672, 28
        %v1568 = vpop.permute.xlu0 %1567
        %1633 = vrot.lane.b32.xlu0 %v673, 32
        %v1634 = vpop.permute.xlu0 %1633
        %1635 = vrot.lane.b32.xlu0 %v674, 32
        %v1636 = vpop.permute.xlu0 %1635
        %1637 = vrot.lane.b32.xlu0 %v675, 32
        %v1638 = vpop.permute.xlu0 %1637
        %1639 = vrot.lane.b32.xlu0 %v676, 32
        %v1640 = vpop.permute.xlu0 %1639
        %1641 = vrot.lane.b32.xlu0 %v677, 32
        %v1642 = vpop.permute.xlu0 %1641
        %1643 = vrot.lane.b32.xlu0 %v678, 32
        %v1644 = vpop.permute.xlu0 %1643
        %1645 = vrot.lane.b32.xlu0 %v679, 32
        %v1646 = vpop.permute.xlu0 %1645
        %1647 = vrot.lane.b32.xlu0 %v680, 32
        %v1648 = vpop.permute.xlu0 %1647
        %1649 = vrot.lane.b32.xlu0 %v681, 32
        %v1650 = vpop.permute.xlu0 %1649
        %1651 = vrot.lane.b32.xlu0 %v682, 32
        %v1652 = vpop.permute.xlu0 %1651
        %1653 = vrot.lane.b32.xlu0 %v683, 32
        %v1654 = vpop.permute.xlu0 %1653
        %1655 = vrot.lane.b32.xlu0 %v684, 32
        %v1656 = vpop.permute.xlu0 %1655
        %1657 = vrot.lane.b32.xlu0 %v685, 32
        %v1658 = vpop.permute.xlu0 %1657
        %1659 = vrot.lane.b32.xlu0 %v686, 32
        %v1660 = vpop.permute.xlu0 %1659
        %1661 = vrot.lane.b32.xlu0 %v687, 32
        %v1662 = vpop.permute.xlu0 %1661
        %1663 = vrot.lane.b32.xlu0 %v688, 32
        %v1664 = vpop.permute.xlu0 %1663
        %1665 = vrot.lane.b32.xlu0 %v689, 32
        %v1666 = vpop.permute.xlu0 %1665
        %1667 = vrot.lane.b32.xlu0 %v690, 32
        %v1668 = vpop.permute.xlu0 %1667
        %1669 = vrot.lane.b32.xlu0 %v691, 32
        %v1670 = vpop.permute.xlu0 %1669
        %1671 = vrot.lane.b32.xlu0 %v692, 32
        %v1672 = vpop.permute.xlu0 %1671
        %1673 = vrot.lane.b32.xlu0 %v693, 32
        %v1674 = vpop.permute.xlu0 %1673
        %1675 = vrot.lane.b32.xlu0 %v694, 32
        %v1676 = vpop.permute.xlu0 %1675
        %1677 = vrot.lane.b32.xlu0 %v695, 32
        %v1678 = vpop.permute.xlu0 %1677
        %1679 = vrot.lane.b32.xlu0 %v696, 32
        %v1680 = vpop.permute.xlu0 %1679
        %1681 = vrot.lane.b32.xlu0 %v697, 32
        %v1682 = vpop.permute.xlu0 %1681
        %1683 = vrot.lane.b32.xlu0 %v698, 32
        %v1684 = vpop.permute.xlu0 %1683
        %1685 = vrot.lane.b32.xlu0 %v699, 32
        %v1686 = vpop.permute.xlu0 %1685
        %1687 = vrot.lane.b32.xlu0 %v700, 32
        %v1688 = vpop.permute.xlu0 %1687
        %1689 = vrot.lane.b32.xlu0 %v701, 32
        %v1690 = vpop.permute.xlu0 %1689
        %1691 = vrot.lane.b32.xlu0 %v702, 32
        %v1692 = vpop.permute.xlu0 %1691
        %1693 = vrot.lane.b32.xlu0 %v703, 32
        %v1694 = vpop.permute.xlu0 %1693
        %1695 = vrot.lane.b32.xlu0 %v704, 32
        %v1696 = vpop.permute.xlu0 %1695
        %v1729 = vsel %vm295, %v417, %v738
        %v1730 = vsel %vm295, %v418, %v740
        %v1731 = vsel %vm295, %v419, %v742
        %v1732 = vsel %vm295, %v420, %v744
        %v1733 = vsel %vm295, %v421, %v746
        %v1734 = vsel %vm295, %v422, %v748
        %v1735 = vsel %vm295, %v423, %v750
        %v1736 = vsel %vm295, %v424, %v752
        %v1737 = vsel %vm295, %v425, %v754
        %v1738 = vsel %vm295, %v426, %v756
        %v1739 = vsel %vm295, %v427, %v758
        %v1740 = vsel %vm295, %v428, %v760
        %v1741 = vsel %vm295, %v429, %v762
        %v1742 = vsel %vm295, %v430, %v764
        %v1743 = vsel %vm295, %v431, %v766
        %v1744 = vsel %vm295, %v432, %v768
        %v1745 = vsel %vm295, %v433, %v770
        %v1746 = vsel %vm295, %v434, %v772
        %v1747 = vsel %vm295, %v435, %v774
        %v1748 = vsel %vm295, %v436, %v776
        %v1749 = vsel %vm295, %v437, %v778
        %v1750 = vsel %vm295, %v438, %v780
        %v1751 = vsel %vm295, %v439, %v782
        %v1752 = vsel %vm295, %v440, %v784
        %v1753 = vsel %vm295, %v441, %v786
        %v1754 = vsel %vm295, %v442, %v788
        %v1755 = vsel %vm295, %v443, %v790
        %v1756 = vsel %vm295, %v444, %v792
        %v1757 = vsel %vm295, %v445, %v794
        %v1758 = vsel %vm295, %v446, %v796
        %v1759 = vsel %vm295, %v447, %v798
        %v1760 = vsel %vm295, %v448, %v800
        %vm1761 = vcmask 64512
        %v1762 = vsel %vm1761, %v1729, %v866
        %v1763 = vsel %vm1761, %v1730, %v868
        %v1764 = vsel %vm1761, %v1731, %v870
        %v1765 = vsel %vm1761, %v1732, %v872
        %v1766 = vsel %vm1761, %v1733, %v874
        %v1767 = vsel %vm1761, %v1734, %v876
        %v1768 = vsel %vm1761, %v1735, %v878
        %v1769 = vsel %vm1761, %v1736, %v880
        %v1770 = vsel %vm1761, %v1737, %v882
        %v1771 = vsel %vm1761, %v1738, %v884
        %v1772 = vsel %vm1761, %v1739, %v886
        %v1773 = vsel %vm1761, %v1740, %v888
        %v1774 = vsel %vm1761, %v1741, %v890
        %v1775 = vsel %vm1761, %v1742, %v892
        %v1776 = vsel %vm1761, %v1743, %v894
        %v1777 = vsel %vm1761, %v1744, %v896
        %v1778 = vsel %vm1761, %v1745, %v898
        %v1779 = vsel %vm1761, %v1746, %v900
        %v1780 = vsel %vm1761, %v1747, %v902
        %v1781 = vsel %vm1761, %v1748, %v904
        %v1782 = vsel %vm1761, %v1749, %v906
        %v1783 = vsel %vm1761, %v1750, %v908
        %v1784 = vsel %vm1761, %v1751, %v910
        %v1785 = vsel %vm1761, %v1752, %v912
        %v1786 = vsel %vm1761, %v1753, %v914
        %v1787 = vsel %vm1761, %v1754, %v916
        %v1788 = vsel %vm1761, %v1755, %v918
        %v1789 = vsel %vm1761, %v1756, %v920
        %v1790 = vsel %vm1761, %v1757, %v922
        %v1791 = vsel %vm1761, %v1758, %v924
        %v1792 = vsel %vm1761, %v1759, %v926
        %v1793 = vsel %vm1761, %v1760, %v928
        %vm1794 = vcmask 97280
        %v1795 = vsel %vm1794, %v1762, %v994
        %v1796 = vsel %vm1794, %v1763, %v996
        %v1797 = vsel %vm1794, %v1764, %v998
        %v1798 = vsel %vm1794, %v1765, %v1000
        %v1799 = vsel %vm1794, %v1766, %v1002
        %v1800 = vsel %vm1794, %v1767, %v1004
        %v1801 = vsel %vm1794, %v1768, %v1006
        %v1802 = vsel %vm1794, %v1769, %v1008
        %v1803 = vsel %vm1794, %v1770, %v1010
        %v1804 = vsel %vm1794, %v1771, %v1012
        %v1805 = vsel %vm1794, %v1772, %v1014
        %v1806 = vsel %vm1794, %v1773, %v1016
        %v1807 = vsel %vm1794, %v1774, %v1018
        %v1808 = vsel %vm1794, %v1775, %v1020
        %v1809 = vsel %vm1794, %v1776, %v1022
        %v1810 = vsel %vm1794, %v1777, %v1024
        %v1811 = vsel %vm1794, %v1778, %v1026
        %v1812 = vsel %vm1794, %v1779, %v1028
        %v1813 = vsel %vm1794, %v1780, %v1030
        %v1814 = vsel %vm1794, %v1781, %v1032
        %v1815 = vsel %vm1794, %v1782, %v1034
        %v1816 = vsel %vm1794, %v1783, %v1036
        %v1817 = vsel %vm1794, %v1784, %v1038
        %v1818 = vsel %vm1794, %v1785, %v1040
        %v1819 = vsel %vm1794, %v1786, %v1042
        %v1820 = vsel %vm1794, %v1787, %v1044
        %v1821 = vsel %vm1794, %v1788, %v1046
        %v1822 = vsel %vm1794, %v1789, %v1048
        %v1823 = vsel %vm1794, %v1790, %v1050
        %v1824 = vsel %vm1794, %v1791, %v1052
        %v1825 = vsel %vm1794, %v1792, %v1054
        %v1826 = vsel %vm1794, %v1793, %v1056
        %vm1827 = vcmask 130048
        %v1828 = vsel %vm1827, %v1795, %v1122
        %v1829 = vsel %vm1827, %v1796, %v1124
        %v1830 = vsel %vm1827, %v1797, %v1126
        %v1831 = vsel %vm1827, %v1798, %v1128
        %v1832 = vsel %vm1827, %v1799, %v1130
        %v1833 = vsel %vm1827, %v1800, %v1132
        %v1834 = vsel %vm1827, %v1801, %v1134
        %v1835 = vsel %vm1827, %v1802, %v1136
        %v1836 = vsel %vm1827, %v1803, %v1138
        %v1837 = vsel %vm1827, %v1804, %v1140
        %v1838 = vsel %vm1827, %v1805, %v1142
        %v1839 = vsel %vm1827, %v1806, %v1144
        %v1840 = vsel %vm1827, %v1807, %v1146
        %v1841 = vsel %vm1827, %v1808, %v1148
        %v1842 = vsel %vm1827, %v1809, %v1150
        %v1843 = vsel %vm1827, %v1810, %v1152
        %v1844 = vsel %vm1827, %v1811, %v1154
        %v1845 = vsel %vm1827, %v1812, %v1156
        %v1846 = vsel %vm1827, %v1813, %v1158
        %v1847 = vsel %vm1827, %v1814, %v1160
        %v1848 = vsel %vm1827, %v1815, %v1162
        %v1849 = vsel %vm1827, %v1816, %v1164
        %v1850 = vsel %vm1827, %v1817, %v1166
        %v1851 = vsel %vm1827, %v1818, %v1168
        %v1852 = vsel %vm1827, %v1819, %v1170
        %v1853 = vsel %vm1827, %v1820, %v1172
        %v1854 = vsel %vm1827, %v1821, %v1174
        %v1855 = vsel %vm1827, %v1822, %v1176
        %v1856 = vsel %vm1827, %v1823, %v1178
        %v1857 = vsel %vm1827, %v1824, %v1180
        %v1858 = vsel %vm1827, %v1825, %v1182
        %v1859 = vsel %vm1827, %v1826, %v1184
        %vm1860 = vcmask 162816
        %v1861 = vsel %vm1860, %v1828, %v1250
        %v1862 = vsel %vm1860, %v1829, %v1252
        %v1863 = vsel %vm1860, %v1830, %v1254
        %v1864 = vsel %vm1860, %v1831, %v1256
        %v1865 = vsel %vm1860, %v1832, %v1258
        %v1866 = vsel %vm1860, %v1833, %v1260
        %v1867 = vsel %vm1860, %v1834, %v1262
        %v1868 = vsel %vm1860, %v1835, %v1264
        %v1869 = vsel %vm1860, %v1836, %v1266
        %v1870 = vsel %vm1860, %v1837, %v1268
        %v1871 = vsel %vm1860, %v1838, %v1270
        %v1872 = vsel %vm1860, %v1839, %v1272
        %v1873 = vsel %vm1860, %v1840, %v1274
        %v1874 = vsel %vm1860, %v1841, %v1276
        %v1875 = vsel %vm1860, %v1842, %v1278
        %v1876 = vsel %vm1860, %v1843, %v1280
        %v1877 = vsel %vm1860, %v1844, %v1282
        %v1878 = vsel %vm1860, %v1845, %v1284
        %v1879 = vsel %vm1860, %v1846, %v1286
        %v1880 = vsel %vm1860, %v1847, %v1288
        %v1881 = vsel %vm1860, %v1848, %v1290
        %v1882 = vsel %vm1860, %v1849, %v1292
        %v1883 = vsel %vm1860, %v1850, %v1294
        %v1884 = vsel %vm1860, %v1851, %v1296
        %v1885 = vsel %vm1860, %v1852, %v1298
        %v1886 = vsel %vm1860, %v1853, %v1300
        %v1887 = vsel %vm1860, %v1854, %v1302
        %v1888 = vsel %vm1860, %v1855, %v1304
        %v1889 = vsel %vm1860, %v1856, %v1306
        %v1890 = vsel %vm1860, %v1857, %v1308
        %v1891 = vsel %vm1860, %v1858, %v1310
        %v1892 = vsel %vm1860, %v1859, %v1312
        %vm1893 = vcmask 195584
        %v1894 = vsel %vm1893, %v1861, %v1378
        %v1895 = vsel %vm1893, %v1862, %v1380
        %v1896 = vsel %vm1893, %v1863, %v1382
        %v1897 = vsel %vm1893, %v1864, %v1384
        %v1898 = vsel %vm1893, %v1865, %v1386
        %v1899 = vsel %vm1893, %v1866, %v1388
        %v1900 = vsel %vm1893, %v1867, %v1390
        %v1901 = vsel %vm1893, %v1868, %v1392
        %v1902 = vsel %vm1893, %v1869, %v1394
        %v1903 = vsel %vm1893, %v1870, %v1396
        %v1904 = vsel %vm1893, %v1871, %v1398
        %v1905 = vsel %vm1893, %v1872, %v1400
        %v1906 = vsel %vm1893, %v1873, %v1402
        %v1907 = vsel %vm1893, %v1874, %v1404
        %v1908 = vsel %vm1893, %v1875, %v1406
        %v1909 = vsel %vm1893, %v1876, %v1408
        %v1910 = vsel %vm1893, %v1877, %v1410
        %v1911 = vsel %vm1893, %v1878, %v1412
        %v1912 = vsel %vm1893, %v1879, %v1414
        %v1913 = vsel %vm1893, %v1880, %v1416
        %v1914 = vsel %vm1893, %v1881, %v1418
        %v1915 = vsel %vm1893, %v1882, %v1420
        %v1916 = vsel %vm1893, %v1883, %v1422
        %v1917 = vsel %vm1893, %v1884, %v1424
        %v1918 = vsel %vm1893, %v1885, %v1426
        %v1919 = vsel %vm1893, %v1886, %v1428
        %v1920 = vsel %vm1893, %v1887, %v1430
        %v1921 = vsel %vm1893, %v1888, %v1432
        %v1922 = vsel %vm1893, %v1889, %v1434
        %v1923 = vsel %vm1893, %v1890, %v1436
        %v1924 = vsel %vm1893, %v1891, %v1438
        %v1925 = vsel %vm1893, %v1892, %v1440
        %vm1926 = vcmask 228352
        %v1927 = vsel %vm1926, %v1894, %v1506
        %v1928 = vsel %vm1926, %v1895, %v1508
        %v1929 = vsel %vm1926, %v1896, %v1510
        %v1930 = vsel %vm1926, %v1897, %v1512
        %v1931 = vsel %vm1926, %v1898, %v1514
        %v1932 = vsel %vm1926, %v1899, %v1516
        %v1933 = vsel %vm1926, %v1900, %v1518
        %v1934 = vsel %vm1926, %v1901, %v1520
        %v1935 = vsel %vm1926, %v1902, %v1522
        %v1936 = vsel %vm1926, %v1903, %v1524
        %v1937 = vsel %vm1926, %v1904, %v1526
        %v1938 = vsel %vm1926, %v1905, %v1528
        %v1939 = vsel %vm1926, %v1906, %v1530
        %v1940 = vsel %vm1926, %v1907, %v1532
        %v1941 = vsel %vm1926, %v1908, %v1534
        %v1942 = vsel %vm1926, %v1909, %v1536
        %v1943 = vsel %vm1926, %v1910, %v1538
        %v1944 = vsel %vm1926, %v1911, %v1540
        %v1945 = vsel %vm1926, %v1912, %v1542
        %v1946 = vsel %vm1926, %v1913, %v1544
        %v1947 = vsel %vm1926, %v1914, %v1546
        %v1948 = vsel %vm1926, %v1915, %v1548
        %v1949 = vsel %vm1926, %v1916, %v1550
        %v1950 = vsel %vm1926, %v1917, %v1552
        %v1951 = vsel %vm1926, %v1918, %v1554
        %v1952 = vsel %vm1926, %v1919, %v1556
        %v1953 = vsel %vm1926, %v1920, %v1558
        %v1954 = vsel %vm1926, %v1921, %v1560
        %v1955 = vsel %vm1926, %v1922, %v1562
        %v1956 = vsel %vm1926, %v1923, %v1564
        %v1957 = vsel %vm1926, %v1924, %v1566
        %v1958 = vsel %vm1926, %v1925, %v1568
        %vm1959 = vcmask 261120
        %v1960 = vsel %vm1959, %v1927, %v1634
        %v1961 = vsel %vm1959, %v1928, %v1636
        %v1962 = vsel %vm1959, %v1929, %v1638
        %v1963 = vsel %vm1959, %v1930, %v1640
        %v1964 = vsel %vm1959, %v1931, %v1642
        %v1965 = vsel %vm1959, %v1932, %v1644
        %v1966 = vsel %vm1959, %v1933, %v1646
        %v1967 = vsel %vm1959, %v1934, %v1648
        %v1968 = vsel %vm1959, %v1935, %v1650
        %v1969 = vsel %vm1959, %v1936, %v1652
        %v1970 = vsel %vm1959, %v1937, %v1654
        %v1971 = vsel %vm1959, %v1938, %v1656
        %v1972 = vsel %vm1959, %v1939, %v1658
        %v1973 = vsel %vm1959, %v1940, %v1660
        %v1974 = vsel %vm1959, %v1941, %v1662
        %v1975 = vsel %vm1959, %v1942, %v1664
        %v1976 = vsel %vm1959, %v1943, %v1666
        %v1977 = vsel %vm1959, %v1944, %v1668
        %v1978 = vsel %vm1959, %v1945, %v1670
        %v1979 = vsel %vm1959, %v1946, %v1672
        %v1980 = vsel %vm1959, %v1947, %v1674
        %v1981 = vsel %vm1959, %v1948, %v1676
        %v1982 = vsel %vm1959, %v1949, %v1678
        %v1983 = vsel %vm1959, %v1950, %v1680
        %v1984 = vsel %vm1959, %v1951, %v1682
        %v1985 = vsel %vm1959, %v1952, %v1684
        %v1986 = vsel %vm1959, %v1953, %v1686
        %v1987 = vsel %vm1959, %v1954, %v1688
        %v1988 = vsel %vm1959, %v1955, %v1690
        %v1989 = vsel %vm1959, %v1956, %v1692
        %v1990 = vsel %vm1959, %v1957, %v1694
        %v1991 = vsel %vm1959, %v1958, %v1696
        %v1992 = vld [vmem:[#allocation7] sm:$0xff]
        %v1993 = vld [vmem:[#allocation7 + $0x8] sm:$0xff]
        %v1994 = vld [vmem:[#allocation7 + $0x10] sm:$0xff]
        %v1995 = vld [vmem:[#allocation7 + $0x18] sm:$0xff]
        %v1996 = vld [vmem:[#allocation7 + $0x20] sm:$0xf]
        %vm1997 = vcmask 293888
        %v1999 = vsel %vm1997, %v1960, 0
        %v2002 = vsel %vm1997, %v1961, 0
        %v2005 = vsel %vm1997, %v1962, 0
        %v2008 = vsel %vm1997, %v1963, 0
        %v2011 = vsel %vm1997, %v1964, 0
        %v2014 = vsel %vm1997, %v1965, 0
        %v2017 = vsel %vm1997, %v1966, 0
        %v2020 = vsel %vm1997, %v1967, 0
        %v2023 = vsel %vm1997, %v1968, 0
        %v2026 = vsel %vm1997, %v1969, 0
        %v2029 = vsel %vm1997, %v1970, 0
        %v2032 = vsel %vm1997, %v1971, 0
        %v2035 = vsel %vm1997, %v1972, 0
        %v2038 = vsel %vm1997, %v1973, 0
        %v2041 = vsel %vm1997, %v1974, 0
        %v2044 = vsel %vm1997, %v1975, 0
        %v2047 = vsel %vm1997, %v1976, 0
        %v2050 = vsel %vm1997, %v1977, 0
        %v2053 = vsel %vm1997, %v1978, 0
        %v2056 = vsel %vm1997, %v1979, 0
        %v2059 = vsel %vm1997, %v1980, 0
        %v2062 = vsel %vm1997, %v1981, 0
        %v2065 = vsel %vm1997, %v1982, 0
        %v2068 = vsel %vm1997, %v1983, 0
        %v2071 = vsel %vm1997, %v1984, 0
        %v2074 = vsel %vm1997, %v1985, 0
        %v2077 = vsel %vm1997, %v1986, 0
        %v2080 = vsel %vm1997, %v1987, 0
        %v2083 = vsel %vm1997, %v1988, 0
        %v2086 = vsel %vm1997, %v1989, 0
        %v2089 = vsel %vm1997, %v1990, 0
        %v2092 = vsel %vm1997, %v1991, 0
        %vm2094 = vcmask 1043456
        %v2096 = vsel %vm2094, %v1996, 0
        %2098 = vmatprep.subr.mxu0 0.0
        %2099 = vmatpush1.msra.mxu0 %v1992
        %2100 = vmatprep.subr.mxu0 0.0
        %2101 = vmatpush1.msra.mxu0 %v1993
        %2102 = vmatprep.subr.mxu0 0.0
        %2103 = vmatpush1.msra.mxu0 %v1994
        %2104 = vmatprep.subr.mxu0 0.0
        %2105 = vmatpush1.msra.mxu0 %v1995
        %2106 = vmatprep.subr.mxu0 0.0
        %2107 = vmatpush1.msra.mxu0 %v2096
        %2108 = vmatprep.subr.mxu0 0.0
        %2109 = vmatpush1.msra.mxu0 0.0
        %2110 = vmatprep.subr.mxu0 0.0
        %2111 = vmatpush1.msra.mxu0 0.0
        %2112 = vmatprep.subr.mxu0 0.0
        %2113 = vmatpush1.msra.mxu0 0.0
        %2114 = vmatprep.subr.mxu0 0.0
        %2115 = vmatpush1.msra.mxu0 0.0
        %2116 = vmatprep.subr.mxu0 0.0
        %2117 = vmatpush1.msra.mxu0 0.0
        %2118 = vmatprep.subr.mxu0 0.0
        %2119 = vmatpush1.msra.mxu0 0.0
        %2120 = vmatprep.subr.mxu0 0.0
        %2121 = vmatpush1.msra.mxu0 0.0
        %2122 = vmatprep.subr.mxu0 0.0
        %2123 = vmatpush1.msra.mxu0 0.0
        %2124 = vmatprep.subr.mxu0 0.0
        %2125 = vmatpush1.msra.mxu0 0.0
        %2126 = vmatprep.subr.mxu0 0.0
        %2127 = vmatpush1.msra.mxu0 0.0
        %2128 = vmatprep.subr.mxu0 0.0
        %2129 = vmatpush1.msra.mxu0 0.0
        %2130 = vmatprep.subr.mxu0 0.0
        %2131 = vmatpush1.msra.mxu0 0.0
        %2132 = vmatprep.subr.mxu0 0.0
        %2133 = vmatpush1.msra.mxu0 0.0
        %2134 = vmatprep.subr.mxu0 0.0
        %2135 = vmatpush1.msra.mxu0 0.0
        %2136 = vmatprep.subr.mxu0 0.0
        %2137 = vmatpush1.msra.mxu0 0.0
        %2138 = vmatprep.subr.mxu0 0.0
        %2139 = vmatpush1.msra.mxu0 0.0
        %2140 = vmatprep.subr.mxu0 0.0
        %2141 = vmatpush1.msra.mxu0 0.0
        %2142 = vmatprep.subr.mxu0 0.0
        %2143 = vmatpush1.msra.mxu0 0.0
        %2144 = vmatprep.subr.mxu0 0.0
        %2145 = vmatpush1.msra.mxu0 0.0
        %2146 = vmatprep.subr.mxu0 0.0
        %2147 = vmatpush1.msra.mxu0 0.0
        %2148 = vmatprep.subr.mxu0 0.0
        %2149 = vmatpush1.msra.mxu0 0.0
        %2150 = vmatprep.subr.mxu0 0.0
        %2151 = vmatpush1.msra.mxu0 0.0
        %2152 = vmatprep.subr.mxu0 0.0
        %2153 = vmatpush1.msra.mxu0 0.0
        %2154 = vmatprep.subr.mxu0 0.0
        %2155 = vmatpush1.msra.mxu0 0.0
        %2156 = vmatprep.subr.mxu0 0.0
        %2157 = vmatpush1.msra.mxu0 0.0
        %2158 = vmatprep.subr.mxu0 0.0
        %2159 = vmatpush1.msra.mxu0 0.0
        %2160 = vmatprep.subr.mxu0 0.0
        %2161 = vmatpush1.msra.mxu0 0.0
        %2162 = vmatprep.mubr.f32.mxu0 0.0
        %2163 = vmatmul.mubr.f32.gmra.mrb[0].mxu0 %v1999
        %v2164 = vpop.f32.mrb[0].mxu0
        %v2165 = vadd.f32 0.0, %v2164
        %v2166 = vpop.f32.mrb[0].mxu0
        %2167 = vmatprep.mubr.f32.mxu0 0.0
        %2168 = vmatmul.mubr.f32.gmra.mrb[0].mxu0 %v2002
        %v2169 = vpop.f32.mrb[0].mxu0
        %v2170 = vadd.f32 0.0, %v2169
        %v2171 = vpop.f32.mrb[0].mxu0
        %2172 = vmatprep.mubr.f32.mxu0 0.0
        %2173 = vmatmul.mubr.f32.gmra.mrb[0].mxu0 %v2005
        %v2174 = vpop.f32.mrb[0].mxu0
        %v2175 = vadd.f32 0.0, %v2174
        %v2176 = vpop.f32.mrb[0].mxu0
        %2177 = vmatprep.mubr.f32.mxu0 0.0
        %2178 = vmatmul.mubr.f32.gmra.mrb[0].mxu0 %v2008
        %v2179 = vpop.f32.mrb[0].mxu0
        %v2180 = vadd.f32 0.0, %v2179
        %v2181 = vpop.f32.mrb[0].mxu0
        %2182 = vmatprep.mubr.f32.mxu0 0.0
        %2183 = vmatmul.mubr.f32.gmra.mrb[0].mxu0 %v2011
        %v2184 = vpop.f32.mrb[0].mxu0
        %v2185 = vadd.f32 0.0, %v2184
        %v2186 = vpop.f32.mrb[0].mxu0
        %2187 = vmatprep.mubr.f32.mxu0 0.0
        %2188 = vmatmul.mubr.f32.gmra.mrb[0].mxu0 %v2014
        %v2189 = vpop.f32.mrb[0].mxu0
        %v2190 = vadd.f32 0.0, %v2189
        %v2191 = vpop.f32.mrb[0].mxu0
        %2192 = vmatprep.mubr.f32.mxu0 0.0
        %2193 = vmatmul.mubr.f32.gmra.mrb[0].mxu0 %v2017
        %v2194 = vpop.f32.mrb[0].mxu0
        %v2195 = vadd.f32 0.0, %v2194
        %v2196 = vpop.f32.mrb[0].mxu0
        %2197 = vmatprep.mubr.f32.mxu0 0.0
        %2198 = vmatmul.mubr.f32.gmra.mrb[0].mxu0 %v2020
        %v2199 = vpop.f32.mrb[0].mxu0
        %v2200 = vadd.f32 0.0, %v2199
        %v2201 = vpop.f32.mrb[0].mxu0
        %2202 = vmatprep.mubr.f32.mxu0 0.0
        %2203 = vmatmul.mubr.f32.gmra.mrb[0].mxu0 %v2023
        %v2204 = vpop.f32.mrb[0].mxu0
        %v2205 = vadd.f32 0.0, %v2204
        %v2206 = vpop.f32.mrb[0].mxu0
        %2207 = vmatprep.mubr.f32.mxu0 0.0
        %2208 = vmatmul.mubr.f32.gmra.mrb[0].mxu0 %v2026
        %v2209 = vpop.f32.mrb[0].mxu0
        %v2210 = vadd.f32 0.0, %v2209
        %v2211 = vpop.f32.mrb[0].mxu0
        %2212 = vmatprep.mubr.f32.mxu0 0.0
        %2213 = vmatmul.mubr.f32.gmra.mrb[0].mxu0 %v2029
        %v2214 = vpop.f32.mrb[0].mxu0
        %v2215 = vadd.f32 0.0, %v2214
        %v2216 = vpop.f32.mrb[0].mxu0
        %2217 = vmatprep.mubr.f32.mxu0 0.0
        %2218 = vmatmul.mubr.f32.gmra.mrb[0].mxu0 %v2032
        %v2219 = vpop.f32.mrb[0].mxu0
        %v2220 = vadd.f32 0.0, %v2219
        %v2221 = vpop.f32.mrb[0].mxu0
        %2222 = vmatprep.mubr.f32.mxu0 0.0
        %2223 = vmatmul.mubr.f32.gmra.mrb[0].mxu0 %v2035
        %v2224 = vpop.f32.mrb[0].mxu0
        %v2225 = vadd.f32 0.0, %v2224
        %v2226 = vpop.f32.mrb[0].mxu0
        %2227 = vmatprep.mubr.f32.mxu0 0.0
        %2228 = vmatmul.mubr.f32.gmra.mrb[0].mxu0 %v2038
        %v2229 = vpop.f32.mrb[0].mxu0
        %v2230 = vadd.f32 0.0, %v2229
        %v2231 = vpop.f32.mrb[0].mxu0
        %2232 = vmatprep.mubr.f32.mxu0 0.0
        %2233 = vmatmul.mubr.f32.gmra.mrb[0].mxu0 %v2041
        %v2234 = vpop.f32.mrb[0].mxu0
        %v2235 = vadd.f32 0.0, %v2234
        %v2236 = vpop.f32.mrb[0].mxu0
        %2237 = vmatprep.mubr.f32.mxu0 0.0
        %2238 = vmatmul.mubr.f32.gmra.mrb[0].mxu0 %v2044
        %v2239 = vpop.f32.mrb[0].mxu0
        %v2240 = vadd.f32 0.0, %v2239
        %v2241 = vpop.f32.mrb[0].mxu0
        %2242 = vmatprep.mubr.f32.mxu0 0.0
        %2243 = vmatmul.mubr.f32.gmra.mrb[0].mxu0 %v2047
        %v2244 = vpop.f32.mrb[0].mxu0
        %v2245 = vadd.f32 0.0, %v2244
        %v2246 = vpop.f32.mrb[0].mxu0
        %2247 = vmatprep.mubr.f32.mxu0 0.0
        %2248 = vmatmul.mubr.f32.gmra.mrb[0].mxu0 %v2050
        %v2249 = vpop.f32.mrb[0].mxu0
        %v2250 = vadd.f32 0.0, %v2249
        %v2251 = vpop.f32.mrb[0].mxu0
        %2252 = vmatprep.mubr.f32.mxu0 0.0
        %2253 = vmatmul.mubr.f32.gmra.mrb[0].mxu0 %v2053
        %v2254 = vpop.f32.mrb[0].mxu0
        %v2255 = vadd.f32 0.0, %v2254
        %v2256 = vpop.f32.mrb[0].mxu0
        %2257 = vmatprep.mubr.f32.mxu0 0.0
        %2258 = vmatmul.mubr.f32.gmra.mrb[0].mxu0 %v2056
        %v2259 = vpop.f32.mrb[0].mxu0
        %v2260 = vadd.f32 0.0, %v2259
        %v2261 = vpop.f32.mrb[0].mxu0
        %2262 = vmatprep.mubr.f32.mxu0 0.0
        %2263 = vmatmul.mubr.f32.gmra.mrb[0].mxu0 %v2059
        %v2264 = vpop.f32.mrb[0].mxu0
        %v2265 = vadd.f32 0.0, %v2264
        %v2266 = vpop.f32.mrb[0].mxu0
        %2267 = vmatprep.mubr.f32.mxu0 0.0
        %2268 = vmatmul.mubr.f32.gmra.mrb[0].mxu0 %v2062
        %v2269 = vpop.f32.mrb[0].mxu0
        %v2270 = vadd.f32 0.0, %v2269
        %v2271 = vpop.f32.mrb[0].mxu0
        %2272 = vmatprep.mubr.f32.mxu0 0.0
        %2273 = vmatmul.mubr.f32.gmra.mrb[0].mxu0 %v2065
        %v2274 = vpop.f32.mrb[0].mxu0
        %v2275 = vadd.f32 0.0, %v2274
        %v2276 = vpop.f32.mrb[0].mxu0
        %2277 = vmatprep.mubr.f32.mxu0 0.0
        %2278 = vmatmul.mubr.f32.gmra.mrb[0].mxu0 %v2068
        %v2279 = vpop.f32.mrb[0].mxu0
        %v2280 = vadd.f32 0.0, %v2279
        %v2281 = vpop.f32.mrb[0].mxu0
        %2282 = vmatprep.mubr.f32.mxu0 0.0
        %2283 = vmatmul.mubr.f32.gmra.mrb[0].mxu0 %v2071
        %v2284 = vpop.f32.mrb[0].mxu0
        %v2285 = vadd.f32 0.0, %v2284
        %v2286 = vpop.f32.mrb[0].mxu0
        %2287 = vmatprep.mubr.f32.mxu0 0.0
        %2288 = vmatmul.mubr.f32.gmra.mrb[0].mxu0 %v2074
        %v2289 = vpop.f32.mrb[0].mxu0
        %v2290 = vadd.f32 0.0, %v2289
        %v2291 = vpop.f32.mrb[0].mxu0
        %2292 = vmatprep.mubr.f32.mxu0 0.0
        %2293 = vmatmul.mubr.f32.gmra.mrb[0].mxu0 %v2077
        %v2294 = vpop.f32.mrb[0].mxu0
        %v2295 = vadd.f32 0.0, %v2294
        %v2296 = vpop.f32.mrb[0].mxu0
        %2297 = vmatprep.mubr.f32.mxu0 0.0
        %2298 = vmatmul.mubr.f32.gmra.mrb[0].mxu0 %v2080
        %v2299 = vpop.f32.mrb[0].mxu0
        %v2300 = vadd.f32 0.0, %v2299
        %v2301 = vpop.f32.mrb[0].mxu0
        %2302 = vmatprep.mubr.f32.mxu0 0.0
        %2303 = vmatmul.mubr.f32.gmra.mrb[0].mxu0 %v2083
        %v2304 = vpop.f32.mrb[0].mxu0
        %v2305 = vadd.f32 0.0, %v2304
        %v2306 = vpop.f32.mrb[0].mxu0
        %2307 = vmatprep.mubr.f32.mxu0 0.0
        %2308 = vmatmul.mubr.f32.gmra.mrb[0].mxu0 %v2086
        %v2309 = vpop.f32.mrb[0].mxu0
        %v2310 = vadd.f32 0.0, %v2309
        %v2311 = vpop.f32.mrb[0].mxu0
        %2312 = vmatprep.mubr.f32.mxu0 0.0
        %2313 = vmatmul.mubr.f32.gmra.mrb[0].mxu0 %v2089
        %v2314 = vpop.f32.mrb[0].mxu0
        %v2315 = vadd.f32 0.0, %v2314
        %v2316 = vpop.f32.mrb[0].mxu0
        %2317 = vmatprep.mubr.f32.mxu0 0.0
        %2318 = vmatmul.mubr.f32.gmra.mrb[0].mxu0 %v2092
        %v2319 = vpop.f32.mrb[0].mxu0
        %v2320 = vadd.f32 0.0, %v2319
        %v2321 = vpop.f32.mrb[0].mxu0
        %2322 = vdwg.mxu0
        %2323 = vst.msk [vmem:[#allocation3] sm:$0xff] %vm295, %v2165
        %2324 = vst.msk [vmem:[#allocation3 + $0x8] sm:$0xff] %vm295, %v2170
        %2325 = vst.msk [vmem:[#allocation3 + $0x10] sm:$0xff] %vm295, %v2175
        %2326 = vst.msk [vmem:[#allocation3 + $0x18] sm:$0xff] %vm295, %v2180
        %2327 = vst.msk [vmem:[#allocation3 + $0x20] sm:$0xff] %vm295, %v2185
        %2328 = vst.msk [vmem:[#allocation3 + $0x28] sm:$0xff] %vm295, %v2190
        %2329 = vst.msk [vmem:[#allocation3 + $0x30] sm:$0xff] %vm295, %v2195
        %2330 = vst.msk [vmem:[#allocation3 + $0x38] sm:$0xff] %vm295, %v2200
        %2331 = vst.msk [vmem:[#allocation3 + $0x40] sm:$0xff] %vm295, %v2205
        %2332 = vst.msk [vmem:[#allocation3 + $0x48] sm:$0xff] %vm295, %v2210
        %2333 = vst.msk [vmem:[#allocation3 + $0x50] sm:$0xff] %vm295, %v2215
        %2334 = vst.msk [vmem:[#allocation3 + $0x58] sm:$0xff] %vm295, %v2220
        %2335 = vst.msk [vmem:[#allocation3 + $0x60] sm:$0xff] %vm295, %v2225
        %2336 = vst.msk [vmem:[#allocation3 + $0x68] sm:$0xff] %vm295, %v2230
        %2337 = vst.msk [vmem:[#allocation3 + $0x70] sm:$0xff] %vm295, %v2235
        %2338 = vst.msk [vmem:[#allocation3 + $0x78] sm:$0xff] %vm295, %v2240
        %2339 = vst.msk [vmem:[#allocation3 + $0x80] sm:$0xff] %vm295, %v2245
        %2340 = vst.msk [vmem:[#allocation3 + $0x88] sm:$0xff] %vm295, %v2250
        %2341 = vst.msk [vmem:[#allocation3 + $0x90] sm:$0xff] %vm295, %v2255
        %2342 = vst.msk [vmem:[#allocation3 + $0x98] sm:$0xff] %vm295, %v2260
        %2343 = vst.msk [vmem:[#allocation3 + $0xa0] sm:$0xff] %vm295, %v2265
        %2344 = vst.msk [vmem:[#allocation3 + $0xa8] sm:$0xff] %vm295, %v2270
        %2345 = vst.msk [vmem:[#allocation3 + $0xb0] sm:$0xff] %vm295, %v2275
        %2346 = vst.msk [vmem:[#allocation3 + $0xb8] sm:$0xff] %vm295, %v2280
        %2347 = vst.msk [vmem:[#allocation3 + $0xc0] sm:$0xff] %vm295, %v2285
        %2348 = vst.msk [vmem:[#allocation3 + $0xc8] sm:$0xff] %vm295, %v2290
        %2349 = vst.msk [vmem:[#allocation3 + $0xd0] sm:$0xff] %vm295, %v2295
        %2350 = vst.msk [vmem:[#allocation3 + $0xd8] sm:$0xff] %vm295, %v2300
        %2351 = vst.msk [vmem:[#allocation3 + $0xe0] sm:$0xff] %vm295, %v2305
        %2352 = vst.msk [vmem:[#allocation3 + $0xe8] sm:$0xff] %vm295, %v2310
        %2353 = vst.msk [vmem:[#allocation3 + $0xf0] sm:$0xff] %vm295, %v2315
        %2354 = vst.msk [vmem:[#allocation3 + $0xf8] sm:$0xff] %vm295, %v2320
        %v2355 = vsel %vm295, %v2165, 0.0
        %v2356 = vsel %vm295, %v2170, 0.0
        %v2357 = vadd.f32 %v2355, %v2356
        %v2358 = vsel %vm295, %v2175, 0.0
        %v2359 = vadd.f32 %v2357, %v2358
        %v2360 = vsel %vm295, %v2180, 0.0
        %v2361 = vadd.f32 %v2359, %v2360
        %v2362 = vsel %vm295, %v2185, 0.0
        %v2363 = vadd.f32 %v2361, %v2362
        %v2364 = vsel %vm295, %v2190, 0.0
        %v2365 = vadd.f32 %v2363, %v2364
        %v2366 = vsel %vm295, %v2195, 0.0
        %v2367 = vadd.f32 %v2365, %v2366
        %v2368 = vsel %vm295, %v2200, 0.0
        %v2369 = vadd.f32 %v2367, %v2368
        %v2370 = vsel %vm295, %v2205, 0.0
        %v2371 = vadd.f32 %v2369, %v2370
        %v2372 = vsel %vm295, %v2210, 0.0
        %v2373 = vadd.f32 %v2371, %v2372
        %v2374 = vsel %vm295, %v2215, 0.0
        %v2375 = vadd.f32 %v2373, %v2374
        %v2376 = vsel %vm295, %v2220, 0.0
        %v2377 = vadd.f32 %v2375, %v2376
        %v2378 = vsel %vm295, %v2225, 0.0
        %v2379 = vadd.f32 %v2377, %v2378
        %v2380 = vsel %vm295, %v2230, 0.0
        %v2381 = vadd.f32 %v2379, %v2380
        %v2382 = vsel %vm295, %v2235, 0.0
        %v2383 = vadd.f32 %v2381, %v2382
        %v2384 = vsel %vm295, %v2240, 0.0
        %v2385 = vadd.f32 %v2383, %v2384
        %v2386 = vsel %vm295, %v2245, 0.0
        %v2387 = vadd.f32 %v2385, %v2386
        %v2388 = vsel %vm295, %v2250, 0.0
        %v2389 = vadd.f32 %v2387, %v2388
        %v2390 = vsel %vm295, %v2255, 0.0
        %v2391 = vadd.f32 %v2389, %v2390
        %v2392 = vsel %vm295, %v2260, 0.0
        %v2393 = vadd.f32 %v2391, %v2392
        %v2394 = vsel %vm295, %v2265, 0.0
        %v2395 = vadd.f32 %v2393, %v2394
        %v2396 = vsel %vm295, %v2270, 0.0
        %v2397 = vadd.f32 %v2395, %v2396
        %v2398 = vsel %vm295, %v2275, 0.0
        %v2399 = vadd.f32 %v2397, %v2398
        %v2400 = vsel %vm295, %v2280, 0.0
        %v2401 = vadd.f32 %v2399, %v2400
        %v2402 = vsel %vm295, %v2285, 0.0
        %v2403 = vadd.f32 %v2401, %v2402
        %v2404 = vsel %vm295, %v2290, 0.0
        %v2405 = vadd.f32 %v2403, %v2404
        %v2406 = vsel %vm295, %v2295, 0.0
        %v2407 = vadd.f32 %v2405, %v2406
        %v2408 = vsel %vm295, %v2300, 0.0
        %v2409 = vadd.f32 %v2407, %v2408
        %v2410 = vsel %vm295, %v2305, 0.0
        %v2411 = vadd.f32 %v2409, %v2410
        %v2412 = vsel %vm295, %v2310, 0.0
        %v2413 = vadd.f32 %v2411, %v2412
        %v2414 = vsel %vm295, %v2315, 0.0
        %v2415 = vadd.f32 %v2413, %v2414
        %v2416 = vsel %vm295, %v2320, 0.0
        %v2417 = vadd.f32 %v2415, %v2416
        %v2418 = vrot.slane %v2417, 4
        %v2419 = vadd.f32 %v2417, %v2418
        %v2420 = vrot.slane %v2419, 2
        %v2421 = vadd.f32 %v2419, %v2420
        %v2422 = vrot.slane %v2421, 1
        %v2423 = vadd.f32 %v2421, %v2422
        %v2424 = vadd.f32 %v2423, 0.0
        %v2425 = vmul.f32 %v2165, %v2165
        %v2426 = vmul.f32 %v2170, %v2170
        %v2427 = vmul.f32 %v2175, %v2175
        %v2428 = vmul.f32 %v2180, %v2180
        %v2429 = vmul.f32 %v2185, %v2185
        %v2430 = vmul.f32 %v2190, %v2190
        %v2431 = vmul.f32 %v2195, %v2195
        %v2432 = vmul.f32 %v2200, %v2200
        %v2433 = vmul.f32 %v2205, %v2205
        %v2434 = vmul.f32 %v2210, %v2210
        %v2435 = vmul.f32 %v2215, %v2215
        %v2436 = vmul.f32 %v2220, %v2220
        %v2437 = vmul.f32 %v2225, %v2225
        %v2438 = vmul.f32 %v2230, %v2230
        %v2439 = vmul.f32 %v2235, %v2235
        %v2440 = vmul.f32 %v2240, %v2240
        %v2441 = vmul.f32 %v2245, %v2245
        %v2442 = vmul.f32 %v2250, %v2250
        %v2443 = vmul.f32 %v2255, %v2255
        %v2444 = vmul.f32 %v2260, %v2260
        %v2445 = vmul.f32 %v2265, %v2265
        %v2446 = vmul.f32 %v2270, %v2270
        %v2447 = vmul.f32 %v2275, %v2275
        %v2448 = vmul.f32 %v2280, %v2280
        %v2449 = vmul.f32 %v2285, %v2285
        %v2450 = vmul.f32 %v2290, %v2290
        %v2451 = vmul.f32 %v2295, %v2295
        %v2452 = vmul.f32 %v2300, %v2300
        %v2453 = vmul.f32 %v2305, %v2305
        %v2454 = vmul.f32 %v2310, %v2310
        %v2455 = vmul.f32 %v2315, %v2315
        %v2456 = vmul.f32 %v2320, %v2320
        %v2457 = vsel %vm295, %v2425, 0.0
        %v2458 = vsel %vm295, %v2426, 0.0
        %v2459 = vadd.f32 %v2457, %v2458
        %v2460 = vsel %vm295, %v2427, 0.0
        %v2461 = vadd.f32 %v2459, %v2460
        %v2462 = vsel %vm295, %v2428, 0.0
        %v2463 = vadd.f32 %v2461, %v2462
        %v2464 = vsel %vm295, %v2429, 0.0
        %v2465 = vadd.f32 %v2463, %v2464
        %v2466 = vsel %vm295, %v2430, 0.0
        %v2467 = vadd.f32 %v2465, %v2466
        %v2468 = vsel %vm295, %v2431, 0.0
        %v2469 = vadd.f32 %v2467, %v2468
        %v2470 = vsel %vm295, %v2432, 0.0
        %v2471 = vadd.f32 %v2469, %v2470
        %v2472 = vsel %vm295, %v2433, 0.0
        %v2473 = vadd.f32 %v2471, %v2472
        %v2474 = vsel %vm295, %v2434, 0.0
        %v2475 = vadd.f32 %v2473, %v2474
        %v2476 = vsel %vm295, %v2435, 0.0
        %v2477 = vadd.f32 %v2475, %v2476
        %v2478 = vsel %vm295, %v2436, 0.0
        %v2479 = vadd.f32 %v2477, %v2478
        %v2480 = vsel %vm295, %v2437, 0.0
        %v2481 = vadd.f32 %v2479, %v2480
        %v2482 = vsel %vm295, %v2438, 0.0
        %v2483 = vadd.f32 %v2481, %v2482
        %v2484 = vsel %vm295, %v2439, 0.0
        %v2485 = vadd.f32 %v2483, %v2484
        %v2486 = vsel %vm295, %v2440, 0.0
        %v2487 = vadd.f32 %v2485, %v2486
        %v2488 = vsel %vm295, %v2441, 0.0
        %v2489 = vadd.f32 %v2487, %v2488
        %v2490 = vsel %vm295, %v2442, 0.0
        %v2491 = vadd.f32 %v2489, %v2490
        %v2492 = vsel %vm295, %v2443, 0.0
        %v2493 = vadd.f32 %v2491, %v2492
        %v2494 = vsel %vm295, %v2444, 0.0
        %v2495 = vadd.f32 %v2493, %v2494
        %v2496 = vsel %vm295, %v2445, 0.0
        %v2497 = vadd.f32 %v2495, %v2496
        %v2498 = vsel %vm295, %v2446, 0.0
        %v2499 = vadd.f32 %v2497, %v2498
        %v2500 = vsel %vm295, %v2447, 0.0
        %v2501 = vadd.f32 %v2499, %v2500
        %v2502 = vsel %vm295, %v2448, 0.0
        %v2503 = vadd.f32 %v2501, %v2502
        %v2504 = vsel %vm295, %v2449, 0.0
        %v2505 = vadd.f32 %v2503, %v2504
        %v2506 = vsel %vm295, %v2450, 0.0
        %v2507 = vadd.f32 %v2505, %v2506
        %v2508 = vsel %vm295, %v2451, 0.0
        %v2509 = vadd.f32 %v2507, %v2508
        %v2510 = vsel %vm295, %v2452, 0.0
        %v2511 = vadd.f32 %v2509, %v2510
        %v2512 = vsel %vm295, %v2453, 0.0
        %v2513 = vadd.f32 %v2511, %v2512
        %v2514 = vsel %vm295, %v2454, 0.0
        %v2515 = vadd.f32 %v2513, %v2514
        %v2516 = vsel %vm295, %v2455, 0.0
        %v2517 = vadd.f32 %v2515, %v2516
        %v2518 = vsel %vm295, %v2456, 0.0
        %v2519 = vadd.f32 %v2517, %v2518
        %v2520 = vrot.slane %v2519, 4
        %v2521 = vadd.f32 %v2519, %v2520
        %v2522 = vrot.slane %v2521, 2
        %v2523 = vadd.f32 %v2521, %v2522
        %v2524 = vrot.slane %v2523, 1
        %v2525 = vadd.f32 %v2523, %v2524
        %v2526 = vadd.f32 %v2525, 0.0
        %v2527 = vrcp.pop 256.0
        %v2528 = vmul.f32 %v2424, %v2527
        %v2529 = vmul.f32 %v2526, %v2527
        %v2530 = vmul.f32 %v2528, %v2528
        %v2531 = vsub.f32 %v2529, %v2530
        %v2532 = vmax.f32 %v2531, 0.0
        %v2533 = vadd.f32 %v2532, 1e-05
        %v2534 = vrsqrt.pop %v2533
        %v2535 = vmul.f32 %v258, %v2534
        %v2536 = vmul.f32 %v2528, %v2535
        %v2537 = vsub.f32 %v259, %v2536
        %v2538 = vld [vmem:[#allocation3] sm:$0xff]
        %v2539 = vld [vmem:[#allocation3 + $0x8] sm:$0xff]
        %v2540 = vld [vmem:[#allocation3 + $0x10] sm:$0xff]
        %v2541 = vld [vmem:[#allocation3 + $0x18] sm:$0xff]
        %v2542 = vld [vmem:[#allocation3 + $0x20] sm:$0xff]
        %v2543 = vld [vmem:[#allocation3 + $0x28] sm:$0xff]
        %v2544 = vld [vmem:[#allocation3 + $0x30] sm:$0xff]
        %v2545 = vld [vmem:[#allocation3 + $0x38] sm:$0xff]
        %v2546 = vld [vmem:[#allocation3 + $0x40] sm:$0xff]
        %v2547 = vld [vmem:[#allocation3 + $0x48] sm:$0xff]
        %v2548 = vld [vmem:[#allocation3 + $0x50] sm:$0xff]
        %v2549 = vld [vmem:[#allocation3 + $0x58] sm:$0xff]
        %v2550 = vld [vmem:[#allocation3 + $0x60] sm:$0xff]
        %v2551 = vld [vmem:[#allocation3 + $0x68] sm:$0xff]
        %v2552 = vld [vmem:[#allocation3 + $0x70] sm:$0xff]
        %v2553 = vld [vmem:[#allocation3 + $0x78] sm:$0xff]
        %v2554 = vld [vmem:[#allocation3 + $0x80] sm:$0xff]
        %v2555 = vld [vmem:[#allocation3 + $0x88] sm:$0xff]
        %v2556 = vld [vmem:[#allocation3 + $0x90] sm:$0xff]
        %v2557 = vld [vmem:[#allocation3 + $0x98] sm:$0xff]
        %v2558 = vld [vmem:[#allocation3 + $0xa0] sm:$0xff]
        %v2559 = vld [vmem:[#allocation3 + $0xa8] sm:$0xff]
        %v2560 = vld [vmem:[#allocation3 + $0xb0] sm:$0xff]
        %v2561 = vld [vmem:[#allocation3 + $0xb8] sm:$0xff]
        %v2562 = vld [vmem:[#allocation3 + $0xc0] sm:$0xff]
        %v2563 = vld [vmem:[#allocation3 + $0xc8] sm:$0xff]
        %v2564 = vld [vmem:[#allocation3 + $0xd0] sm:$0xff]
        %v2565 = vld [vmem:[#allocation3 + $0xd8] sm:$0xff]
        %v2566 = vld [vmem:[#allocation3 + $0xe0] sm:$0xff]
        %v2567 = vld [vmem:[#allocation3 + $0xe8] sm:$0xff]
        %v2568 = vld [vmem:[#allocation3 + $0xf0] sm:$0xff]
        %v2569 = vld [vmem:[#allocation3 + $0xf8] sm:$0xff]
        %v2570 = vlaneseq
        %v2571 = vshrl.u32 %v2570, 7
        %v2572 = vsub.s32 0, %v2571
        %v2573 = vrot.slane %v2535, %v2572
        %v2574 = vmul.f32 %v2538, %v2573
        %v2575 = vmul.f32 %v2539, %v2573
        %v2576 = vmul.f32 %v2540, %v2573
        %v2577 = vmul.f32 %v2541, %v2573
        %v2578 = vmul.f32 %v2542, %v2573
        %v2579 = vmul.f32 %v2543, %v2573
        %v2580 = vmul.f32 %v2544, %v2573
        %v2581 = vmul.f32 %v2545, %v2573
        %v2582 = vmul.f32 %v2546, %v2573
        %v2583 = vmul.f32 %v2547, %v2573
        %v2584 = vmul.f32 %v2548, %v2573
        %v2585 = vmul.f32 %v2549, %v2573
        %v2586 = vmul.f32 %v2550, %v2573
        %v2587 = vmul.f32 %v2551, %v2573
        %v2588 = vmul.f32 %v2552, %v2573
        %v2589 = vmul.f32 %v2553, %v2573
        %v2590 = vmul.f32 %v2554, %v2573
        %v2591 = vmul.f32 %v2555, %v2573
        %v2592 = vmul.f32 %v2556, %v2573
        %v2593 = vmul.f32 %v2557, %v2573
        %v2594 = vmul.f32 %v2558, %v2573
        %v2595 = vmul.f32 %v2559, %v2573
        %v2596 = vmul.f32 %v2560, %v2573
        %v2597 = vmul.f32 %v2561, %v2573
        %v2598 = vmul.f32 %v2562, %v2573
        %v2599 = vmul.f32 %v2563, %v2573
        %v2600 = vmul.f32 %v2564, %v2573
        %v2601 = vmul.f32 %v2565, %v2573
        %v2602 = vmul.f32 %v2566, %v2573
        %v2603 = vmul.f32 %v2567, %v2573
        %v2604 = vmul.f32 %v2568, %v2573
        %v2605 = vmul.f32 %v2569, %v2573
        %v2606 = vlaneseq
        %v2607 = vshrl.u32 %v2606, 7
        %v2608 = vsub.s32 0, %v2607
        %v2609 = vrot.slane %v2537, %v2608
        %v2610 = vadd.f32 %v2574, %v2609
        %v2611 = vadd.f32 %v2575, %v2609
        %v2612 = vadd.f32 %v2576, %v2609
        %v2613 = vadd.f32 %v2577, %v2609
        %v2614 = vadd.f32 %v2578, %v2609
        %v2615 = vadd.f32 %v2579, %v2609
        %v2616 = vadd.f32 %v2580, %v2609
        %v2617 = vadd.f32 %v2581, %v2609
        %v2618 = vadd.f32 %v2582, %v2609
        %v2619 = vadd.f32 %v2583, %v2609
        %v2620 = vadd.f32 %v2584, %v2609
        %v2621 = vadd.f32 %v2585, %v2609
        %v2622 = vadd.f32 %v2586, %v2609
        %v2623 = vadd.f32 %v2587, %v2609
        %v2624 = vadd.f32 %v2588, %v2609
        %v2625 = vadd.f32 %v2589, %v2609
        %v2626 = vadd.f32 %v2590, %v2609
        %v2627 = vadd.f32 %v2591, %v2609
        %v2628 = vadd.f32 %v2592, %v2609
        %v2629 = vadd.f32 %v2593, %v2609
        %v2630 = vadd.f32 %v2594, %v2609
        %v2631 = vadd.f32 %v2595, %v2609
        %v2632 = vadd.f32 %v2596, %v2609
        %v2633 = vadd.f32 %v2597, %v2609
        %v2634 = vadd.f32 %v2598, %v2609
        %v2635 = vadd.f32 %v2599, %v2609
        %v2636 = vadd.f32 %v2600, %v2609
        %v2637 = vadd.f32 %v2601, %v2609
        %v2638 = vadd.f32 %v2602, %v2609
        %v2639 = vadd.f32 %v2603, %v2609
        %v2640 = vadd.f32 %v2604, %v2609
        %v2641 = vadd.f32 %v2605, %v2609
        %v2642 = vmax.f32 %v2610, 0.0
        %v2643 = vmax.f32 %v2611, 0.0
        %v2644 = vmax.f32 %v2612, 0.0
        %v2645 = vmax.f32 %v2613, 0.0
        %v2646 = vmax.f32 %v2614, 0.0
        %v2647 = vmax.f32 %v2615, 0.0
        %v2648 = vmax.f32 %v2616, 0.0
        %v2649 = vmax.f32 %v2617, 0.0
        %v2650 = vmax.f32 %v2618, 0.0
        %v2651 = vmax.f32 %v2619, 0.0
        %v2652 = vmax.f32 %v2620, 0.0
        %v2653 = vmax.f32 %v2621, 0.0
        %v2654 = vmax.f32 %v2622, 0.0
        %v2655 = vmax.f32 %v2623, 0.0
        %v2656 = vmax.f32 %v2624, 0.0
        %v2657 = vmax.f32 %v2625, 0.0
        %v2658 = vmax.f32 %v2626, 0.0
        %v2659 = vmax.f32 %v2627, 0.0
        %v2660 = vmax.f32 %v2628, 0.0
        %v2661 = vmax.f32 %v2629, 0.0
        %v2662 = vmax.f32 %v2630, 0.0
        %v2663 = vmax.f32 %v2631, 0.0
        %v2664 = vmax.f32 %v2632, 0.0
        %v2665 = vmax.f32 %v2633, 0.0
        %v2666 = vmax.f32 %v2634, 0.0
        %v2667 = vmax.f32 %v2635, 0.0
        %v2668 = vmax.f32 %v2636, 0.0
        %v2669 = vmax.f32 %v2637, 0.0
        %v2670 = vmax.f32 %v2638, 0.0
        %v2671 = vmax.f32 %v2639, 0.0
        %v2672 = vmax.f32 %v2640, 0.0
        %v2673 = vmax.f32 %v2641, 0.0
        %2674 = vst.msk [vmem:[%s294 + $0x1] sm:$0xff] %vm295, %v2642
        %2675 = vst.msk [vmem:[%s294 + $0x9] sm:$0xff] %vm295, %v2643
        %2676 = vst.msk [vmem:[%s294 + $0x19] sm:$0xff] %vm295, %v2644
        %2677 = vst.msk [vmem:[%s294 + $0x21] sm:$0xff] %vm295, %v2645
        %2678 = vst.msk [vmem:[%s294 + $0x31] sm:$0xff] %vm295, %v2646
        %2679 = vst.msk [vmem:[%s294 + $0x39] sm:$0xff] %vm295, %v2647
        %2680 = vst.msk [vmem:[%s294 + $0x49] sm:$0xff] %vm295, %v2648
        %2681 = vst.msk [vmem:[%s294 + $0x51] sm:$0xff] %vm295, %v2649
        %2682 = vst.msk [vmem:[%s294 + $0x61] sm:$0xff] %vm295, %v2650
        %2683 = vst.msk [vmem:[%s294 + $0x69] sm:$0xff] %vm295, %v2651
        %2684 = vst.msk [vmem:[%s294 + $0x79] sm:$0xff] %vm295, %v2652
        %2685 = vst.msk [vmem:[%s294 + $0x81] sm:$0xff] %vm295, %v2653
        %2686 = vst.msk [vmem:[%s294 + $0x91] sm:$0xff] %vm295, %v2654
        %2687 = vst.msk [vmem:[%s294 + $0x99] sm:$0xff] %vm295, %v2655
        %2688 = vst.msk [vmem:[%s294 + $0xa9] sm:$0xff] %vm295, %v2656
        %2689 = vst.msk [vmem:[%s294 + $0xb1] sm:$0xff] %vm295, %v2657
        %2690 = vst.msk [vmem:[%s294 + $0xc1] sm:$0xff] %vm295, %v2658
        %2691 = vst.msk [vmem:[%s294 + $0xc9] sm:$0xff] %vm295, %v2659
        %2692 = vst.msk [vmem:[%s294 + $0xd9] sm:$0xff] %vm295, %v2660
        %2693 = vst.msk [vmem:[%s294 + $0xe1] sm:$0xff] %vm295, %v2661
        %2694 = vst.msk [vmem:[%s294 + $0xf1] sm:$0xff] %vm295, %v2662
        %2695 = vst.msk [vmem:[%s294 + $0xf9] sm:$0xff] %vm295, %v2663
        %2696 = vst.msk [vmem:[%s294 + $0x109] sm:$0xff] %vm295, %v2664
        %2697 = vst.msk [vmem:[%s294 + $0x111] sm:$0xff] %vm295, %v2665
        %2698 = vst.msk [vmem:[%s294 + $0x121] sm:$0xff] %vm295, %v2666
        %2699 = vst.msk [vmem:[%s294 + $0x129] sm:$0xff] %vm295, %v2667
        %2700 = vst.msk [vmem:[%s294 + $0x139] sm:$0xff] %vm295, %v2668
        %2701 = vst.msk [vmem:[%s294 + $0x141] sm:$0xff] %vm295, %v2669
        %2702 = vst.msk [vmem:[%s294 + $0x151] sm:$0xff] %vm295, %v2670
        %2703 = vst.msk [vmem:[%s294 + $0x159] sm:$0xff] %vm295, %v2671
        %2704 = vst.msk [vmem:[%s294 + $0x169] sm:$0xff] %vm295, %v2672
        %2705 = vst.msk [vmem:[%s294 + $0x171] sm:$0xff] %vm295, %v2673
        %v2706 = vld [vmem:[%s328] sm:$0xff]
        %v2707 = vld [vmem:[%s328 + $0x8] sm:$0xff]
        %v2708 = vld [vmem:[%s328 + $0x10] sm:$0x3]
        %2709 = vst.msk [vmem:[#allocation2] sm:$0xff] %vm295, %v2706
        %2710 = vst.msk [vmem:[#allocation2 + $0x8] sm:$0xff] %vm295, %v2707
        %2711 = vst.msk [vmem:[#allocation2 + $0x10] sm:$0x3] %vm334, %v2708
        %v2712 = vld [vmem:[%s336] sm:$0xff]
        %v2713 = vld [vmem:[%s336 + $0x8] sm:$0xff]
        %v2714 = vld [vmem:[%s336 + $0x10] sm:$0x3]
        %2715 = vst.msk [vmem:[%s340] sm:$0xff] %vm295, %v2712
        %2716 = vst.msk [vmem:[%s340 + $0x8] sm:$0xff] %vm295, %v2713
        %2717 = vst.msk [vmem:[%s340 + $0x10] sm:$0x3] %vm334, %v2714
        %v2718 = vld [vmem:[#allocation2 + $0x2] sm:$0x1]
        %v2719 = vld [vmem:[#allocation2 + $0x1a] sm:$0x1]
        %v2720 = vld [vmem:[#allocation2 + $0x32] sm:$0x1]
        %v2721 = vld [vmem:[#allocation2 + $0x4a] sm:$0x1]
        %v2722 = vld [vmem:[#allocation2 + $0x62] sm:$0x1]
        %v2723 = vld [vmem:[#allocation2 + $0x7a] sm:$0x1]
        %v2724 = vld [vmem:[#allocation2 + $0x92] sm:$0x1]
        %v2725 = vld [vmem:[#allocation2 + $0xaa] sm:$0x1]
        %v2726 = vld [vmem:[#allocation2 + $0xc2] sm:$0x1]
        %v2727 = vld [vmem:[#allocation2 + $0xda] sm:$0x1]
        %v2728 = vld [vmem:[#allocation2 + $0xf2] sm:$0x1]
        %v2729 = vld [vmem:[#allocation2 + $0x10a] sm:$0x1]
        %v2730 = vld [vmem:[#allocation2 + $0x122] sm:$0x1]
        %v2731 = vld [vmem:[#allocation2 + $0x13a] sm:$0x1]
        %v2732 = vld [vmem:[#allocation2 + $0x152] sm:$0x1]
        %v2733 = vld [vmem:[#allocation2 + $0x16a] sm:$0x1]
        %v2734 = vld [vmem:[#allocation2 + $0x182] sm:$0x1]
        %v2735 = vld [vmem:[#allocation2 + $0x19a] sm:$0x1]
        %2736 = vst.msk [vmem:[#allocation2] sm:$0x1] %vm362, %v2718
        %2737 = vst.msk [vmem:[#allocation2 + $0x18] sm:$0x1] %vm362, %v2719
        %2738 = vst.msk [vmem:[#allocation2 + $0x30] sm:$0x1] %vm362, %v2720
        %2739 = vst.msk [vmem:[#allocation2 + $0x48] sm:$0x1] %vm362, %v2721
        %2740 = vst.msk [vmem:[#allocation2 + $0x60] sm:$0x1] %vm362, %v2722
        %2741 = vst.msk [vmem:[#allocation2 + $0x78] sm:$0x1] %vm362, %v2723
        %2742 = vst.msk [vmem:[#allocation2 + $0x90] sm:$0x1] %vm362, %v2724
        %2743 = vst.msk [vmem:[#allocation2 + $0xa8] sm:$0x1] %vm362, %v2725
        %2744 = vst.msk [vmem:[#allocation2 + $0xc0] sm:$0x1] %vm362, %v2726
        %2745 = vst.msk [vmem:[#allocation2 + $0xd8] sm:$0x1] %vm362, %v2727
        %2746 = vst.msk [vmem:[#allocation2 + $0xf0] sm:$0x1] %vm362, %v2728
        %2747 = vst.msk [vmem:[#allocation2 + $0x108] sm:$0x1] %vm362, %v2729
        %2748 = vst.msk [vmem:[#allocation2 + $0x120] sm:$0x1] %vm362, %v2730
        %2749 = vst.msk [vmem:[#allocation2 + $0x138] sm:$0x1] %vm362, %v2731
        %2750 = vst.msk [vmem:[#allocation2 + $0x150] sm:$0x1] %vm362, %v2732
        %2751 = vst.msk [vmem:[#allocation2 + $0x168] sm:$0x1] %vm362, %v2733
        %2752 = vst.msk [vmem:[#allocation2 + $0x180] sm:$0x1] %vm362, %v2734
        %2753 = vst.msk [vmem:[#allocation2 + $0x198] sm:$0x1] %vm362, %v2735
        %v2754 = vld [vmem:[#allocation2 + $0xf] sm:$0x1]
        %v2755 = vld [vmem:[#allocation2 + $0x27] sm:$0x1]
        %v2756 = vld [vmem:[#allocation2 + $0x3f] sm:$0x1]
        %v2757 = vld [vmem:[#allocation2 + $0x57] sm:$0x1]
        %v2758 = vld [vmem:[#allocation2 + $0x6f] sm:$0x1]
        %v2759 = vld [vmem:[#allocation2 + $0x87] sm:$0x1]
        %v2760 = vld [vmem:[#allocation2 + $0x9f] sm:$0x1]
        %v2761 = vld [vmem:[#allocation2 + $0xb7] sm:$0x1]
        %v2762 = vld [vmem:[#allocation2 + $0xcf] sm:$0x1]
        %v2763 = vld [vmem:[#allocation2 + $0xe7] sm:$0x1]
        %v2764 = vld [vmem:[#allocation2 + $0xff] sm:$0x1]
        %v2765 = vld [vmem:[#allocation2 + $0x117] sm:$0x1]
        %v2766 = vld [vmem:[#allocation2 + $0x12f] sm:$0x1]
        %v2767 = vld [vmem:[#allocation2 + $0x147] sm:$0x1]
        %v2768 = vld [vmem:[#allocation2 + $0x15f] sm:$0x1]
        %v2769 = vld [vmem:[#allocation2 + $0x177] sm:$0x1]
        %v2770 = vld [vmem:[#allocation2 + $0x18f] sm:$0x1]
        %v2771 = vld [vmem:[#allocation2 + $0x1a7] sm:$0x1]
        %2772 = vst.msk [vmem:[#allocation2 + $0x11] sm:$0x1] %vm362, %v2754
        %2773 = vst.msk [vmem:[#allocation2 + $0x29] sm:$0x1] %vm362, %v2755
        %2774 = vst.msk [vmem:[#allocation2 + $0x41] sm:$0x1] %vm362, %v2756
        %2775 = vst.msk [vmem:[#allocation2 + $0x59] sm:$0x1] %vm362, %v2757
        %2776 = vst.msk [vmem:[#allocation2 + $0x71] sm:$0x1] %vm362, %v2758
        %2777 = vst.msk [vmem:[#allocation2 + $0x89] sm:$0x1] %vm362, %v2759
        %2778 = vst.msk [vmem:[#allocation2 + $0xa1] sm:$0x1] %vm362, %v2760
        %2779 = vst.msk [vmem:[#allocation2 + $0xb9] sm:$0x1] %vm362, %v2761
        %2780 = vst.msk [vmem:[#allocation2 + $0xd1] sm:$0x1] %vm362, %v2762
        %2781 = vst.msk [vmem:[#allocation2 + $0xe9] sm:$0x1] %vm362, %v2763
        %2782 = vst.msk [vmem:[#allocation2 + $0x101] sm:$0x1] %vm362, %v2764
        %2783 = vst.msk [vmem:[#allocation2 + $0x119] sm:$0x1] %vm362, %v2765
        %2784 = vst.msk [vmem:[#allocation2 + $0x131] sm:$0x1] %vm362, %v2766
        %2785 = vst.msk [vmem:[#allocation2 + $0x149] sm:$0x1] %vm362, %v2767
        %2786 = vst.msk [vmem:[#allocation2 + $0x161] sm:$0x1] %vm362, %v2768
        %2787 = vst.msk [vmem:[#allocation2 + $0x179] sm:$0x1] %vm362, %v2769
        %2788 = vst.msk [vmem:[#allocation2 + $0x191] sm:$0x1] %vm362, %v2770
        %2789 = vst.msk [vmem:[#allocation2 + $0x1a9] sm:$0x1] %vm362, %v2771
        %v2790 = vld [vmem:[#allocation2] sm:$0xff]
        %v2791 = vld [vmem:[#allocation2 + $0x8] sm:$0xff]
        %v2792 = vld [vmem:[#allocation2 + $0x18] sm:$0xff]
        %v2793 = vld [vmem:[#allocation2 + $0x20] sm:$0xff]
        %v2794 = vld [vmem:[#allocation2 + $0x30] sm:$0xff]
        %v2795 = vld [vmem:[#allocation2 + $0x38] sm:$0xff]
        %v2796 = vld [vmem:[#allocation2 + $0x48] sm:$0xff]
        %v2797 = vld [vmem:[#allocation2 + $0x50] sm:$0xff]
        %v2798 = vld [vmem:[#allocation2 + $0x60] sm:$0xff]
        %v2799 = vld [vmem:[#allocation2 + $0x68] sm:$0xff]
        %v2800 = vld [vmem:[#allocation2 + $0x78] sm:$0xff]
        %v2801 = vld [vmem:[#allocation2 + $0x80] sm:$0xff]
        %v2802 = vld [vmem:[#allocation2 + $0x90] sm:$0xff]
        %v2803 = vld [vmem:[#allocation2 + $0x98] sm:$0xff]
        %v2804 = vld [vmem:[#allocation2 + $0xa8] sm:$0xff]
        %v2805 = vld [vmem:[#allocation2 + $0xb0] sm:$0xff]
        %v2806 = vld [vmem:[#allocation2 + $0xc0] sm:$0xff]
        %v2807 = vld [vmem:[#allocation2 + $0xc8] sm:$0xff]
        %v2808 = vld [vmem:[#allocation2 + $0xd8] sm:$0xff]
        %v2809 = vld [vmem:[#allocation2 + $0xe0] sm:$0xff]
        %v2810 = vld [vmem:[#allocation2 + $0xf0] sm:$0xff]
        %v2811 = vld [vmem:[#allocation2 + $0xf8] sm:$0xff]
        %v2812 = vld [vmem:[#allocation2 + $0x108] sm:$0xff]
        %v2813 = vld [vmem:[#allocation2 + $0x110] sm:$0xff]
        %v2814 = vld [vmem:[#allocation2 + $0x120] sm:$0xff]
        %v2815 = vld [vmem:[#allocation2 + $0x128] sm:$0xff]
        %v2816 = vld [vmem:[#allocation2 + $0x138] sm:$0xff]
        %v2817 = vld [vmem:[#allocation2 + $0x140] sm:$0xff]
        %v2818 = vld [vmem:[#allocation2 + $0x150] sm:$0xff]
        %v2819 = vld [vmem:[#allocation2 + $0x158] sm:$0xff]
        %v2820 = vld [vmem:[#allocation2 + $0x168] sm:$0xff]
        %v2821 = vld [vmem:[#allocation2 + $0x170] sm:$0xff]
        %v2822 = vld [vmem:[#allocation2 + $0x1] sm:$0xff]
        %v2823 = vld [vmem:[#allocation2 + $0x9] sm:$0xff]
        %v2824 = vld [vmem:[#allocation2 + $0x19] sm:$0xff]
        %v2825 = vld [vmem:[#allocation2 + $0x21] sm:$0xff]
        %v2826 = vld [vmem:[#allocation2 + $0x31] sm:$0xff]
        %v2827 = vld [vmem:[#allocation2 + $0x39] sm:$0xff]
        %v2828 = vld [vmem:[#allocation2 + $0x49] sm:$0xff]
        %v2829 = vld [vmem:[#allocation2 + $0x51] sm:$0xff]
        %v2830 = vld [vmem:[#allocation2 + $0x61] sm:$0xff]
        %v2831 = vld [vmem:[#allocation2 + $0x69] sm:$0xff]
        %v2832 = vld [vmem:[#allocation2 + $0x79] sm:$0xff]
        %v2833 = vld [vmem:[#allocation2 + $0x81] sm:$0xff]
        %v2834 = vld [vmem:[#allocation2 + $0x91] sm:$0xff]
        %v2835 = vld [vmem:[#allocation2 + $0x99] sm:$0xff]
        %v2836 = vld [vmem:[#allocation2 + $0xa9] sm:$0xff]
        %v2837 = vld [vmem:[#allocation2 + $0xb1] sm:$0xff]
        %v2838 = vld [vmem:[#allocation2 + $0xc1] sm:$0xff]
        %v2839 = vld [vmem:[#allocation2 + $0xc9] sm:$0xff]
        %v2840 = vld [vmem:[#allocation2 + $0xd9] sm:$0xff]
        %v2841 = vld [vmem:[#allocation2 + $0xe1] sm:$0xff]
        %v2842 = vld [vmem:[#allocation2 + $0xf1] sm:$0xff]
        %v2843 = vld [vmem:[#allocation2 + $0xf9] sm:$0xff]
        %v2844 = vld [vmem:[#allocation2 + $0x109] sm:$0xff]
        %v2845 = vld [vmem:[#allocation2 + $0x111] sm:$0xff]
        %v2846 = vld [vmem:[#allocation2 + $0x121] sm:$0xff]
        %v2847 = vld [vmem:[#allocation2 + $0x129] sm:$0xff]
        %v2848 = vld [vmem:[#allocation2 + $0x139] sm:$0xff]
        %v2849 = vld [vmem:[#allocation2 + $0x141] sm:$0xff]
        %v2850 = vld [vmem:[#allocation2 + $0x151] sm:$0xff]
        %v2851 = vld [vmem:[#allocation2 + $0x159] sm:$0xff]
        %v2852 = vld [vmem:[#allocation2 + $0x169] sm:$0xff]
        %v2853 = vld [vmem:[#allocation2 + $0x171] sm:$0xff]
        %v2854 = vld [vmem:[#allocation2 + $0x2] sm:$0xff]
        %v2855 = vld [vmem:[#allocation2 + $0xa] sm:$0xff]
        %v2856 = vld [vmem:[#allocation2 + $0x1a] sm:$0xff]
        %v2857 = vld [vmem:[#allocation2 + $0x22] sm:$0xff]
        %v2858 = vld [vmem:[#allocation2 + $0x32] sm:$0xff]
        %v2859 = vld [vmem:[#allocation2 + $0x3a] sm:$0xff]
        %v2860 = vld [vmem:[#allocation2 + $0x4a] sm:$0xff]
        %v2861 = vld [vmem:[#allocation2 + $0x52] sm:$0xff]
        %v2862 = vld [vmem:[#allocation2 + $0x62] sm:$0xff]
        %v2863 = vld [vmem:[#allocation2 + $0x6a] sm:$0xff]
        %v2864 = vld [vmem:[#allocation2 + $0x7a] sm:$0xff]
        %v2865 = vld [vmem:[#allocation2 + $0x82] sm:$0xff]
        %v2866 = vld [vmem:[#allocation2 + $0x92] sm:$0xff]
        %v2867 = vld [vmem:[#allocation2 + $0x9a] sm:$0xff]
        %v2868 = vld [vmem:[#allocation2 + $0xaa] sm:$0xff]
        %v2869 = vld [vmem:[#allocation2 + $0xb2] sm:$0xff]
        %v2870 = vld [vmem:[#allocation2 + $0xc2] sm:$0xff]
        %v2871 = vld [vmem:[#allocation2 + $0xca] sm:$0xff]
        %v2872 = vld [vmem:[#allocation2 + $0xda] sm:$0xff]
        %v2873 = vld [vmem:[#allocation2 + $0xe2] sm:$0xff]
        %v2874 = vld [vmem:[#allocation2 + $0xf2] sm:$0xff]
        %v2875 = vld [vmem:[#allocation2 + $0xfa] sm:$0xff]
        %v2876 = vld [vmem:[#allocation2 + $0x10a] sm:$0xff]
        %v2877 = vld [vmem:[#allocation2 + $0x112] sm:$0xff]
        %v2878 = vld [vmem:[#allocation2 + $0x122] sm:$0xff]
        %v2879 = vld [vmem:[#allocation2 + $0x12a] sm:$0xff]
        %v2880 = vld [vmem:[#allocation2 + $0x13a] sm:$0xff]
        %v2881 = vld [vmem:[#allocation2 + $0x142] sm:$0xff]
        %v2882 = vld [vmem:[#allocation2 + $0x152] sm:$0xff]
        %v2883 = vld [vmem:[#allocation2 + $0x15a] sm:$0xff]
        %v2884 = vld [vmem:[#allocation2 + $0x16a] sm:$0xff]
        %v2885 = vld [vmem:[#allocation2 + $0x172] sm:$0xff]
        %v2886 = vld [vmem:[%s294] sm:$0xff]
        %v2887 = vld [vmem:[%s294 + $0x8] sm:$0xff]
        %v2888 = vld [vmem:[%s294 + $0x18] sm:$0xff]
        %v2889 = vld [vmem:[%s294 + $0x20] sm:$0xff]
        %v2890 = vld [vmem:[%s294 + $0x30] sm:$0xff]
        %v2891 = vld [vmem:[%s294 + $0x38] sm:$0xff]
        %v2892 = vld [vmem:[%s294 + $0x48] sm:$0xff]
        %v2893 = vld [vmem:[%s294 + $0x50] sm:$0xff]
        %v2894 = vld [vmem:[%s294 + $0x60] sm:$0xff]
        %v2895 = vld [vmem:[%s294 + $0x68] sm:$0xff]
        %v2896 = vld [vmem:[%s294 + $0x78] sm:$0xff]
        %v2897 = vld [vmem:[%s294 + $0x80] sm:$0xff]
        %v2898 = vld [vmem:[%s294 + $0x90] sm:$0xff]
        %v2899 = vld [vmem:[%s294 + $0x98] sm:$0xff]
        %v2900 = vld [vmem:[%s294 + $0xa8] sm:$0xff]
        %v2901 = vld [vmem:[%s294 + $0xb0] sm:$0xff]
        %v2902 = vld [vmem:[%s294 + $0xc0] sm:$0xff]
        %v2903 = vld [vmem:[%s294 + $0xc8] sm:$0xff]
        %v2904 = vld [vmem:[%s294 + $0xd8] sm:$0xff]
        %v2905 = vld [vmem:[%s294 + $0xe0] sm:$0xff]
        %v2906 = vld [vmem:[%s294 + $0xf0] sm:$0xff]
        %v2907 = vld [vmem:[%s294 + $0xf8] sm:$0xff]
        %v2908 = vld [vmem:[%s294 + $0x108] sm:$0xff]
        %v2909 = vld [vmem:[%s294 + $0x110] sm:$0xff]
        %v2910 = vld [vmem:[%s294 + $0x120] sm:$0xff]
        %v2911 = vld [vmem:[%s294 + $0x128] sm:$0xff]
        %v2912 = vld [vmem:[%s294 + $0x138] sm:$0xff]
        %v2913 = vld [vmem:[%s294 + $0x140] sm:$0xff]
        %v2914 = vld [vmem:[%s294 + $0x150] sm:$0xff]
        %v2915 = vld [vmem:[%s294 + $0x158] sm:$0xff]
        %v2916 = vld [vmem:[%s294 + $0x168] sm:$0xff]
        %v2917 = vld [vmem:[%s294 + $0x170] sm:$0xff]
        %v2918 = vld [vmem:[%s294 + $0x1] sm:$0xff]
        %v2919 = vld [vmem:[%s294 + $0x9] sm:$0xff]
        %v2920 = vld [vmem:[%s294 + $0x19] sm:$0xff]
        %v2921 = vld [vmem:[%s294 + $0x21] sm:$0xff]
        %v2922 = vld [vmem:[%s294 + $0x31] sm:$0xff]
        %v2923 = vld [vmem:[%s294 + $0x39] sm:$0xff]
        %v2924 = vld [vmem:[%s294 + $0x49] sm:$0xff]
        %v2925 = vld [vmem:[%s294 + $0x51] sm:$0xff]
        %v2926 = vld [vmem:[%s294 + $0x61] sm:$0xff]
        %v2927 = vld [vmem:[%s294 + $0x69] sm:$0xff]
        %v2928 = vld [vmem:[%s294 + $0x79] sm:$0xff]
        %v2929 = vld [vmem:[%s294 + $0x81] sm:$0xff]
        %v2930 = vld [vmem:[%s294 + $0x91] sm:$0xff]
        %v2931 = vld [vmem:[%s294 + $0x99] sm:$0xff]
        %v2932 = vld [vmem:[%s294 + $0xa9] sm:$0xff]
        %v2933 = vld [vmem:[%s294 + $0xb1] sm:$0xff]
        %v2934 = vld [vmem:[%s294 + $0xc1] sm:$0xff]
        %v2935 = vld [vmem:[%s294 + $0xc9] sm:$0xff]
        %v2936 = vld [vmem:[%s294 + $0xd9] sm:$0xff]
        %v2937 = vld [vmem:[%s294 + $0xe1] sm:$0xff]
        %v2938 = vld [vmem:[%s294 + $0xf1] sm:$0xff]
        %v2939 = vld [vmem:[%s294 + $0xf9] sm:$0xff]
        %v2940 = vld [vmem:[%s294 + $0x109] sm:$0xff]
        %v2941 = vld [vmem:[%s294 + $0x111] sm:$0xff]
        %v2942 = vld [vmem:[%s294 + $0x121] sm:$0xff]
        %v2943 = vld [vmem:[%s294 + $0x129] sm:$0xff]
        %v2944 = vld [vmem:[%s294 + $0x139] sm:$0xff]
        %v2945 = vld [vmem:[%s294 + $0x141] sm:$0xff]
        %v2946 = vld [vmem:[%s294 + $0x151] sm:$0xff]
        %v2947 = vld [vmem:[%s294 + $0x159] sm:$0xff]
        %v2948 = vld [vmem:[%s294 + $0x169] sm:$0xff]
        %v2949 = vld [vmem:[%s294 + $0x171] sm:$0xff]
        %v2950 = vld [vmem:[%s294 + $0x2] sm:$0xff]
        %v2951 = vld [vmem:[%s294 + $0xa] sm:$0xff]
        %v2952 = vld [vmem:[%s294 + $0x1a] sm:$0xff]
        %v2953 = vld [vmem:[%s294 + $0x22] sm:$0xff]
        %v2954 = vld [vmem:[%s294 + $0x32] sm:$0xff]
        %v2955 = vld [vmem:[%s294 + $0x3a] sm:$0xff]
        %v2956 = vld [vmem:[%s294 + $0x4a] sm:$0xff]
        %v2957 = vld [vmem:[%s294 + $0x52] sm:$0xff]
        %v2958 = vld [vmem:[%s294 + $0x62] sm:$0xff]
        %v2959 = vld [vmem:[%s294 + $0x6a] sm:$0xff]
        %v2960 = vld [vmem:[%s294 + $0x7a] sm:$0xff]
        %v2961 = vld [vmem:[%s294 + $0x82] sm:$0xff]
        %v2962 = vld [vmem:[%s294 + $0x92] sm:$0xff]
        %v2963 = vld [vmem:[%s294 + $0x9a] sm:$0xff]
        %v2964 = vld [vmem:[%s294 + $0xaa] sm:$0xff]
        %v2965 = vld [vmem:[%s294 + $0xb2] sm:$0xff]
        %v2966 = vld [vmem:[%s294 + $0xc2] sm:$0xff]
        %v2967 = vld [vmem:[%s294 + $0xca] sm:$0xff]
        %v2968 = vld [vmem:[%s294 + $0xda] sm:$0xff]
        %v2969 = vld [vmem:[%s294 + $0xe2] sm:$0xff]
        %v2970 = vld [vmem:[%s294 + $0xf2] sm:$0xff]
        %v2971 = vld [vmem:[%s294 + $0xfa] sm:$0xff]
        %v2972 = vld [vmem:[%s294 + $0x10a] sm:$0xff]
        %v2973 = vld [vmem:[%s294 + $0x112] sm:$0xff]
        %v2974 = vld [vmem:[%s294 + $0x122] sm:$0xff]
        %v2975 = vld [vmem:[%s294 + $0x12a] sm:$0xff]
        %v2976 = vld [vmem:[%s294 + $0x13a] sm:$0xff]
        %v2977 = vld [vmem:[%s294 + $0x142] sm:$0xff]
        %v2978 = vld [vmem:[%s294 + $0x152] sm:$0xff]
        %v2979 = vld [vmem:[%s294 + $0x15a] sm:$0xff]
        %v2980 = vld [vmem:[%s294 + $0x16a] sm:$0xff]
        %v2981 = vld [vmem:[%s294 + $0x172] sm:$0xff]
        %v2982 = vld [vmem:[%s328] sm:$0xff]
        %v2983 = vld [vmem:[%s328 + $0x8] sm:$0xff]
        %v2984 = vld [vmem:[%s328 + $0x18] sm:$0xff]
        %v2985 = vld [vmem:[%s328 + $0x20] sm:$0xff]
        %v2986 = vld [vmem:[%s328 + $0x30] sm:$0xff]
        %v2987 = vld [vmem:[%s328 + $0x38] sm:$0xff]
        %v2988 = vld [vmem:[%s328 + $0x48] sm:$0xff]
        %v2989 = vld [vmem:[%s328 + $0x50] sm:$0xff]
        %v2990 = vld [vmem:[%s328 + $0x60] sm:$0xff]
        %v2991 = vld [vmem:[%s328 + $0x68] sm:$0xff]
        %v2992 = vld [vmem:[%s328 + $0x78] sm:$0xff]
        %v2993 = vld [vmem:[%s328 + $0x80] sm:$0xff]
        %v2994 = vld [vmem:[%s328 + $0x90] sm:$0xff]
        %v2995 = vld [vmem:[%s328 + $0x98] sm:$0xff]
        %v2996 = vld [vmem:[%s328 + $0xa8] sm:$0xff]
        %v2997 = vld [vmem:[%s328 + $0xb0] sm:$0xff]
        %v2998 = vld [vmem:[%s328 + $0xc0] sm:$0xff]
        %v2999 = vld [vmem:[%s328 + $0xc8] sm:$0xff]
        %v3000 = vld [vmem:[%s328 + $0xd8] sm:$0xff]
        %v3001 = vld [vmem:[%s328 + $0xe0] sm:$0xff]
        %v3002 = vld [vmem:[%s328 + $0xf0] sm:$0xff]
        %v3003 = vld [vmem:[%s328 + $0xf8] sm:$0xff]
        %v3004 = vld [vmem:[%s328 + $0x108] sm:$0xff]
        %v3005 = vld [vmem:[%s328 + $0x110] sm:$0xff]
        %v3006 = vld [vmem:[%s328 + $0x120] sm:$0xff]
        %v3007 = vld [vmem:[%s328 + $0x128] sm:$0xff]
        %v3008 = vld [vmem:[%s328 + $0x138] sm:$0xff]
        %v3009 = vld [vmem:[%s328 + $0x140] sm:$0xff]
        %v3010 = vld [vmem:[%s328 + $0x150] sm:$0xff]
        %v3011 = vld [vmem:[%s328 + $0x158] sm:$0xff]
        %v3012 = vld [vmem:[%s328 + $0x168] sm:$0xff]
        %v3013 = vld [vmem:[%s328 + $0x170] sm:$0xff]
        %v3014 = vld [vmem:[%s328 + $0x1] sm:$0xff]
        %v3015 = vld [vmem:[%s328 + $0x9] sm:$0xff]
        %v3016 = vld [vmem:[%s328 + $0x19] sm:$0xff]
        %v3017 = vld [vmem:[%s328 + $0x21] sm:$0xff]
        %v3018 = vld [vmem:[%s328 + $0x31] sm:$0xff]
        %v3019 = vld [vmem:[%s328 + $0x39] sm:$0xff]
        %v3020 = vld [vmem:[%s328 + $0x49] sm:$0xff]
        %v3021 = vld [vmem:[%s328 + $0x51] sm:$0xff]
        %v3022 = vld [vmem:[%s328 + $0x61] sm:$0xff]
        %v3023 = vld [vmem:[%s328 + $0x69] sm:$0xff]
        %v3024 = vld [vmem:[%s328 + $0x79] sm:$0xff]
        %v3025 = vld [vmem:[%s328 + $0x81] sm:$0xff]
        %v3026 = vld [vmem:[%s328 + $0x91] sm:$0xff]
        %v3027 = vld [vmem:[%s328 + $0x99] sm:$0xff]
        %v3028 = vld [vmem:[%s328 + $0xa9] sm:$0xff]
        %v3029 = vld [vmem:[%s328 + $0xb1] sm:$0xff]
        %v3030 = vld [vmem:[%s328 + $0xc1] sm:$0xff]
        %v3031 = vld [vmem:[%s328 + $0xc9] sm:$0xff]
        %v3032 = vld [vmem:[%s328 + $0xd9] sm:$0xff]
        %v3033 = vld [vmem:[%s328 + $0xe1] sm:$0xff]
        %v3034 = vld [vmem:[%s328 + $0xf1] sm:$0xff]
        %v3035 = vld [vmem:[%s328 + $0xf9] sm:$0xff]
        %v3036 = vld [vmem:[%s328 + $0x109] sm:$0xff]
        %v3037 = vld [vmem:[%s328 + $0x111] sm:$0xff]
        %v3038 = vld [vmem:[%s328 + $0x121] sm:$0xff]
        %v3039 = vld [vmem:[%s328 + $0x129] sm:$0xff]
        %v3040 = vld [vmem:[%s328 + $0x139] sm:$0xff]
        %v3041 = vld [vmem:[%s328 + $0x141] sm:$0xff]
        %v3042 = vld [vmem:[%s328 + $0x151] sm:$0xff]
        %v3043 = vld [vmem:[%s328 + $0x159] sm:$0xff]
        %v3044 = vld [vmem:[%s328 + $0x169] sm:$0xff]
        %v3045 = vld [vmem:[%s328 + $0x171] sm:$0xff]
        %v3046 = vld [vmem:[%s328 + $0x2] sm:$0xff]
        %v3047 = vld [vmem:[%s328 + $0xa] sm:$0xff]
        %v3048 = vld [vmem:[%s328 + $0x1a] sm:$0xff]
        %v3049 = vld [vmem:[%s328 + $0x22] sm:$0xff]
        %v3050 = vld [vmem:[%s328 + $0x32] sm:$0xff]
        %v3051 = vld [vmem:[%s328 + $0x3a] sm:$0xff]
        %v3052 = vld [vmem:[%s328 + $0x4a] sm:$0xff]
        %v3053 = vld [vmem:[%s328 + $0x52] sm:$0xff]
        %v3054 = vld [vmem:[%s328 + $0x62] sm:$0xff]
        %v3055 = vld [vmem:[%s328 + $0x6a] sm:$0xff]
        %v3056 = vld [vmem:[%s328 + $0x7a] sm:$0xff]
        %v3057 = vld [vmem:[%s328 + $0x82] sm:$0xff]
        %v3058 = vld [vmem:[%s328 + $0x92] sm:$0xff]
        %v3059 = vld [vmem:[%s328 + $0x9a] sm:$0xff]
        %v3060 = vld [vmem:[%s328 + $0xaa] sm:$0xff]
        %v3061 = vld [vmem:[%s328 + $0xb2] sm:$0xff]
        %v3062 = vld [vmem:[%s328 + $0xc2] sm:$0xff]
        %v3063 = vld [vmem:[%s328 + $0xca] sm:$0xff]
        %v3064 = vld [vmem:[%s328 + $0xda] sm:$0xff]
        %v3065 = vld [vmem:[%s328 + $0xe2] sm:$0xff]
        %v3066 = vld [vmem:[%s328 + $0xf2] sm:$0xff]
        %v3067 = vld [vmem:[%s328 + $0xfa] sm:$0xff]
        %v3068 = vld [vmem:[%s328 + $0x10a] sm:$0xff]
        %v3069 = vld [vmem:[%s328 + $0x112] sm:$0xff]
        %v3070 = vld [vmem:[%s328 + $0x122] sm:$0xff]
        %v3071 = vld [vmem:[%s328 + $0x12a] sm:$0xff]
        %v3072 = vld [vmem:[%s328 + $0x13a] sm:$0xff]
        %v3073 = vld [vmem:[%s328 + $0x142] sm:$0xff]
        %v3074 = vld [vmem:[%s328 + $0x152] sm:$0xff]
        %v3075 = vld [vmem:[%s328 + $0x15a] sm:$0xff]
        %v3076 = vld [vmem:[%s328 + $0x16a] sm:$0xff]
        %v3077 = vld [vmem:[%s328 + $0x172] sm:$0xff]
        %3110 = vrot.lane.b32.xlu0 %v2822, 4
        %v3111 = vpop.permute.xlu0 %3110
        %3112 = vrot.lane.b32.xlu0 %v2823, 4
        %v3113 = vpop.permute.xlu0 %3112
        %3114 = vrot.lane.b32.xlu0 %v2824, 4
        %v3115 = vpop.permute.xlu0 %3114
        %3116 = vrot.lane.b32.xlu0 %v2825, 4
        %v3117 = vpop.permute.xlu0 %3116
        %3118 = vrot.lane.b32.xlu0 %v2826, 4
        %v3119 = vpop.permute.xlu0 %3118
        %3120 = vrot.lane.b32.xlu0 %v2827, 4
        %v3121 = vpop.permute.xlu0 %3120
        %3122 = vrot.lane.b32.xlu0 %v2828, 4
        %v3123 = vpop.permute.xlu0 %3122
        %3124 = vrot.lane.b32.xlu0 %v2829, 4
        %v3125 = vpop.permute.xlu0 %3124
        %3126 = vrot.lane.b32.xlu0 %v2830, 4
        %v3127 = vpop.permute.xlu0 %3126
        %3128 = vrot.lane.b32.xlu0 %v2831, 4
        %v3129 = vpop.permute.xlu0 %3128
        %3130 = vrot.lane.b32.xlu0 %v2832, 4
        %v3131 = vpop.permute.xlu0 %3130
        %3132 = vrot.lane.b32.xlu0 %v2833, 4
        %v3133 = vpop.permute.xlu0 %3132
        %3134 = vrot.lane.b32.xlu0 %v2834, 4
        %v3135 = vpop.permute.xlu0 %3134
        %3136 = vrot.lane.b32.xlu0 %v2835, 4
        %v3137 = vpop.permute.xlu0 %3136
        %3138 = vrot.lane.b32.xlu0 %v2836, 4
        %v3139 = vpop.permute.xlu0 %3138
        %3140 = vrot.lane.b32.xlu0 %v2837, 4
        %v3141 = vpop.permute.xlu0 %3140
        %3142 = vrot.lane.b32.xlu0 %v2838, 4
        %v3143 = vpop.permute.xlu0 %3142
        %3144 = vrot.lane.b32.xlu0 %v2839, 4
        %v3145 = vpop.permute.xlu0 %3144
        %3146 = vrot.lane.b32.xlu0 %v2840, 4
        %v3147 = vpop.permute.xlu0 %3146
        %3148 = vrot.lane.b32.xlu0 %v2841, 4
        %v3149 = vpop.permute.xlu0 %3148
        %3150 = vrot.lane.b32.xlu0 %v2842, 4
        %v3151 = vpop.permute.xlu0 %3150
        %3152 = vrot.lane.b32.xlu0 %v2843, 4
        %v3153 = vpop.permute.xlu0 %3152
        %3154 = vrot.lane.b32.xlu0 %v2844, 4
        %v3155 = vpop.permute.xlu0 %3154
        %3156 = vrot.lane.b32.xlu0 %v2845, 4
        %v3157 = vpop.permute.xlu0 %3156
        %3158 = vrot.lane.b32.xlu0 %v2846, 4
        %v3159 = vpop.permute.xlu0 %3158
        %3160 = vrot.lane.b32.xlu0 %v2847, 4
        %v3161 = vpop.permute.xlu0 %3160
        %3162 = vrot.lane.b32.xlu0 %v2848, 4
        %v3163 = vpop.permute.xlu0 %3162
        %3164 = vrot.lane.b32.xlu0 %v2849, 4
        %v3165 = vpop.permute.xlu0 %3164
        %3166 = vrot.lane.b32.xlu0 %v2850, 4
        %v3167 = vpop.permute.xlu0 %3166
        %3168 = vrot.lane.b32.xlu0 %v2851, 4
        %v3169 = vpop.permute.xlu0 %3168
        %3170 = vrot.lane.b32.xlu0 %v2852, 4
        %v3171 = vpop.permute.xlu0 %3170
        %3172 = vrot.lane.b32.xlu0 %v2853, 4
        %v3173 = vpop.permute.xlu0 %3172
        %3238 = vrot.lane.b32.xlu0 %v2854, 8
        %v3239 = vpop.permute.xlu0 %3238
        %3240 = vrot.lane.b32.xlu0 %v2855, 8
        %v3241 = vpop.permute.xlu0 %3240
        %3242 = vrot.lane.b32.xlu0 %v2856, 8
        %v3243 = vpop.permute.xlu0 %3242
        %3244 = vrot.lane.b32.xlu0 %v2857, 8
        %v3245 = vpop.permute.xlu0 %3244
        %3246 = vrot.lane.b32.xlu0 %v2858, 8
        %v3247 = vpop.permute.xlu0 %3246
        %3248 = vrot.lane.b32.xlu0 %v2859, 8
        %v3249 = vpop.permute.xlu0 %3248
        %3250 = vrot.lane.b32.xlu0 %v2860, 8
        %v3251 = vpop.permute.xlu0 %3250
        %3252 = vrot.lane.b32.xlu0 %v2861, 8
        %v3253 = vpop.permute.xlu0 %3252
        %3254 = vrot.lane.b32.xlu0 %v2862, 8
        %v3255 = vpop.permute.xlu0 %3254
        %3256 = vrot.lane.b32.xlu0 %v2863, 8
        %v3257 = vpop.permute.xlu0 %3256
        %3258 = vrot.lane.b32.xlu0 %v2864, 8
        %v3259 = vpop.permute.xlu0 %3258
        %3260 = vrot.lane.b32.xlu0 %v2865, 8
        %v3261 = vpop.permute.xlu0 %3260
        %3262 = vrot.lane.b32.xlu0 %v2866, 8
        %v3263 = vpop.permute.xlu0 %3262
        %3264 = vrot.lane.b32.xlu0 %v2867, 8
        %v3265 = vpop.permute.xlu0 %3264
        %3266 = vrot.lane.b32.xlu0 %v2868, 8
        %v3267 = vpop.permute.xlu0 %3266
        %3268 = vrot.lane.b32.xlu0 %v2869, 8
        %v3269 = vpop.permute.xlu0 %3268
        %3270 = vrot.lane.b32.xlu0 %v2870, 8
        %v3271 = vpop.permute.xlu0 %3270
        %3272 = vrot.lane.b32.xlu0 %v2871, 8
        %v3273 = vpop.permute.xlu0 %3272
        %3274 = vrot.lane.b32.xlu0 %v2872, 8
        %v3275 = vpop.permute.xlu0 %3274
        %3276 = vrot.lane.b32.xlu0 %v2873, 8
        %v3277 = vpop.permute.xlu0 %3276
        %3278 = vrot.lane.b32.xlu0 %v2874, 8
        %v3279 = vpop.permute.xlu0 %3278
        %3280 = vrot.lane.b32.xlu0 %v2875, 8
        %v3281 = vpop.permute.xlu0 %3280
        %3282 = vrot.lane.b32.xlu0 %v2876, 8
        %v3283 = vpop.permute.xlu0 %3282
        %3284 = vrot.lane.b32.xlu0 %v2877, 8
        %v3285 = vpop.permute.xlu0 %3284
        %3286 = vrot.lane.b32.xlu0 %v2878, 8
        %v3287 = vpop.permute.xlu0 %3286
        %3288 = vrot.lane.b32.xlu0 %v2879, 8
        %v3289 = vpop.permute.xlu0 %3288
        %3290 = vrot.lane.b32.xlu0 %v2880, 8
        %v3291 = vpop.permute.xlu0 %3290
        %3292 = vrot.lane.b32.xlu0 %v2881, 8
        %v3293 = vpop.permute.xlu0 %3292
        %3294 = vrot.lane.b32.xlu0 %v2882, 8
        %v3295 = vpop.permute.xlu0 %3294
        %3296 = vrot.lane.b32.xlu0 %v2883, 8
        %v3297 = vpop.permute.xlu0 %3296
        %3298 = vrot.lane.b32.xlu0 %v2884, 8
        %v3299 = vpop.permute.xlu0 %3298
        %3300 = vrot.lane.b32.xlu0 %v2885, 8
        %v3301 = vpop.permute.xlu0 %3300
        %3366 = vrot.lane.b32.xlu0 %v2886, 12
        %v3367 = vpop.permute.xlu0 %3366
        %3368 = vrot.lane.b32.xlu0 %v2887, 12
        %v3369 = vpop.permute.xlu0 %3368
        %3370 = vrot.lane.b32.xlu0 %v2888, 12
        %v3371 = vpop.permute.xlu0 %3370
        %3372 = vrot.lane.b32.xlu0 %v2889, 12
        %v3373 = vpop.permute.xlu0 %3372
        %3374 = vrot.lane.b32.xlu0 %v2890, 12
        %v3375 = vpop.permute.xlu0 %3374
        %3376 = vrot.lane.b32.xlu0 %v2891, 12
        %v3377 = vpop.permute.xlu0 %3376
        %3378 = vrot.lane.b32.xlu0 %v2892, 12
        %v3379 = vpop.permute.xlu0 %3378
        %3380 = vrot.lane.b32.xlu0 %v2893, 12
        %v3381 = vpop.permute.xlu0 %3380
        %3382 = vrot.lane.b32.xlu0 %v2894, 12
        %v3383 = vpop.permute.xlu0 %3382
        %3384 = vrot.lane.b32.xlu0 %v2895, 12
        %v3385 = vpop.permute.xlu0 %3384
        %3386 = vrot.lane.b32.xlu0 %v2896, 12
        %v3387 = vpop.permute.xlu0 %3386
        %3388 = vrot.lane.b32.xlu0 %v2897, 12
        %v3389 = vpop.permute.xlu0 %3388
        %3390 = vrot.lane.b32.xlu0 %v2898, 12
        %v3391 = vpop.permute.xlu0 %3390
        %3392 = vrot.lane.b32.xlu0 %v2899, 12
        %v3393 = vpop.permute.xlu0 %3392
        %3394 = vrot.lane.b32.xlu0 %v2900, 12
        %v3395 = vpop.permute.xlu0 %3394
        %3396 = vrot.lane.b32.xlu0 %v2901, 12
        %v3397 = vpop.permute.xlu0 %3396
        %3398 = vrot.lane.b32.xlu0 %v2902, 12
        %v3399 = vpop.permute.xlu0 %3398
        %3400 = vrot.lane.b32.xlu0 %v2903, 12
        %v3401 = vpop.permute.xlu0 %3400
        %3402 = vrot.lane.b32.xlu0 %v2904, 12
        %v3403 = vpop.permute.xlu0 %3402
        %3404 = vrot.lane.b32.xlu0 %v2905, 12
        %v3405 = vpop.permute.xlu0 %3404
        %3406 = vrot.lane.b32.xlu0 %v2906, 12
        %v3407 = vpop.permute.xlu0 %3406
        %3408 = vrot.lane.b32.xlu0 %v2907, 12
        %v3409 = vpop.permute.xlu0 %3408
        %3410 = vrot.lane.b32.xlu0 %v2908, 12
        %v3411 = vpop.permute.xlu0 %3410
        %3412 = vrot.lane.b32.xlu0 %v2909, 12
        %v3413 = vpop.permute.xlu0 %3412
        %3414 = vrot.lane.b32.xlu0 %v2910, 12
        %v3415 = vpop.permute.xlu0 %3414
        %3416 = vrot.lane.b32.xlu0 %v2911, 12
        %v3417 = vpop.permute.xlu0 %3416
        %3418 = vrot.lane.b32.xlu0 %v2912, 12
        %v3419 = vpop.permute.xlu0 %3418
        %3420 = vrot.lane.b32.xlu0 %v2913, 12
        %v3421 = vpop.permute.xlu0 %3420
        %3422 = vrot.lane.b32.xlu0 %v2914, 12
        %v3423 = vpop.permute.xlu0 %3422
        %3424 = vrot.lane.b32.xlu0 %v2915, 12
        %v3425 = vpop.permute.xlu0 %3424
        %3426 = vrot.lane.b32.xlu0 %v2916, 12
        %v3427 = vpop.permute.xlu0 %3426
        %3428 = vrot.lane.b32.xlu0 %v2917, 12
        %v3429 = vpop.permute.xlu0 %3428
        %3494 = vrot.lane.b32.xlu0 %v2918, 16
        %v3495 = vpop.permute.xlu0 %3494
        %3496 = vrot.lane.b32.xlu0 %v2919, 16
        %v3497 = vpop.permute.xlu0 %3496
        %3498 = vrot.lane.b32.xlu0 %v2920, 16
        %v3499 = vpop.permute.xlu0 %3498
        %3500 = vrot.lane.b32.xlu0 %v2921, 16
        %v3501 = vpop.permute.xlu0 %3500
        %3502 = vrot.lane.b32.xlu0 %v2922, 16
        %v3503 = vpop.permute.xlu0 %3502
        %3504 = vrot.lane.b32.xlu0 %v2923, 16
        %v3505 = vpop.permute.xlu0 %3504
        %3506 = vrot.lane.b32.xlu0 %v2924, 16
        %v3507 = vpop.permute.xlu0 %3506
        %3508 = vrot.lane.b32.xlu0 %v2925, 16
        %v3509 = vpop.permute.xlu0 %3508
        %3510 = vrot.lane.b32.xlu0 %v2926, 16
        %v3511 = vpop.permute.xlu0 %3510
        %3512 = vrot.lane.b32.xlu0 %v2927, 16
        %v3513 = vpop.permute.xlu0 %3512
        %3514 = vrot.lane.b32.xlu0 %v2928, 16
        %v3515 = vpop.permute.xlu0 %3514
        %3516 = vrot.lane.b32.xlu0 %v2929, 16
        %v3517 = vpop.permute.xlu0 %3516
        %3518 = vrot.lane.b32.xlu0 %v2930, 16
        %v3519 = vpop.permute.xlu0 %3518
        %3520 = vrot.lane.b32.xlu0 %v2931, 16
        %v3521 = vpop.permute.xlu0 %3520
        %3522 = vrot.lane.b32.xlu0 %v2932, 16
        %v3523 = vpop.permute.xlu0 %3522
        %3524 = vrot.lane.b32.xlu0 %v2933, 16
        %v3525 = vpop.permute.xlu0 %3524
        %3526 = vrot.lane.b32.xlu0 %v2934, 16
        %v3527 = vpop.permute.xlu0 %3526
        %3528 = vrot.lane.b32.xlu0 %v2935, 16
        %v3529 = vpop.permute.xlu0 %3528
        %3530 = vrot.lane.b32.xlu0 %v2936, 16
        %v3531 = vpop.permute.xlu0 %3530
        %3532 = vrot.lane.b32.xlu0 %v2937, 16
        %v3533 = vpop.permute.xlu0 %3532
        %3534 = vrot.lane.b32.xlu0 %v2938, 16
        %v3535 = vpop.permute.xlu0 %3534
        %3536 = vrot.lane.b32.xlu0 %v2939, 16
        %v3537 = vpop.permute.xlu0 %3536
        %3538 = vrot.lane.b32.xlu0 %v2940, 16
        %v3539 = vpop.permute.xlu0 %3538
        %3540 = vrot.lane.b32.xlu0 %v2941, 16
        %v3541 = vpop.permute.xlu0 %3540
        %3542 = vrot.lane.b32.xlu0 %v2942, 16
        %v3543 = vpop.permute.xlu0 %3542
        %3544 = vrot.lane.b32.xlu0 %v2943, 16
        %v3545 = vpop.permute.xlu0 %3544
        %3546 = vrot.lane.b32.xlu0 %v2944, 16
        %v3547 = vpop.permute.xlu0 %3546
        %3548 = vrot.lane.b32.xlu0 %v2945, 16
        %v3549 = vpop.permute.xlu0 %3548
        %3550 = vrot.lane.b32.xlu0 %v2946, 16
        %v3551 = vpop.permute.xlu0 %3550
        %3552 = vrot.lane.b32.xlu0 %v2947, 16
        %v3553 = vpop.permute.xlu0 %3552
        %3554 = vrot.lane.b32.xlu0 %v2948, 16
        %v3555 = vpop.permute.xlu0 %3554
        %3556 = vrot.lane.b32.xlu0 %v2949, 16
        %v3557 = vpop.permute.xlu0 %3556
        %3622 = vrot.lane.b32.xlu0 %v2950, 20
        %v3623 = vpop.permute.xlu0 %3622
        %3624 = vrot.lane.b32.xlu0 %v2951, 20
        %v3625 = vpop.permute.xlu0 %3624
        %3626 = vrot.lane.b32.xlu0 %v2952, 20
        %v3627 = vpop.permute.xlu0 %3626
        %3628 = vrot.lane.b32.xlu0 %v2953, 20
        %v3629 = vpop.permute.xlu0 %3628
        %3630 = vrot.lane.b32.xlu0 %v2954, 20
        %v3631 = vpop.permute.xlu0 %3630
        %3632 = vrot.lane.b32.xlu0 %v2955, 20
        %v3633 = vpop.permute.xlu0 %3632
        %3634 = vrot.lane.b32.xlu0 %v2956, 20
        %v3635 = vpop.permute.xlu0 %3634
        %3636 = vrot.lane.b32.xlu0 %v2957, 20
        %v3637 = vpop.permute.xlu0 %3636
        %3638 = vrot.lane.b32.xlu0 %v2958, 20
        %v3639 = vpop.permute.xlu0 %3638
        %3640 = vrot.lane.b32.xlu0 %v2959, 20
        %v3641 = vpop.permute.xlu0 %3640
        %3642 = vrot.lane.b32.xlu0 %v2960, 20
        %v3643 = vpop.permute.xlu0 %3642
        %3644 = vrot.lane.b32.xlu0 %v2961, 20
        %v3645 = vpop.permute.xlu0 %3644
        %3646 = vrot.lane.b32.xlu0 %v2962, 20
        %v3647 = vpop.permute.xlu0 %3646
        %3648 = vrot.lane.b32.xlu0 %v2963, 20
        %v3649 = vpop.permute.xlu0 %3648
        %3650 = vrot.lane.b32.xlu0 %v2964, 20
        %v3651 = vpop.permute.xlu0 %3650
        %3652 = vrot.lane.b32.xlu0 %v2965, 20
        %v3653 = vpop.permute.xlu0 %3652
        %3654 = vrot.lane.b32.xlu0 %v2966, 20
        %v3655 = vpop.permute.xlu0 %3654
        %3656 = vrot.lane.b32.xlu0 %v2967, 20
        %v3657 = vpop.permute.xlu0 %3656
        %3658 = vrot.lane.b32.xlu0 %v2968, 20
        %v3659 = vpop.permute.xlu0 %3658
        %3660 = vrot.lane.b32.xlu0 %v2969, 20
        %v3661 = vpop.permute.xlu0 %3660
        %3662 = vrot.lane.b32.xlu0 %v2970, 20
        %v3663 = vpop.permute.xlu0 %3662
        %3664 = vrot.lane.b32.xlu0 %v2971, 20
        %v3665 = vpop.permute.xlu0 %3664
        %3666 = vrot.lane.b32.xlu0 %v2972, 20
        %v3667 = vpop.permute.xlu0 %3666
        %3668 = vrot.lane.b32.xlu0 %v2973, 20
        %v3669 = vpop.permute.xlu0 %3668
        %3670 = vrot.lane.b32.xlu0 %v2974, 20
        %v3671 = vpop.permute.xlu0 %3670
        %3672 = vrot.lane.b32.xlu0 %v2975, 20
        %v3673 = vpop.permute.xlu0 %3672
        %3674 = vrot.lane.b32.xlu0 %v2976, 20
        %v3675 = vpop.permute.xlu0 %3674
        %3676 = vrot.lane.b32.xlu0 %v2977, 20
        %v3677 = vpop.permute.xlu0 %3676
        %3678 = vrot.lane.b32.xlu0 %v2978, 20
        %v3679 = vpop.permute.xlu0 %3678
        %3680 = vrot.lane.b32.xlu0 %v2979, 20
        %v3681 = vpop.permute.xlu0 %3680
        %3682 = vrot.lane.b32.xlu0 %v2980, 20
        %v3683 = vpop.permute.xlu0 %3682
        %3684 = vrot.lane.b32.xlu0 %v2981, 20
        %v3685 = vpop.permute.xlu0 %3684
        %3750 = vrot.lane.b32.xlu0 %v2982, 24
        %v3751 = vpop.permute.xlu0 %3750
        %3752 = vrot.lane.b32.xlu0 %v2983, 24
        %v3753 = vpop.permute.xlu0 %3752
        %3754 = vrot.lane.b32.xlu0 %v2984, 24
        %v3755 = vpop.permute.xlu0 %3754
        %3756 = vrot.lane.b32.xlu0 %v2985, 24
        %v3757 = vpop.permute.xlu0 %3756
        %3758 = vrot.lane.b32.xlu0 %v2986, 24
        %v3759 = vpop.permute.xlu0 %3758
        %3760 = vrot.lane.b32.xlu0 %v2987, 24
        %v3761 = vpop.permute.xlu0 %3760
        %3762 = vrot.lane.b32.xlu0 %v2988, 24
        %v3763 = vpop.permute.xlu0 %3762
        %3764 = vrot.lane.b32.xlu0 %v2989, 24
        %v3765 = vpop.permute.xlu0 %3764
        %3766 = vrot.lane.b32.xlu0 %v2990, 24
        %v3767 = vpop.permute.xlu0 %3766
        %3768 = vrot.lane.b32.xlu0 %v2991, 24
        %v3769 = vpop.permute.xlu0 %3768
        %3770 = vrot.lane.b32.xlu0 %v2992, 24
        %v3771 = vpop.permute.xlu0 %3770
        %3772 = vrot.lane.b32.xlu0 %v2993, 24
        %v3773 = vpop.permute.xlu0 %3772
        %3774 = vrot.lane.b32.xlu0 %v2994, 24
        %v3775 = vpop.permute.xlu0 %3774
        %3776 = vrot.lane.b32.xlu0 %v2995, 24
        %v3777 = vpop.permute.xlu0 %3776
        %3778 = vrot.lane.b32.xlu0 %v2996, 24
        %v3779 = vpop.permute.xlu0 %3778
        %3780 = vrot.lane.b32.xlu0 %v2997, 24
        %v3781 = vpop.permute.xlu0 %3780
        %3782 = vrot.lane.b32.xlu0 %v2998, 24
        %v3783 = vpop.permute.xlu0 %3782
        %3784 = vrot.lane.b32.xlu0 %v2999, 24
        %v3785 = vpop.permute.xlu0 %3784
        %3786 = vrot.lane.b32.xlu0 %v3000, 24
        %v3787 = vpop.permute.xlu0 %3786
        %3788 = vrot.lane.b32.xlu0 %v3001, 24
        %v3789 = vpop.permute.xlu0 %3788
        %3790 = vrot.lane.b32.xlu0 %v3002, 24
        %v3791 = vpop.permute.xlu0 %3790
        %3792 = vrot.lane.b32.xlu0 %v3003, 24
        %v3793 = vpop.permute.xlu0 %3792
        %3794 = vrot.lane.b32.xlu0 %v3004, 24
        %v3795 = vpop.permute.xlu0 %3794
        %3796 = vrot.lane.b32.xlu0 %v3005, 24
        %v3797 = vpop.permute.xlu0 %3796
        %3798 = vrot.lane.b32.xlu0 %v3006, 24
        %v3799 = vpop.permute.xlu0 %3798
        %3800 = vrot.lane.b32.xlu0 %v3007, 24
        %v3801 = vpop.permute.xlu0 %3800
        %3802 = vrot.lane.b32.xlu0 %v3008, 24
        %v3803 = vpop.permute.xlu0 %3802
        %3804 = vrot.lane.b32.xlu0 %v3009, 24
        %v3805 = vpop.permute.xlu0 %3804
        %3806 = vrot.lane.b32.xlu0 %v3010, 24
        %v3807 = vpop.permute.xlu0 %3806
        %3808 = vrot.lane.b32.xlu0 %v3011, 24
        %v3809 = vpop.permute.xlu0 %3808
        %3810 = vrot.lane.b32.xlu0 %v3012, 24
        %v3811 = vpop.permute.xlu0 %3810
        %3812 = vrot.lane.b32.xlu0 %v3013, 24
        %v3813 = vpop.permute.xlu0 %3812
        %3878 = vrot.lane.b32.xlu0 %v3014, 28
        %v3879 = vpop.permute.xlu0 %3878
        %3880 = vrot.lane.b32.xlu0 %v3015, 28
        %v3881 = vpop.permute.xlu0 %3880
        %3882 = vrot.lane.b32.xlu0 %v3016, 28
        %v3883 = vpop.permute.xlu0 %3882
        %3884 = vrot.lane.b32.xlu0 %v3017, 28
        %v3885 = vpop.permute.xlu0 %3884
        %3886 = vrot.lane.b32.xlu0 %v3018, 28
        %v3887 = vpop.permute.xlu0 %3886
        %3888 = vrot.lane.b32.xlu0 %v3019, 28
        %v3889 = vpop.permute.xlu0 %3888
        %3890 = vrot.lane.b32.xlu0 %v3020, 28
        %v3891 = vpop.permute.xlu0 %3890
        %3892 = vrot.lane.b32.xlu0 %v3021, 28
        %v3893 = vpop.permute.xlu0 %3892
        %3894 = vrot.lane.b32.xlu0 %v3022, 28
        %v3895 = vpop.permute.xlu0 %3894
        %3896 = vrot.lane.b32.xlu0 %v3023, 28
        %v3897 = vpop.permute.xlu0 %3896
        %3898 = vrot.lane.b32.xlu0 %v3024, 28
        %v3899 = vpop.permute.xlu0 %3898
        %3900 = vrot.lane.b32.xlu0 %v3025, 28
        %v3901 = vpop.permute.xlu0 %3900
        %3902 = vrot.lane.b32.xlu0 %v3026, 28
        %v3903 = vpop.permute.xlu0 %3902
        %3904 = vrot.lane.b32.xlu0 %v3027, 28
        %v3905 = vpop.permute.xlu0 %3904
        %3906 = vrot.lane.b32.xlu0 %v3028, 28
        %v3907 = vpop.permute.xlu0 %3906
        %3908 = vrot.lane.b32.xlu0 %v3029, 28
        %v3909 = vpop.permute.xlu0 %3908
        %3910 = vrot.lane.b32.xlu0 %v3030, 28
        %v3911 = vpop.permute.xlu0 %3910
        %3912 = vrot.lane.b32.xlu0 %v3031, 28
        %v3913 = vpop.permute.xlu0 %3912
        %3914 = vrot.lane.b32.xlu0 %v3032, 28
        %v3915 = vpop.permute.xlu0 %3914
        %3916 = vrot.lane.b32.xlu0 %v3033, 28
        %v3917 = vpop.permute.xlu0 %3916
        %3918 = vrot.lane.b32.xlu0 %v3034, 28
        %v3919 = vpop.permute.xlu0 %3918
        %3920 = vrot.lane.b32.xlu0 %v3035, 28
        %v3921 = vpop.permute.xlu0 %3920
        %3922 = vrot.lane.b32.xlu0 %v3036, 28
        %v3923 = vpop.permute.xlu0 %3922
        %3924 = vrot.lane.b32.xlu0 %v3037, 28
        %v3925 = vpop.permute.xlu0 %3924
        %3926 = vrot.lane.b32.xlu0 %v3038, 28
        %v3927 = vpop.permute.xlu0 %3926
        %3928 = vrot.lane.b32.xlu0 %v3039, 28
        %v3929 = vpop.permute.xlu0 %3928
        %3930 = vrot.lane.b32.xlu0 %v3040, 28
        %v3931 = vpop.permute.xlu0 %3930
        %3932 = vrot.lane.b32.xlu0 %v3041, 28
        %v3933 = vpop.permute.xlu0 %3932
        %3934 = vrot.lane.b32.xlu0 %v3042, 28
        %v3935 = vpop.permute.xlu0 %3934
        %3936 = vrot.lane.b32.xlu0 %v3043, 28
        %v3937 = vpop.permute.xlu0 %3936
        %3938 = vrot.lane.b32.xlu0 %v3044, 28
        %v3939 = vpop.permute.xlu0 %3938
        %3940 = vrot.lane.b32.xlu0 %v3045, 28
        %v3941 = vpop.permute.xlu0 %3940
        %4006 = vrot.lane.b32.xlu0 %v3046, 32
        %v4007 = vpop.permute.xlu0 %4006
        %4008 = vrot.lane.b32.xlu0 %v3047, 32
        %v4009 = vpop.permute.xlu0 %4008
        %4010 = vrot.lane.b32.xlu0 %v3048, 32
        %v4011 = vpop.permute.xlu0 %4010
        %4012 = vrot.lane.b32.xlu0 %v3049, 32
        %v4013 = vpop.permute.xlu0 %4012
        %4014 = vrot.lane.b32.xlu0 %v3050, 32
        %v4015 = vpop.permute.xlu0 %4014
        %4016 = vrot.lane.b32.xlu0 %v3051, 32
        %v4017 = vpop.permute.xlu0 %4016
        %4018 = vrot.lane.b32.xlu0 %v3052, 32
        %v4019 = vpop.permute.xlu0 %4018
        %4020 = vrot.lane.b32.xlu0 %v3053, 32
        %v4021 = vpop.permute.xlu0 %4020
        %4022 = vrot.lane.b32.xlu0 %v3054, 32
        %v4023 = vpop.permute.xlu0 %4022
        %4024 = vrot.lane.b32.xlu0 %v3055, 32
        %v4025 = vpop.permute.xlu0 %4024
        %4026 = vrot.lane.b32.xlu0 %v3056, 32
        %v4027 = vpop.permute.xlu0 %4026
        %4028 = vrot.lane.b32.xlu0 %v3057, 32
        %v4029 = vpop.permute.xlu0 %4028
        %4030 = vrot.lane.b32.xlu0 %v3058, 32
        %v4031 = vpop.permute.xlu0 %4030
        %4032 = vrot.lane.b32.xlu0 %v3059, 32
        %v4033 = vpop.permute.xlu0 %4032
        %4034 = vrot.lane.b32.xlu0 %v3060, 32
        %v4035 = vpop.permute.xlu0 %4034
        %4036 = vrot.lane.b32.xlu0 %v3061, 32
        %v4037 = vpop.permute.xlu0 %4036
        %4038 = vrot.lane.b32.xlu0 %v3062, 32
        %v4039 = vpop.permute.xlu0 %4038
        %4040 = vrot.lane.b32.xlu0 %v3063, 32
        %v4041 = vpop.permute.xlu0 %4040
        %4042 = vrot.lane.b32.xlu0 %v3064, 32
        %v4043 = vpop.permute.xlu0 %4042
        %4044 = vrot.lane.b32.xlu0 %v3065, 32
        %v4045 = vpop.permute.xlu0 %4044
        %4046 = vrot.lane.b32.xlu0 %v3066, 32
        %v4047 = vpop.permute.xlu0 %4046
        %4048 = vrot.lane.b32.xlu0 %v3067, 32
        %v4049 = vpop.permute.xlu0 %4048
        %4050 = vrot.lane.b32.xlu0 %v3068, 32
        %v4051 = vpop.permute.xlu0 %4050
        %4052 = vrot.lane.b32.xlu0 %v3069, 32
        %v4053 = vpop.permute.xlu0 %4052
        %4054 = vrot.lane.b32.xlu0 %v3070, 32
        %v4055 = vpop.permute.xlu0 %4054
        %4056 = vrot.lane.b32.xlu0 %v3071, 32
        %v4057 = vpop.permute.xlu0 %4056
        %4058 = vrot.lane.b32.xlu0 %v3072, 32
        %v4059 = vpop.permute.xlu0 %4058
        %4060 = vrot.lane.b32.xlu0 %v3073, 32
        %v4061 = vpop.permute.xlu0 %4060
        %4062 = vrot.lane.b32.xlu0 %v3074, 32
        %v4063 = vpop.permute.xlu0 %4062
        %4064 = vrot.lane.b32.xlu0 %v3075, 32
        %v4065 = vpop.permute.xlu0 %4064
        %4066 = vrot.lane.b32.xlu0 %v3076, 32
        %v4067 = vpop.permute.xlu0 %4066
        %4068 = vrot.lane.b32.xlu0 %v3077, 32
        %v4069 = vpop.permute.xlu0 %4068
        %v4102 = vsel %vm295, %v2790, %v3111
        %v4103 = vsel %vm295, %v2791, %v3113
        %v4104 = vsel %vm295, %v2792, %v3115
        %v4105 = vsel %vm295, %v2793, %v3117
        %v4106 = vsel %vm295, %v2794, %v3119
        %v4107 = vsel %vm295, %v2795, %v3121
        %v4108 = vsel %vm295, %v2796, %v3123
        %v4109 = vsel %vm295, %v2797, %v3125
        %v4110 = vsel %vm295, %v2798, %v3127
        %v4111 = vsel %vm295, %v2799, %v3129
        %v4112 = vsel %vm295, %v2800, %v3131
        %v4113 = vsel %vm295, %v2801, %v3133
        %v4114 = vsel %vm295, %v2802, %v3135
        %v4115 = vsel %vm295, %v2803, %v3137
        %v4116 = vsel %vm295, %v2804, %v3139
        %v4117 = vsel %vm295, %v2805, %v3141
        %v4118 = vsel %vm295, %v2806, %v3143
        %v4119 = vsel %vm295, %v2807, %v3145
        %v4120 = vsel %vm295, %v2808, %v3147
        %v4121 = vsel %vm295, %v2809, %v3149
        %v4122 = vsel %vm295, %v2810, %v3151
        %v4123 = vsel %vm295, %v2811, %v3153
        %v4124 = vsel %vm295, %v2812, %v3155
        %v4125 = vsel %vm295, %v2813, %v3157
        %v4126 = vsel %vm295, %v2814, %v3159
        %v4127 = vsel %vm295, %v2815, %v3161
        %v4128 = vsel %vm295, %v2816, %v3163
        %v4129 = vsel %vm295, %v2817, %v3165
        %v4130 = vsel %vm295, %v2818, %v3167
        %v4131 = vsel %vm295, %v2819, %v3169
        %v4132 = vsel %vm295, %v2820, %v3171
        %v4133 = vsel %vm295, %v2821, %v3173
        %v4134 = vsel %vm1761, %v4102, %v3239
        %v4135 = vsel %vm1761, %v4103, %v3241
        %v4136 = vsel %vm1761, %v4104, %v3243
        %v4137 = vsel %vm1761, %v4105, %v3245
        %v4138 = vsel %vm1761, %v4106, %v3247
        %v4139 = vsel %vm1761, %v4107, %v3249
        %v4140 = vsel %vm1761, %v4108, %v3251
        %v4141 = vsel %vm1761, %v4109, %v3253
        %v4142 = vsel %vm1761, %v4110, %v3255
        %v4143 = vsel %vm1761, %v4111, %v3257
        %v4144 = vsel %vm1761, %v4112, %v3259
        %v4145 = vsel %vm1761, %v4113, %v3261
        %v4146 = vsel %vm1761, %v4114, %v3263
        %v4147 = vsel %vm1761, %v4115, %v3265
        %v4148 = vsel %vm1761, %v4116, %v3267
        %v4149 = vsel %vm1761, %v4117, %v3269
        %v4150 = vsel %vm1761, %v4118, %v3271
        %v4151 = vsel %vm1761, %v4119, %v3273
        %v4152 = vsel %vm1761, %v4120, %v3275
        %v4153 = vsel %vm1761, %v4121, %v3277
        %v4154 = vsel %vm1761, %v4122, %v3279
        %v4155 = vsel %vm1761, %v4123, %v3281
        %v4156 = vsel %vm1761, %v4124, %v3283
        %v4157 = vsel %vm1761, %v4125, %v3285
        %v4158 = vsel %vm1761, %v4126, %v3287
        %v4159 = vsel %vm1761, %v4127, %v3289
        %v4160 = vsel %vm1761, %v4128, %v3291
        %v4161 = vsel %vm1761, %v4129, %v3293
        %v4162 = vsel %vm1761, %v4130, %v3295
        %v4163 = vsel %vm1761, %v4131, %v3297
        %v4164 = vsel %vm1761, %v4132, %v3299
        %v4165 = vsel %vm1761, %v4133, %v3301
        %v4166 = vsel %vm1794, %v4134, %v3367
        %v4167 = vsel %vm1794, %v4135, %v3369
        %v4168 = vsel %vm1794, %v4136, %v3371
        %v4169 = vsel %vm1794, %v4137, %v3373
        %v4170 = vsel %vm1794, %v4138, %v3375
        %v4171 = vsel %vm1794, %v4139, %v3377
        %v4172 = vsel %vm1794, %v4140, %v3379
        %v4173 = vsel %vm1794, %v4141, %v3381
        %v4174 = vsel %vm1794, %v4142, %v3383
        %v4175 = vsel %vm1794, %v4143, %v3385
        %v4176 = vsel %vm1794, %v4144, %v3387
        %v4177 = vsel %vm1794, %v4145, %v3389
        %v4178 = vsel %vm1794, %v4146, %v3391
        %v4179 = vsel %vm1794, %v4147, %v3393
        %v4180 = vsel %vm1794, %v4148, %v3395
        %v4181 = vsel %vm1794, %v4149, %v3397
        %v4182 = vsel %vm1794, %v4150, %v3399
        %v4183 = vsel %vm1794, %v4151, %v3401
        %v4184 = vsel %vm1794, %v4152, %v3403
        %v4185 = vsel %vm1794, %v4153, %v3405
        %v4186 = vsel %vm1794, %v4154, %v3407
        %v4187 = vsel %vm1794, %v4155, %v3409
        %v4188 = vsel %vm1794, %v4156, %v3411
        %v4189 = vsel %vm1794, %v4157, %v3413
        %v4190 = vsel %vm1794, %v4158, %v3415
        %v4191 = vsel %vm1794, %v4159, %v3417
        %v4192 = vsel %vm1794, %v4160, %v3419
        %v4193 = vsel %vm1794, %v4161, %v3421
        %v4194 = vsel %vm1794, %v4162, %v3423
        %v4195 = vsel %vm1794, %v4163, %v3425
        %v4196 = vsel %vm1794, %v4164, %v3427
        %v4197 = vsel %vm1794, %v4165, %v3429
        %v4198 = vsel %vm1827, %v4166, %v3495
        %v4199 = vsel %vm1827, %v4167, %v3497
        %v4200 = vsel %vm1827, %v4168, %v3499
        %v4201 = vsel %vm1827, %v4169, %v3501
        %v4202 = vsel %vm1827, %v4170, %v3503
        %v4203 = vsel %vm1827, %v4171, %v3505
        %v4204 = vsel %vm1827, %v4172, %v3507
        %v4205 = vsel %vm1827, %v4173, %v3509
        %v4206 = vsel %vm1827, %v4174, %v3511
        %v4207 = vsel %vm1827, %v4175, %v3513
        %v4208 = vsel %vm1827, %v4176, %v3515
        %v4209 = vsel %vm1827, %v4177, %v3517
        %v4210 = vsel %vm1827, %v4178, %v3519
        %v4211 = vsel %vm1827, %v4179, %v3521
        %v4212 = vsel %vm1827, %v4180, %v3523
        %v4213 = vsel %vm1827, %v4181, %v3525
        %v4214 = vsel %vm1827, %v4182, %v3527
        %v4215 = vsel %vm1827, %v4183, %v3529
        %v4216 = vsel %vm1827, %v4184, %v3531
        %v4217 = vsel %vm1827, %v4185, %v3533
        %v4218 = vsel %vm1827, %v4186, %v3535
        %v4219 = vsel %vm1827, %v4187, %v3537
        %v4220 = vsel %vm1827, %v4188, %v3539
        %v4221 = vsel %vm1827, %v4189, %v3541
        %v4222 = vsel %vm1827, %v4190, %v3543
        %v4223 = vsel %vm1827, %v4191, %v3545
        %v4224 = vsel %vm1827, %v4192, %v3547
        %v4225 = vsel %vm1827, %v4193, %v3549
        %v4226 = vsel %vm1827, %v4194, %v3551
        %v4227 = vsel %vm1827, %v4195, %v3553
        %v4228 = vsel %vm1827, %v4196, %v3555
        %v4229 = vsel %vm1827, %v4197, %v3557
        %v4230 = vsel %vm1860, %v4198, %v3623
        %v4231 = vsel %vm1860, %v4199, %v3625
        %v4232 = vsel %vm1860, %v4200, %v3627
        %v4233 = vsel %vm1860, %v4201, %v3629
        %v4234 = vsel %vm1860, %v4202, %v3631
        %v4235 = vsel %vm1860, %v4203, %v3633
        %v4236 = vsel %vm1860, %v4204, %v3635
        %v4237 = vsel %vm1860, %v4205, %v3637
        %v4238 = vsel %vm1860, %v4206, %v3639
        %v4239 = vsel %vm1860, %v4207, %v3641
        %v4240 = vsel %vm1860, %v4208, %v3643
        %v4241 = vsel %vm1860, %v4209, %v3645
        %v4242 = vsel %vm1860, %v4210, %v3647
        %v4243 = vsel %vm1860, %v4211, %v3649
        %v4244 = vsel %vm1860, %v4212, %v3651
        %v4245 = vsel %vm1860, %v4213, %v3653
        %v4246 = vsel %vm1860, %v4214, %v3655
        %v4247 = vsel %vm1860, %v4215, %v3657
        %v4248 = vsel %vm1860, %v4216, %v3659
        %v4249 = vsel %vm1860, %v4217, %v3661
        %v4250 = vsel %vm1860, %v4218, %v3663
        %v4251 = vsel %vm1860, %v4219, %v3665
        %v4252 = vsel %vm1860, %v4220, %v3667
        %v4253 = vsel %vm1860, %v4221, %v3669
        %v4254 = vsel %vm1860, %v4222, %v3671
        %v4255 = vsel %vm1860, %v4223, %v3673
        %v4256 = vsel %vm1860, %v4224, %v3675
        %v4257 = vsel %vm1860, %v4225, %v3677
        %v4258 = vsel %vm1860, %v4226, %v3679
        %v4259 = vsel %vm1860, %v4227, %v3681
        %v4260 = vsel %vm1860, %v4228, %v3683
        %v4261 = vsel %vm1860, %v4229, %v3685
        %v4262 = vsel %vm1893, %v4230, %v3751
        %v4263 = vsel %vm1893, %v4231, %v3753
        %v4264 = vsel %vm1893, %v4232, %v3755
        %v4265 = vsel %vm1893, %v4233, %v3757
        %v4266 = vsel %vm1893, %v4234, %v3759
        %v4267 = vsel %vm1893, %v4235, %v3761
        %v4268 = vsel %vm1893, %v4236, %v3763
        %v4269 = vsel %vm1893, %v4237, %v3765
        %v4270 = vsel %vm1893, %v4238, %v3767
        %v4271 = vsel %vm1893, %v4239, %v3769
        %v4272 = vsel %vm1893, %v4240, %v3771
        %v4273 = vsel %vm1893, %v4241, %v3773
        %v4274 = vsel %vm1893, %v4242, %v3775
        %v4275 = vsel %vm1893, %v4243, %v3777
        %v4276 = vsel %vm1893, %v4244, %v3779
        %v4277 = vsel %vm1893, %v4245, %v3781
        %v4278 = vsel %vm1893, %v4246, %v3783
        %v4279 = vsel %vm1893, %v4247, %v3785
        %v4280 = vsel %vm1893, %v4248, %v3787
        %v4281 = vsel %vm1893, %v4249, %v3789
        %v4282 = vsel %vm1893, %v4250, %v3791
        %v4283 = vsel %vm1893, %v4251, %v3793
        %v4284 = vsel %vm1893, %v4252, %v3795
        %v4285 = vsel %vm1893, %v4253, %v3797
        %v4286 = vsel %vm1893, %v4254, %v3799
        %v4287 = vsel %vm1893, %v4255, %v3801
        %v4288 = vsel %vm1893, %v4256, %v3803
        %v4289 = vsel %vm1893, %v4257, %v3805
        %v4290 = vsel %vm1893, %v4258, %v3807
        %v4291 = vsel %vm1893, %v4259, %v3809
        %v4292 = vsel %vm1893, %v4260, %v3811
        %v4293 = vsel %vm1893, %v4261, %v3813
        %v4294 = vsel %vm1926, %v4262, %v3879
        %v4295 = vsel %vm1926, %v4263, %v3881
        %v4296 = vsel %vm1926, %v4264, %v3883
        %v4297 = vsel %vm1926, %v4265, %v3885
        %v4298 = vsel %vm1926, %v4266, %v3887
        %v4299 = vsel %vm1926, %v4267, %v3889
        %v4300 = vsel %vm1926, %v4268, %v3891
        %v4301 = vsel %vm1926, %v4269, %v3893
        %v4302 = vsel %vm1926, %v4270, %v3895
        %v4303 = vsel %vm1926, %v4271, %v3897
        %v4304 = vsel %vm1926, %v4272, %v3899
        %v4305 = vsel %vm1926, %v4273, %v3901
        %v4306 = vsel %vm1926, %v4274, %v3903
        %v4307 = vsel %vm1926, %v4275, %v3905
        %v4308 = vsel %vm1926, %v4276, %v3907
        %v4309 = vsel %vm1926, %v4277, %v3909
        %v4310 = vsel %vm1926, %v4278, %v3911
        %v4311 = vsel %vm1926, %v4279, %v3913
        %v4312 = vsel %vm1926, %v4280, %v3915
        %v4313 = vsel %vm1926, %v4281, %v3917
        %v4314 = vsel %vm1926, %v4282, %v3919
        %v4315 = vsel %vm1926, %v4283, %v3921
        %v4316 = vsel %vm1926, %v4284, %v3923
        %v4317 = vsel %vm1926, %v4285, %v3925
        %v4318 = vsel %vm1926, %v4286, %v3927
        %v4319 = vsel %vm1926, %v4287, %v3929
        %v4320 = vsel %vm1926, %v4288, %v3931
        %v4321 = vsel %vm1926, %v4289, %v3933
        %v4322 = vsel %vm1926, %v4290, %v3935
        %v4323 = vsel %vm1926, %v4291, %v3937
        %v4324 = vsel %vm1926, %v4292, %v3939
        %v4325 = vsel %vm1926, %v4293, %v3941
        %v4326 = vsel %vm1959, %v4294, %v4007
        %v4327 = vsel %vm1959, %v4295, %v4009
        %v4328 = vsel %vm1959, %v4296, %v4011
        %v4329 = vsel %vm1959, %v4297, %v4013
        %v4330 = vsel %vm1959, %v4298, %v4015
        %v4331 = vsel %vm1959, %v4299, %v4017
        %v4332 = vsel %vm1959, %v4300, %v4019
        %v4333 = vsel %vm1959, %v4301, %v4021
        %v4334 = vsel %vm1959, %v4302, %v4023
        %v4335 = vsel %vm1959, %v4303, %v4025
        %v4336 = vsel %vm1959, %v4304, %v4027
        %v4337 = vsel %vm1959, %v4305, %v4029
        %v4338 = vsel %vm1959, %v4306, %v4031
        %v4339 = vsel %vm1959, %v4307, %v4033
        %v4340 = vsel %vm1959, %v4308, %v4035
        %v4341 = vsel %vm1959, %v4309, %v4037
        %v4342 = vsel %vm1959, %v4310, %v4039
        %v4343 = vsel %vm1959, %v4311, %v4041
        %v4344 = vsel %vm1959, %v4312, %v4043
        %v4345 = vsel %vm1959, %v4313, %v4045
        %v4346 = vsel %vm1959, %v4314, %v4047
        %v4347 = vsel %vm1959, %v4315, %v4049
        %v4348 = vsel %vm1959, %v4316, %v4051
        %v4349 = vsel %vm1959, %v4317, %v4053
        %v4350 = vsel %vm1959, %v4318, %v4055
        %v4351 = vsel %vm1959, %v4319, %v4057
        %v4352 = vsel %vm1959, %v4320, %v4059
        %v4353 = vsel %vm1959, %v4321, %v4061
        %v4354 = vsel %vm1959, %v4322, %v4063
        %v4355 = vsel %vm1959, %v4323, %v4065
        %v4356 = vsel %vm1959, %v4324, %v4067
        %v4357 = vsel %vm1959, %v4325, %v4069
        %v4358 = vld [vmem:[#allocation9] sm:$0xff]
        %v4359 = vld [vmem:[#allocation9 + $0x8] sm:$0xff]
        %v4360 = vld [vmem:[#allocation9 + $0x10] sm:$0xff]
        %v4361 = vld [vmem:[#allocation9 + $0x18] sm:$0xff]
        %v4362 = vld [vmem:[#allocation9 + $0x20] sm:$0xf]
        %v4364 = vsel %vm1997, %v4326, 0
        %v4367 = vsel %vm1997, %v4327, 0
        %v4370 = vsel %vm1997, %v4328, 0
        %v4373 = vsel %vm1997, %v4329, 0
        %v4376 = vsel %vm1997, %v4330, 0
        %v4379 = vsel %vm1997, %v4331, 0
        %v4382 = vsel %vm1997, %v4332, 0
        %v4385 = vsel %vm1997, %v4333, 0
        %v4388 = vsel %vm1997, %v4334, 0
        %v4391 = vsel %vm1997, %v4335, 0
        %v4394 = vsel %vm1997, %v4336, 0
        %v4397 = vsel %vm1997, %v4337, 0
        %v4400 = vsel %vm1997, %v4338, 0
        %v4403 = vsel %vm1997, %v4339, 0
        %v4406 = vsel %vm1997, %v4340, 0
        %v4409 = vsel %vm1997, %v4341, 0
        %v4412 = vsel %vm1997, %v4342, 0
        %v4415 = vsel %vm1997, %v4343, 0
        %v4418 = vsel %vm1997, %v4344, 0
        %v4421 = vsel %vm1997, %v4345, 0
        %v4424 = vsel %vm1997, %v4346, 0
        %v4427 = vsel %vm1997, %v4347, 0
        %v4430 = vsel %vm1997, %v4348, 0
        %v4433 = vsel %vm1997, %v4349, 0
        %v4436 = vsel %vm1997, %v4350, 0
        %v4439 = vsel %vm1997, %v4351, 0
        %v4442 = vsel %vm1997, %v4352, 0
        %v4445 = vsel %vm1997, %v4353, 0
        %v4448 = vsel %vm1997, %v4354, 0
        %v4451 = vsel %vm1997, %v4355, 0
        %v4454 = vsel %vm1997, %v4356, 0
        %v4457 = vsel %vm1997, %v4357, 0
        %v4460 = vsel %vm2094, %v4362, 0
        %4462 = vmatprep.subr.mxu0 0.0
        %4463 = vmatpush1.msra.mxu0 %v4358
        %4464 = vmatprep.subr.mxu0 0.0
        %4465 = vmatpush1.msra.mxu0 %v4359
        %4466 = vmatprep.subr.mxu0 0.0
        %4467 = vmatpush1.msra.mxu0 %v4360
        %4468 = vmatprep.subr.mxu0 0.0
        %4469 = vmatpush1.msra.mxu0 %v4361
        %4470 = vmatprep.subr.mxu0 0.0
        %4471 = vmatpush1.msra.mxu0 %v4460
        %4472 = vmatprep.subr.mxu0 0.0
        %4473 = vmatpush1.msra.mxu0 0.0
        %4474 = vmatprep.subr.mxu0 0.0
        %4475 = vmatpush1.msra.mxu0 0.0
        %4476 = vmatprep.subr.mxu0 0.0
        %4477 = vmatpush1.msra.mxu0 0.0
        %4478 = vmatprep.subr.mxu0 0.0
        %4479 = vmatpush1.msra.mxu0 0.0
        %4480 = vmatprep.subr.mxu0 0.0
        %4481 = vmatpush1.msra.mxu0 0.0
        %4482 = vmatprep.subr.mxu0 0.0
        %4483 = vmatpush1.msra.mxu0 0.0
        %4484 = vmatprep.subr.mxu0 0.0
        %4485 = vmatpush1.msra.mxu0 0.0
        %4486 = vmatprep.subr.mxu0 0.0
        %4487 = vmatpush1.msra.mxu0 0.0
        %4488 = vmatprep.subr.mxu0 0.0
        %4489 = vmatpush1.msra.mxu0 0.0
        %4490 = vmatprep.subr.mxu0 0.0
        %4491 = vmatpush1.msra.mxu0 0.0
        %4492 = vmatprep.subr.mxu0 0.0
        %4493 = vmatpush1.msra.mxu0 0.0
        %4494 = vmatprep.subr.mxu0 0.0
        %4495 = vmatpush1.msra.mxu0 0.0
        %4496 = vmatprep.subr.mxu0 0.0
        %4497 = vmatpush1.msra.mxu0 0.0
        %4498 = vmatprep.subr.mxu0 0.0
        %4499 = vmatpush1.msra.mxu0 0.0
        %4500 = vmatprep.subr.mxu0 0.0
        %4501 = vmatpush1.msra.mxu0 0.0
        %4502 = vmatprep.subr.mxu0 0.0
        %4503 = vmatpush1.msra.mxu0 0.0
        %4504 = vmatprep.subr.mxu0 0.0
        %4505 = vmatpush1.msra.mxu0 0.0
        %4506 = vmatprep.subr.mxu0 0.0
        %4507 = vmatpush1.msra.mxu0 0.0
        %4508 = vmatprep.subr.mxu0 0.0
        %4509 = vmatpush1.msra.mxu0 0.0
        %4510 = vmatprep.subr.mxu0 0.0
        %4511 = vmatpush1.msra.mxu0 0.0
        %4512 = vmatprep.subr.mxu0 0.0
        %4513 = vmatpush1.msra.mxu0 0.0
        %4514 = vmatprep.subr.mxu0 0.0
        %4515 = vmatpush1.msra.mxu0 0.0
        %4516 = vmatprep.subr.mxu0 0.0
        %4517 = vmatpush1.msra.mxu0 0.0
        %4518 = vmatprep.subr.mxu0 0.0
        %4519 = vmatpush1.msra.mxu0 0.0
        %4520 = vmatprep.subr.mxu0 0.0
        %4521 = vmatpush1.msra.mxu0 0.0
        %4522 = vmatprep.subr.mxu0 0.0
        %4523 = vmatpush1.msra.mxu0 0.0
        %4524 = vmatprep.subr.mxu0 0.0
        %4525 = vmatpush1.msra.mxu0 0.0
        %4526 = vmatprep.mubr.f32.mxu0 0.0
        %4527 = vmatmul.mubr.f32.gmra.mrb[0].mxu0 %v4364
        %v4528 = vpop.f32.mrb[0].mxu0
        %v4529 = vadd.f32 0.0, %v4528
        %v4530 = vpop.f32.mrb[0].mxu0
        %4531 = vmatprep.mubr.f32.mxu0 0.0
        %4532 = vmatmul.mubr.f32.gmra.mrb[0].mxu0 %v4367
        %v4533 = vpop.f32.mrb[0].mxu0
        %v4534 = vadd.f32 0.0, %v4533
        %v4535 = vpop.f32.mrb[0].mxu0
        %4536 = vmatprep.mubr.f32.mxu0 0.0
        %4537 = vmatmul.mubr.f32.gmra.mrb[0].mxu0 %v4370
        %v4538 = vpop.f32.mrb[0].mxu0
        %v4539 = vadd.f32 0.0, %v4538
        %v4540 = vpop.f32.mrb[0].mxu0
        %4541 = vmatprep.mubr.f32.mxu0 0.0
        %4542 = vmatmul.mubr.f32.gmra.mrb[0].mxu0 %v4373
        %v4543 = vpop.f32.mrb[0].mxu0
        %v4544 = vadd.f32 0.0, %v4543
        %v4545 = vpop.f32.mrb[0].mxu0
        %4546 = vmatprep.mubr.f32.mxu0 0.0
        %4547 = vmatmul.mubr.f32.gmra.mrb[0].mxu0 %v4376
        %v4548 = vpop.f32.mrb[0].mxu0
        %v4549 = vadd.f32 0.0, %v4548
        %v4550 = vpop.f32.mrb[0].mxu0
        %4551 = vmatprep.mubr.f32.mxu0 0.0
        %4552 = vmatmul.mubr.f32.gmra.mrb[0].mxu0 %v4379
        %v4553 = vpop.f32.mrb[0].mxu0
        %v4554 = vadd.f32 0.0, %v4553
        %v4555 = vpop.f32.mrb[0].mxu0
        %4556 = vmatprep.mubr.f32.mxu0 0.0
        %4557 = vmatmul.mubr.f32.gmra.mrb[0].mxu0 %v4382
        %v4558 = vpop.f32.mrb[0].mxu0
        %v4559 = vadd.f32 0.0, %v4558
        %v4560 = vpop.f32.mrb[0].mxu0
        %4561 = vmatprep.mubr.f32.mxu0 0.0
        %4562 = vmatmul.mubr.f32.gmra.mrb[0].mxu0 %v4385
        %v4563 = vpop.f32.mrb[0].mxu0
        %v4564 = vadd.f32 0.0, %v4563
        %v4565 = vpop.f32.mrb[0].mxu0
        %4566 = vmatprep.mubr.f32.mxu0 0.0
        %4567 = vmatmul.mubr.f32.gmra.mrb[0].mxu0 %v4388
        %v4568 = vpop.f32.mrb[0].mxu0
        %v4569 = vadd.f32 0.0, %v4568
        %v4570 = vpop.f32.mrb[0].mxu0
        %4571 = vmatprep.mubr.f32.mxu0 0.0
        %4572 = vmatmul.mubr.f32.gmra.mrb[0].mxu0 %v4391
        %v4573 = vpop.f32.mrb[0].mxu0
        %v4574 = vadd.f32 0.0, %v4573
        %v4575 = vpop.f32.mrb[0].mxu0
        %4576 = vmatprep.mubr.f32.mxu0 0.0
        %4577 = vmatmul.mubr.f32.gmra.mrb[0].mxu0 %v4394
        %v4578 = vpop.f32.mrb[0].mxu0
        %v4579 = vadd.f32 0.0, %v4578
        %v4580 = vpop.f32.mrb[0].mxu0
        %4581 = vmatprep.mubr.f32.mxu0 0.0
        %4582 = vmatmul.mubr.f32.gmra.mrb[0].mxu0 %v4397
        %v4583 = vpop.f32.mrb[0].mxu0
        %v4584 = vadd.f32 0.0, %v4583
        %v4585 = vpop.f32.mrb[0].mxu0
        %4586 = vmatprep.mubr.f32.mxu0 0.0
        %4587 = vmatmul.mubr.f32.gmra.mrb[0].mxu0 %v4400
        %v4588 = vpop.f32.mrb[0].mxu0
        %v4589 = vadd.f32 0.0, %v4588
        %v4590 = vpop.f32.mrb[0].mxu0
        %4591 = vmatprep.mubr.f32.mxu0 0.0
        %4592 = vmatmul.mubr.f32.gmra.mrb[0].mxu0 %v4403
        %v4593 = vpop.f32.mrb[0].mxu0
        %v4594 = vadd.f32 0.0, %v4593
        %v4595 = vpop.f32.mrb[0].mxu0
        %4596 = vmatprep.mubr.f32.mxu0 0.0
        %4597 = vmatmul.mubr.f32.gmra.mrb[0].mxu0 %v4406
        %v4598 = vpop.f32.mrb[0].mxu0
        %v4599 = vadd.f32 0.0, %v4598
        %v4600 = vpop.f32.mrb[0].mxu0
        %4601 = vmatprep.mubr.f32.mxu0 0.0
        %4602 = vmatmul.mubr.f32.gmra.mrb[0].mxu0 %v4409
        %v4603 = vpop.f32.mrb[0].mxu0
        %v4604 = vadd.f32 0.0, %v4603
        %v4605 = vpop.f32.mrb[0].mxu0
        %4606 = vmatprep.mubr.f32.mxu0 0.0
        %4607 = vmatmul.mubr.f32.gmra.mrb[0].mxu0 %v4412
        %v4608 = vpop.f32.mrb[0].mxu0
        %v4609 = vadd.f32 0.0, %v4608
        %v4610 = vpop.f32.mrb[0].mxu0
        %4611 = vmatprep.mubr.f32.mxu0 0.0
        %4612 = vmatmul.mubr.f32.gmra.mrb[0].mxu0 %v4415
        %v4613 = vpop.f32.mrb[0].mxu0
        %v4614 = vadd.f32 0.0, %v4613
        %v4615 = vpop.f32.mrb[0].mxu0
        %4616 = vmatprep.mubr.f32.mxu0 0.0
        %4617 = vmatmul.mubr.f32.gmra.mrb[0].mxu0 %v4418
        %v4618 = vpop.f32.mrb[0].mxu0
        %v4619 = vadd.f32 0.0, %v4618
        %v4620 = vpop.f32.mrb[0].mxu0
        %4621 = vmatprep.mubr.f32.mxu0 0.0
        %4622 = vmatmul.mubr.f32.gmra.mrb[0].mxu0 %v4421
        %v4623 = vpop.f32.mrb[0].mxu0
        %v4624 = vadd.f32 0.0, %v4623
        %v4625 = vpop.f32.mrb[0].mxu0
        %4626 = vmatprep.mubr.f32.mxu0 0.0
        %4627 = vmatmul.mubr.f32.gmra.mrb[0].mxu0 %v4424
        %v4628 = vpop.f32.mrb[0].mxu0
        %v4629 = vadd.f32 0.0, %v4628
        %v4630 = vpop.f32.mrb[0].mxu0
        %4631 = vmatprep.mubr.f32.mxu0 0.0
        %4632 = vmatmul.mubr.f32.gmra.mrb[0].mxu0 %v4427
        %v4633 = vpop.f32.mrb[0].mxu0
        %v4634 = vadd.f32 0.0, %v4633
        %v4635 = vpop.f32.mrb[0].mxu0
        %4636 = vmatprep.mubr.f32.mxu0 0.0
        %4637 = vmatmul.mubr.f32.gmra.mrb[0].mxu0 %v4430
        %v4638 = vpop.f32.mrb[0].mxu0
        %v4639 = vadd.f32 0.0, %v4638
        %v4640 = vpop.f32.mrb[0].mxu0
        %4641 = vmatprep.mubr.f32.mxu0 0.0
        %4642 = vmatmul.mubr.f32.gmra.mrb[0].mxu0 %v4433
        %v4643 = vpop.f32.mrb[0].mxu0
        %v4644 = vadd.f32 0.0, %v4643
        %v4645 = vpop.f32.mrb[0].mxu0
        %4646 = vmatprep.mubr.f32.mxu0 0.0
        %4647 = vmatmul.mubr.f32.gmra.mrb[0].mxu0 %v4436
        %v4648 = vpop.f32.mrb[0].mxu0
        %v4649 = vadd.f32 0.0, %v4648
        %v4650 = vpop.f32.mrb[0].mxu0
        %4651 = vmatprep.mubr.f32.mxu0 0.0
        %4652 = vmatmul.mubr.f32.gmra.mrb[0].mxu0 %v4439
        %v4653 = vpop.f32.mrb[0].mxu0
        %v4654 = vadd.f32 0.0, %v4653
        %v4655 = vpop.f32.mrb[0].mxu0
        %4656 = vmatprep.mubr.f32.mxu0 0.0
        %4657 = vmatmul.mubr.f32.gmra.mrb[0].mxu0 %v4442
        %v4658 = vpop.f32.mrb[0].mxu0
        %v4659 = vadd.f32 0.0, %v4658
        %v4660 = vpop.f32.mrb[0].mxu0
        %4661 = vmatprep.mubr.f32.mxu0 0.0
        %4662 = vmatmul.mubr.f32.gmra.mrb[0].mxu0 %v4445
        %v4663 = vpop.f32.mrb[0].mxu0
        %v4664 = vadd.f32 0.0, %v4663
        %v4665 = vpop.f32.mrb[0].mxu0
        %4666 = vmatprep.mubr.f32.mxu0 0.0
        %4667 = vmatmul.mubr.f32.gmra.mrb[0].mxu0 %v4448
        %v4668 = vpop.f32.mrb[0].mxu0
        %v4669 = vadd.f32 0.0, %v4668
        %v4670 = vpop.f32.mrb[0].mxu0
        %4671 = vmatprep.mubr.f32.mxu0 0.0
        %4672 = vmatmul.mubr.f32.gmra.mrb[0].mxu0 %v4451
        %v4673 = vpop.f32.mrb[0].mxu0
        %v4674 = vadd.f32 0.0, %v4673
        %v4675 = vpop.f32.mrb[0].mxu0
        %4676 = vmatprep.mubr.f32.mxu0 0.0
        %4677 = vmatmul.mubr.f32.gmra.mrb[0].mxu0 %v4454
        %v4678 = vpop.f32.mrb[0].mxu0
        %v4679 = vadd.f32 0.0, %v4678
        %v4680 = vpop.f32.mrb[0].mxu0
        %4681 = vmatprep.mubr.f32.mxu0 0.0
        %4682 = vmatmul.mubr.f32.gmra.mrb[0].mxu0 %v4457
        %v4683 = vpop.f32.mrb[0].mxu0
        %v4684 = vadd.f32 0.0, %v4683
        %v4685 = vpop.f32.mrb[0].mxu0
        %4686 = vdwg.mxu0
        %4687 = vst.msk [vmem:[#allocation3] sm:$0xff] %vm295, %v4529
        %4688 = vst.msk [vmem:[#allocation3 + $0x8] sm:$0xff] %vm295, %v4534
        %4689 = vst.msk [vmem:[#allocation3 + $0x10] sm:$0xff] %vm295, %v4539
        %4690 = vst.msk [vmem:[#allocation3 + $0x18] sm:$0xff] %vm295, %v4544
        %4691 = vst.msk [vmem:[#allocation3 + $0x20] sm:$0xff] %vm295, %v4549
        %4692 = vst.msk [vmem:[#allocation3 + $0x28] sm:$0xff] %vm295, %v4554
        %4693 = vst.msk [vmem:[#allocation3 + $0x30] sm:$0xff] %vm295, %v4559
        %4694 = vst.msk [vmem:[#allocation3 + $0x38] sm:$0xff] %vm295, %v4564
        %4695 = vst.msk [vmem:[#allocation3 + $0x40] sm:$0xff] %vm295, %v4569
        %4696 = vst.msk [vmem:[#allocation3 + $0x48] sm:$0xff] %vm295, %v4574
        %4697 = vst.msk [vmem:[#allocation3 + $0x50] sm:$0xff] %vm295, %v4579
        %4698 = vst.msk [vmem:[#allocation3 + $0x58] sm:$0xff] %vm295, %v4584
        %4699 = vst.msk [vmem:[#allocation3 + $0x60] sm:$0xff] %vm295, %v4589
        %4700 = vst.msk [vmem:[#allocation3 + $0x68] sm:$0xff] %vm295, %v4594
        %4701 = vst.msk [vmem:[#allocation3 + $0x70] sm:$0xff] %vm295, %v4599
        %4702 = vst.msk [vmem:[#allocation3 + $0x78] sm:$0xff] %vm295, %v4604
        %4703 = vst.msk [vmem:[#allocation3 + $0x80] sm:$0xff] %vm295, %v4609
        %4704 = vst.msk [vmem:[#allocation3 + $0x88] sm:$0xff] %vm295, %v4614
        %4705 = vst.msk [vmem:[#allocation3 + $0x90] sm:$0xff] %vm295, %v4619
        %4706 = vst.msk [vmem:[#allocation3 + $0x98] sm:$0xff] %vm295, %v4624
        %4707 = vst.msk [vmem:[#allocation3 + $0xa0] sm:$0xff] %vm295, %v4629
        %4708 = vst.msk [vmem:[#allocation3 + $0xa8] sm:$0xff] %vm295, %v4634
        %4709 = vst.msk [vmem:[#allocation3 + $0xb0] sm:$0xff] %vm295, %v4639
        %4710 = vst.msk [vmem:[#allocation3 + $0xb8] sm:$0xff] %vm295, %v4644
        %4711 = vst.msk [vmem:[#allocation3 + $0xc0] sm:$0xff] %vm295, %v4649
        %4712 = vst.msk [vmem:[#allocation3 + $0xc8] sm:$0xff] %vm295, %v4654
        %4713 = vst.msk [vmem:[#allocation3 + $0xd0] sm:$0xff] %vm295, %v4659
        %4714 = vst.msk [vmem:[#allocation3 + $0xd8] sm:$0xff] %vm295, %v4664
        %4715 = vst.msk [vmem:[#allocation3 + $0xe0] sm:$0xff] %vm295, %v4669
        %4716 = vst.msk [vmem:[#allocation3 + $0xe8] sm:$0xff] %vm295, %v4674
        %4717 = vst.msk [vmem:[#allocation3 + $0xf0] sm:$0xff] %vm295, %v4679
        %4718 = vst.msk [vmem:[#allocation3 + $0xf8] sm:$0xff] %vm295, %v4684
        %v4719 = vsel %vm295, %v4529, 0.0
        %v4720 = vsel %vm295, %v4534, 0.0
        %v4721 = vadd.f32 %v4719, %v4720
        %v4722 = vsel %vm295, %v4539, 0.0
        %v4723 = vadd.f32 %v4721, %v4722
        %v4724 = vsel %vm295, %v4544, 0.0
        %v4725 = vadd.f32 %v4723, %v4724
        %v4726 = vsel %vm295, %v4549, 0.0
        %v4727 = vadd.f32 %v4725, %v4726
        %v4728 = vsel %vm295, %v4554, 0.0
        %v4729 = vadd.f32 %v4727, %v4728
        %v4730 = vsel %vm295, %v4559, 0.0
        %v4731 = vadd.f32 %v4729, %v4730
        %v4732 = vsel %vm295, %v4564, 0.0
        %v4733 = vadd.f32 %v4731, %v4732
        %v4734 = vsel %vm295, %v4569, 0.0
        %v4735 = vadd.f32 %v4733, %v4734
        %v4736 = vsel %vm295, %v4574, 0.0
        %v4737 = vadd.f32 %v4735, %v4736
        %v4738 = vsel %vm295, %v4579, 0.0
        %v4739 = vadd.f32 %v4737, %v4738
        %v4740 = vsel %vm295, %v4584, 0.0
        %v4741 = vadd.f32 %v4739, %v4740
        %v4742 = vsel %vm295, %v4589, 0.0
        %v4743 = vadd.f32 %v4741, %v4742
        %v4744 = vsel %vm295, %v4594, 0.0
        %v4745 = vadd.f32 %v4743, %v4744
        %v4746 = vsel %vm295, %v4599, 0.0
        %v4747 = vadd.f32 %v4745, %v4746
        %v4748 = vsel %vm295, %v4604, 0.0
        %v4749 = vadd.f32 %v4747, %v4748
        %v4750 = vsel %vm295, %v4609, 0.0
        %v4751 = vadd.f32 %v4749, %v4750
        %v4752 = vsel %vm295, %v4614, 0.0
        %v4753 = vadd.f32 %v4751, %v4752
        %v4754 = vsel %vm295, %v4619, 0.0
        %v4755 = vadd.f32 %v4753, %v4754
        %v4756 = vsel %vm295, %v4624, 0.0
        %v4757 = vadd.f32 %v4755, %v4756
        %v4758 = vsel %vm295, %v4629, 0.0
        %v4759 = vadd.f32 %v4757, %v4758
        %v4760 = vsel %vm295, %v4634, 0.0
        %v4761 = vadd.f32 %v4759, %v4760
        %v4762 = vsel %vm295, %v4639, 0.0
        %v4763 = vadd.f32 %v4761, %v4762
        %v4764 = vsel %vm295, %v4644, 0.0
        %v4765 = vadd.f32 %v4763, %v4764
        %v4766 = vsel %vm295, %v4649, 0.0
        %v4767 = vadd.f32 %v4765, %v4766
        %v4768 = vsel %vm295, %v4654, 0.0
        %v4769 = vadd.f32 %v4767, %v4768
        %v4770 = vsel %vm295, %v4659, 0.0
        %v4771 = vadd.f32 %v4769, %v4770
        %v4772 = vsel %vm295, %v4664, 0.0
        %v4773 = vadd.f32 %v4771, %v4772
        %v4774 = vsel %vm295, %v4669, 0.0
        %v4775 = vadd.f32 %v4773, %v4774
        %v4776 = vsel %vm295, %v4674, 0.0
        %v4777 = vadd.f32 %v4775, %v4776
        %v4778 = vsel %vm295, %v4679, 0.0
        %v4779 = vadd.f32 %v4777, %v4778
        %v4780 = vsel %vm295, %v4684, 0.0
        %v4781 = vadd.f32 %v4779, %v4780
        %v4782 = vrot.slane %v4781, 4
        %v4783 = vadd.f32 %v4781, %v4782
        %v4784 = vrot.slane %v4783, 2
        %v4785 = vadd.f32 %v4783, %v4784
        %v4786 = vrot.slane %v4785, 1
        %v4787 = vadd.f32 %v4785, %v4786
        %v4788 = vadd.f32 %v4787, 0.0
        %v4789 = vmul.f32 %v4529, %v4529
        %v4790 = vmul.f32 %v4534, %v4534
        %v4791 = vmul.f32 %v4539, %v4539
        %v4792 = vmul.f32 %v4544, %v4544
        %v4793 = vmul.f32 %v4549, %v4549
        %v4794 = vmul.f32 %v4554, %v4554
        %v4795 = vmul.f32 %v4559, %v4559
        %v4796 = vmul.f32 %v4564, %v4564
        %v4797 = vmul.f32 %v4569, %v4569
        %v4798 = vmul.f32 %v4574, %v4574
        %v4799 = vmul.f32 %v4579, %v4579
        %v4800 = vmul.f32 %v4584, %v4584
        %v4801 = vmul.f32 %v4589, %v4589
        %v4802 = vmul.f32 %v4594, %v4594
        %v4803 = vmul.f32 %v4599, %v4599
        %v4804 = vmul.f32 %v4604, %v4604
        %v4805 = vmul.f32 %v4609, %v4609
        %v4806 = vmul.f32 %v4614, %v4614
        %v4807 = vmul.f32 %v4619, %v4619
        %v4808 = vmul.f32 %v4624, %v4624
        %v4809 = vmul.f32 %v4629, %v4629
        %v4810 = vmul.f32 %v4634, %v4634
        %v4811 = vmul.f32 %v4639, %v4639
        %v4812 = vmul.f32 %v4644, %v4644
        %v4813 = vmul.f32 %v4649, %v4649
        %v4814 = vmul.f32 %v4654, %v4654
        %v4815 = vmul.f32 %v4659, %v4659
        %v4816 = vmul.f32 %v4664, %v4664
        %v4817 = vmul.f32 %v4669, %v4669
        %v4818 = vmul.f32 %v4674, %v4674
        %v4819 = vmul.f32 %v4679, %v4679
        %v4820 = vmul.f32 %v4684, %v4684
        %v4821 = vsel %vm295, %v4789, 0.0
        %v4822 = vsel %vm295, %v4790, 0.0
        %v4823 = vadd.f32 %v4821, %v4822
        %v4824 = vsel %vm295, %v4791, 0.0
        %v4825 = vadd.f32 %v4823, %v4824
        %v4826 = vsel %vm295, %v4792, 0.0
        %v4827 = vadd.f32 %v4825, %v4826
        %v4828 = vsel %vm295, %v4793, 0.0
        %v4829 = vadd.f32 %v4827, %v4828
        %v4830 = vsel %vm295, %v4794, 0.0
        %v4831 = vadd.f32 %v4829, %v4830
        %v4832 = vsel %vm295, %v4795, 0.0
        %v4833 = vadd.f32 %v4831, %v4832
        %v4834 = vsel %vm295, %v4796, 0.0
        %v4835 = vadd.f32 %v4833, %v4834
        %v4836 = vsel %vm295, %v4797, 0.0
        %v4837 = vadd.f32 %v4835, %v4836
        %v4838 = vsel %vm295, %v4798, 0.0
        %v4839 = vadd.f32 %v4837, %v4838
        %v4840 = vsel %vm295, %v4799, 0.0
        %v4841 = vadd.f32 %v4839, %v4840
        %v4842 = vsel %vm295, %v4800, 0.0
        %v4843 = vadd.f32 %v4841, %v4842
        %v4844 = vsel %vm295, %v4801, 0.0
        %v4845 = vadd.f32 %v4843, %v4844
        %v4846 = vsel %vm295, %v4802, 0.0
        %v4847 = vadd.f32 %v4845, %v4846
        %v4848 = vsel %vm295, %v4803, 0.0
        %v4849 = vadd.f32 %v4847, %v4848
        %v4850 = vsel %vm295, %v4804, 0.0
        %v4851 = vadd.f32 %v4849, %v4850
        %v4852 = vsel %vm295, %v4805, 0.0
        %v4853 = vadd.f32 %v4851, %v4852
        %v4854 = vsel %vm295, %v4806, 0.0
        %v4855 = vadd.f32 %v4853, %v4854
        %v4856 = vsel %vm295, %v4807, 0.0
        %v4857 = vadd.f32 %v4855, %v4856
        %v4858 = vsel %vm295, %v4808, 0.0
        %v4859 = vadd.f32 %v4857, %v4858
        %v4860 = vsel %vm295, %v4809, 0.0
        %v4861 = vadd.f32 %v4859, %v4860
        %v4862 = vsel %vm295, %v4810, 0.0
        %v4863 = vadd.f32 %v4861, %v4862
        %v4864 = vsel %vm295, %v4811, 0.0
        %v4865 = vadd.f32 %v4863, %v4864
        %v4866 = vsel %vm295, %v4812, 0.0
        %v4867 = vadd.f32 %v4865, %v4866
        %v4868 = vsel %vm295, %v4813, 0.0
        %v4869 = vadd.f32 %v4867, %v4868
        %v4870 = vsel %vm295, %v4814, 0.0
        %v4871 = vadd.f32 %v4869, %v4870
        %v4872 = vsel %vm295, %v4815, 0.0
        %v4873 = vadd.f32 %v4871, %v4872
        %v4874 = vsel %vm295, %v4816, 0.0
        %v4875 = vadd.f32 %v4873, %v4874
        %v4876 = vsel %vm295, %v4817, 0.0
        %v4877 = vadd.f32 %v4875, %v4876
        %v4878 = vsel %vm295, %v4818, 0.0
        %v4879 = vadd.f32 %v4877, %v4878
        %v4880 = vsel %vm295, %v4819, 0.0
        %v4881 = vadd.f32 %v4879, %v4880
        %v4882 = vsel %vm295, %v4820, 0.0
        %v4883 = vadd.f32 %v4881, %v4882
        %v4884 = vrot.slane %v4883, 4
        %v4885 = vadd.f32 %v4883, %v4884
        %v4886 = vrot.slane %v4885, 2
        %v4887 = vadd.f32 %v4885, %v4886
        %v4888 = vrot.slane %v4887, 1
        %v4889 = vadd.f32 %v4887, %v4888
        %v4890 = vadd.f32 %v4889, 0.0
        %v4891 = vmul.f32 %v4788, %v2527
        %v4892 = vmul.f32 %v4890, %v2527
        %v4893 = vmul.f32 %v4891, %v4891
        %v4894 = vsub.f32 %v4892, %v4893
        %v4895 = vmax.f32 %v4894, 0.0
        %v4896 = vadd.f32 %v4895, 1e-05
        %v4897 = vrsqrt.pop %v4896
        %v4898 = vmul.f32 %v260, %v4897
        %v4899 = vmul.f32 %v4891, %v4898
        %v4900 = vsub.f32 %v261, %v4899
        %v4901 = vld [vmem:[#allocation3] sm:$0xff]
        %v4902 = vld [vmem:[#allocation3 + $0x8] sm:$0xff]
        %v4903 = vld [vmem:[#allocation3 + $0x10] sm:$0xff]
        %v4904 = vld [vmem:[#allocation3 + $0x18] sm:$0xff]
        %v4905 = vld [vmem:[#allocation3 + $0x20] sm:$0xff]
        %v4906 = vld [vmem:[#allocation3 + $0x28] sm:$0xff]
        %v4907 = vld [vmem:[#allocation3 + $0x30] sm:$0xff]
        %v4908 = vld [vmem:[#allocation3 + $0x38] sm:$0xff]
        %v4909 = vld [vmem:[#allocation3 + $0x40] sm:$0xff]
        %v4910 = vld [vmem:[#allocation3 + $0x48] sm:$0xff]
        %v4911 = vld [vmem:[#allocation3 + $0x50] sm:$0xff]
        %v4912 = vld [vmem:[#allocation3 + $0x58] sm:$0xff]
        %v4913 = vld [vmem:[#allocation3 + $0x60] sm:$0xff]
        %v4914 = vld [vmem:[#allocation3 + $0x68] sm:$0xff]
        %v4915 = vld [vmem:[#allocation3 + $0x70] sm:$0xff]
        %v4916 = vld [vmem:[#allocation3 + $0x78] sm:$0xff]
        %v4917 = vld [vmem:[#allocation3 + $0x80] sm:$0xff]
        %v4918 = vld [vmem:[#allocation3 + $0x88] sm:$0xff]
        %v4919 = vld [vmem:[#allocation3 + $0x90] sm:$0xff]
        %v4920 = vld [vmem:[#allocation3 + $0x98] sm:$0xff]
        %v4921 = vld [vmem:[#allocation3 + $0xa0] sm:$0xff]
        %v4922 = vld [vmem:[#allocation3 + $0xa8] sm:$0xff]
        %v4923 = vld [vmem:[#allocation3 + $0xb0] sm:$0xff]
        %v4924 = vld [vmem:[#allocation3 + $0xb8] sm:$0xff]
        %v4925 = vld [vmem:[#allocation3 + $0xc0] sm:$0xff]
        %v4926 = vld [vmem:[#allocation3 + $0xc8] sm:$0xff]
        %v4927 = vld [vmem:[#allocation3 + $0xd0] sm:$0xff]
        %v4928 = vld [vmem:[#allocation3 + $0xd8] sm:$0xff]
        %v4929 = vld [vmem:[#allocation3 + $0xe0] sm:$0xff]
        %v4930 = vld [vmem:[#allocation3 + $0xe8] sm:$0xff]
        %v4931 = vld [vmem:[#allocation3 + $0xf0] sm:$0xff]
        %v4932 = vld [vmem:[#allocation3 + $0xf8] sm:$0xff]
        %v4933 = vlaneseq
        %v4934 = vshrl.u32 %v4933, 7
        %v4935 = vsub.s32 0, %v4934
        %v4936 = vrot.slane %v4898, %v4935
        %v4937 = vmul.f32 %v4901, %v4936
        %v4938 = vmul.f32 %v4902, %v4936
        %v4939 = vmul.f32 %v4903, %v4936
        %v4940 = vmul.f32 %v4904, %v4936
        %v4941 = vmul.f32 %v4905, %v4936
        %v4942 = vmul.f32 %v4906, %v4936
        %v4943 = vmul.f32 %v4907, %v4936
        %v4944 = vmul.f32 %v4908, %v4936
        %v4945 = vmul.f32 %v4909, %v4936
        %v4946 = vmul.f32 %v4910, %v4936
        %v4947 = vmul.f32 %v4911, %v4936
        %v4948 = vmul.f32 %v4912, %v4936
        %v4949 = vmul.f32 %v4913, %v4936
        %v4950 = vmul.f32 %v4914, %v4936
        %v4951 = vmul.f32 %v4915, %v4936
        %v4952 = vmul.f32 %v4916, %v4936
        %v4953 = vmul.f32 %v4917, %v4936
        %v4954 = vmul.f32 %v4918, %v4936
        %v4955 = vmul.f32 %v4919, %v4936
        %v4956 = vmul.f32 %v4920, %v4936
        %v4957 = vmul.f32 %v4921, %v4936
        %v4958 = vmul.f32 %v4922, %v4936
        %v4959 = vmul.f32 %v4923, %v4936
        %v4960 = vmul.f32 %v4924, %v4936
        %v4961 = vmul.f32 %v4925, %v4936
        %v4962 = vmul.f32 %v4926, %v4936
        %v4963 = vmul.f32 %v4927, %v4936
        %v4964 = vmul.f32 %v4928, %v4936
        %v4965 = vmul.f32 %v4929, %v4936
        %v4966 = vmul.f32 %v4930, %v4936
        %v4967 = vmul.f32 %v4931, %v4936
        %v4968 = vmul.f32 %v4932, %v4936
        %v4969 = vlaneseq
        %v4970 = vshrl.u32 %v4969, 7
        %v4971 = vsub.s32 0, %v4970
        %v4972 = vrot.slane %v4900, %v4971
        %v4973 = vadd.f32 %v4937, %v4972
        %v4974 = vadd.f32 %v4938, %v4972
        %v4975 = vadd.f32 %v4939, %v4972
        %v4976 = vadd.f32 %v4940, %v4972
        %v4977 = vadd.f32 %v4941, %v4972
        %v4978 = vadd.f32 %v4942, %v4972
        %v4979 = vadd.f32 %v4943, %v4972
        %v4980 = vadd.f32 %v4944, %v4972
        %v4981 = vadd.f32 %v4945, %v4972
        %v4982 = vadd.f32 %v4946, %v4972
        %v4983 = vadd.f32 %v4947, %v4972
        %v4984 = vadd.f32 %v4948, %v4972
        %v4985 = vadd.f32 %v4949, %v4972
        %v4986 = vadd.f32 %v4950, %v4972
        %v4987 = vadd.f32 %v4951, %v4972
        %v4988 = vadd.f32 %v4952, %v4972
        %v4989 = vadd.f32 %v4953, %v4972
        %v4990 = vadd.f32 %v4954, %v4972
        %v4991 = vadd.f32 %v4955, %v4972
        %v4992 = vadd.f32 %v4956, %v4972
        %v4993 = vadd.f32 %v4957, %v4972
        %v4994 = vadd.f32 %v4958, %v4972
        %v4995 = vadd.f32 %v4959, %v4972
        %v4996 = vadd.f32 %v4960, %v4972
        %v4997 = vadd.f32 %v4961, %v4972
        %v4998 = vadd.f32 %v4962, %v4972
        %v4999 = vadd.f32 %v4963, %v4972
        %v5000 = vadd.f32 %v4964, %v4972
        %v5001 = vadd.f32 %v4965, %v4972
        %v5002 = vadd.f32 %v4966, %v4972
        %v5003 = vadd.f32 %v4967, %v4972
        %v5004 = vadd.f32 %v4968, %v4972
        %v5005 = vld [vmem:[%s221] sm:$0xff]
        %v5006 = vld [vmem:[%s221 + $0x8] sm:$0xff]
        %v5007 = vld [vmem:[%s221 + $0x10] sm:$0xff]
        %v5008 = vld [vmem:[%s221 + $0x18] sm:$0xff]
        %v5009 = vld [vmem:[%s221 + $0x20] sm:$0xff]
        %v5010 = vld [vmem:[%s221 + $0x28] sm:$0xff]
        %v5011 = vld [vmem:[%s221 + $0x30] sm:$0xff]
        %v5012 = vld [vmem:[%s221 + $0x38] sm:$0xff]
        %v5013 = vld [vmem:[%s221 + $0x40] sm:$0xff]
        %v5014 = vld [vmem:[%s221 + $0x48] sm:$0xff]
        %v5015 = vld [vmem:[%s221 + $0x50] sm:$0xff]
        %v5016 = vld [vmem:[%s221 + $0x58] sm:$0xff]
        %v5017 = vld [vmem:[%s221 + $0x60] sm:$0xff]
        %v5018 = vld [vmem:[%s221 + $0x68] sm:$0xff]
        %v5019 = vld [vmem:[%s221 + $0x70] sm:$0xff]
        %v5020 = vld [vmem:[%s221 + $0x78] sm:$0xff]
        %v5021 = vld [vmem:[%s221 + $0x80] sm:$0xff]
        %v5022 = vld [vmem:[%s221 + $0x88] sm:$0xff]
        %v5023 = vld [vmem:[%s221 + $0x90] sm:$0xff]
        %v5024 = vld [vmem:[%s221 + $0x98] sm:$0xff]
        %v5025 = vld [vmem:[%s221 + $0xa0] sm:$0xff]
        %v5026 = vld [vmem:[%s221 + $0xa8] sm:$0xff]
        %v5027 = vld [vmem:[%s221 + $0xb0] sm:$0xff]
        %v5028 = vld [vmem:[%s221 + $0xb8] sm:$0xff]
        %v5029 = vld [vmem:[%s221 + $0xc0] sm:$0xff]
        %v5030 = vld [vmem:[%s221 + $0xc8] sm:$0xff]
        %v5031 = vld [vmem:[%s221 + $0xd0] sm:$0xff]
        %v5032 = vld [vmem:[%s221 + $0xd8] sm:$0xff]
        %v5033 = vld [vmem:[%s221 + $0xe0] sm:$0xff]
        %v5034 = vld [vmem:[%s221 + $0xe8] sm:$0xff]
        %v5035 = vld [vmem:[%s221 + $0xf0] sm:$0xff]
        %v5036 = vld [vmem:[%s221 + $0xf8] sm:$0xff]
        %v5037 = vadd.f32 %v5005, %v4973
        %v5038 = vadd.f32 %v5006, %v4974
        %v5039 = vadd.f32 %v5007, %v4975
        %v5040 = vadd.f32 %v5008, %v4976
        %v5041 = vadd.f32 %v5009, %v4977
        %v5042 = vadd.f32 %v5010, %v4978
        %v5043 = vadd.f32 %v5011, %v4979
        %v5044 = vadd.f32 %v5012, %v4980
        %v5045 = vadd.f32 %v5013, %v4981
        %v5046 = vadd.f32 %v5014, %v4982
        %v5047 = vadd.f32 %v5015, %v4983
        %v5048 = vadd.f32 %v5016, %v4984
        %v5049 = vadd.f32 %v5017, %v4985
        %v5050 = vadd.f32 %v5018, %v4986
        %v5051 = vadd.f32 %v5019, %v4987
        %v5052 = vadd.f32 %v5020, %v4988
        %v5053 = vadd.f32 %v5021, %v4989
        %v5054 = vadd.f32 %v5022, %v4990
        %v5055 = vadd.f32 %v5023, %v4991
        %v5056 = vadd.f32 %v5024, %v4992
        %v5057 = vadd.f32 %v5025, %v4993
        %v5058 = vadd.f32 %v5026, %v4994
        %v5059 = vadd.f32 %v5027, %v4995
        %v5060 = vadd.f32 %v5028, %v4996
        %v5061 = vadd.f32 %v5029, %v4997
        %v5062 = vadd.f32 %v5030, %v4998
        %v5063 = vadd.f32 %v5031, %v4999
        %v5064 = vadd.f32 %v5032, %v5000
        %v5065 = vadd.f32 %v5033, %v5001
        %v5066 = vadd.f32 %v5034, %v5002
        %v5067 = vadd.f32 %v5035, %v5003
        %v5068 = vadd.f32 %v5036, %v5004
        %5069 = vst.msk [vmem:[%s257] sm:$0xff] %vm295, %v5037
        %5070 = vst.msk [vmem:[%s257 + $0x8] sm:$0xff] %vm295, %v5038
        %5071 = vst.msk [vmem:[%s257 + $0x10] sm:$0xff] %vm295, %v5039
        %5072 = vst.msk [vmem:[%s257 + $0x18] sm:$0xff] %vm295, %v5040
        %5073 = vst.msk [vmem:[%s257 + $0x20] sm:$0xff] %vm295, %v5041
        %5074 = vst.msk [vmem:[%s257 + $0x28] sm:$0xff] %vm295, %v5042
        %5075 = vst.msk [vmem:[%s257 + $0x30] sm:$0xff] %vm295, %v5043
        %5076 = vst.msk [vmem:[%s257 + $0x38] sm:$0xff] %vm295, %v5044
        %5077 = vst.msk [vmem:[%s257 + $0x40] sm:$0xff] %vm295, %v5045
        %5078 = vst.msk [vmem:[%s257 + $0x48] sm:$0xff] %vm295, %v5046
        %5079 = vst.msk [vmem:[%s257 + $0x50] sm:$0xff] %vm295, %v5047
        %5080 = vst.msk [vmem:[%s257 + $0x58] sm:$0xff] %vm295, %v5048
        %5081 = vst.msk [vmem:[%s257 + $0x60] sm:$0xff] %vm295, %v5049
        %5082 = vst.msk [vmem:[%s257 + $0x68] sm:$0xff] %vm295, %v5050
        %5083 = vst.msk [vmem:[%s257 + $0x70] sm:$0xff] %vm295, %v5051
        %5084 = vst.msk [vmem:[%s257 + $0x78] sm:$0xff] %vm295, %v5052
        %5085 = vst.msk [vmem:[%s257 + $0x80] sm:$0xff] %vm295, %v5053
        %5086 = vst.msk [vmem:[%s257 + $0x88] sm:$0xff] %vm295, %v5054
        %5087 = vst.msk [vmem:[%s257 + $0x90] sm:$0xff] %vm295, %v5055
        %5088 = vst.msk [vmem:[%s257 + $0x98] sm:$0xff] %vm295, %v5056
        %5089 = vst.msk [vmem:[%s257 + $0xa0] sm:$0xff] %vm295, %v5057
        %5090 = vst.msk [vmem:[%s257 + $0xa8] sm:$0xff] %vm295, %v5058
        %5091 = vst.msk [vmem:[%s257 + $0xb0] sm:$0xff] %vm295, %v5059
        %5092 = vst.msk [vmem:[%s257 + $0xb8] sm:$0xff] %vm295, %v5060
        %5093 = vst.msk [vmem:[%s257 + $0xc0] sm:$0xff] %vm295, %v5061
        %5094 = vst.msk [vmem:[%s257 + $0xc8] sm:$0xff] %vm295, %v5062
        %5095 = vst.msk [vmem:[%s257 + $0xd0] sm:$0xff] %vm295, %v5063
        %5096 = vst.msk [vmem:[%s257 + $0xd8] sm:$0xff] %vm295, %v5064
        %5097 = vst.msk [vmem:[%s257 + $0xe0] sm:$0xff] %vm295, %v5065
        %5098 = vst.msk [vmem:[%s257 + $0xe8] sm:$0xff] %vm295, %v5066
        %5099 = vst.msk [vmem:[%s257 + $0xf0] sm:$0xff] %vm295, %v5067
        %5100 = vst.msk [vmem:[%s257 + $0xf8] sm:$0xff] %vm295, %v5068
        %s5101 = sand.u32 %s120, 1
        %s5102 = scalar_lea.sflag [#allocation6], %s5101
        %s5103 = sand.u32 %s120, 1
        %s5104 = smul.addr %s5103, 256
        %s5105 = scalar_lea.vmem [#allocation12], %s5104
        // Predicated region
        $region53: #{tpu_custom_call.1} parent=35 // pred_check
          %p5106 = pneg %p130
        $region54: #{tpu_custom_call.1} parent=35 // pred_check_branch
          %5108 = sbr.rel (%p5106) target = $region56
        $region55: #{tpu_custom_call.1} parent=35 // pred_region
          %s5110 = ssub.s32 4096, 4096
          %5111 = vsyncadd %s5102, %s5110
          %s5112 = smul.addr %s23, 32
          %s5113 = smul.addr %s5112, 128
          %s5114 = scalar_lea.hbm %s4, %s5113
          %s5115 = sshll.u32 %s5105, 4
          %s5116 = int_to_ptr.vmem [resolvable:$true] %s5115
          %5121 = dma.vmem_to_hbm [thread:$0]  %s5116, 4096, %s5114, %s5102, 128, 128, 8
        $region56: #{tpu_custom_call.1} parent=35 // pred_fallthru
          _
      $region36: #{tpu_custom_call.1} parent=5 // pred_fallthru
        _
      %p5122 = scmp.le.s32.totalorder 2, %s18
      // Predicated region
      $region57: #{tpu_custom_call.1} parent=5 // pred_check
        %p5123 = pneg %p5122
      $region58: #{tpu_custom_call.1} parent=5 // pred_check_branch
        %5125 = sbr.rel (%p5123) target = $region60
      $region59: #{tpu_custom_call.1} parent=5 // pred_region
        %s5126 = ssub.s32 %s18, 2
        // Predicated region
        $region61: #{tpu_custom_call.1} parent=59 // pred_check
          %p5127 = pneg %p136
        $region62: #{tpu_custom_call.1} parent=59 // pred_check_branch
          %5129 = sbr.rel (%p5127) target = $region64
        $region63: #{tpu_custom_call.1} parent=59 // pred_region
          %s5130 = sand.u32 %s121, 1
          %s5131 = scalar_lea.sflag [#allocation6], %s5130
          %s5132 = sand.u32 %s121, 1
          %s5133 = smul.addr %s5132, 256
          %s5134 = scalar_lea.vmem [#allocation12], %s5133
          %5135 = dma.done %s5131, 4096
        $region64: #{tpu_custom_call.1} parent=59 // pred_fallthru
          _
      $region60: #{tpu_custom_call.1} parent=5 // pred_fallthru
        _
    $region6: #{tpu_custom_call.1} parent=1 // loop_footer
      %s22 = sadd.s32 1, %s18
    $region7: #{tpu_custom_call.1} parent=1 // loop_footer_branch
      %17 = sbr.rel target = $region3
    $region8: #{tpu_custom_call.1} parent=1 // loop_exit
      _
    %5136 = vsyncpa [#allocation5], 1
    %s5137 = scalar_lea.sflag [#allocation5], 1
    %5138 = vsyncpa %s5137, 1
    %5139 = vsyncpa [#allocation8], 1
    %5140 = vsyncpa [#allocation11], 1
    %5141 = vsyncpa [#allocation6], 1
    %s5142 = scalar_lea.sflag [#allocation6], 1
    %5143 = vsyncpa %s5142, 1

</llo_original>
